<compile_context>
chip_gen: v6e
topology: v6e:2x2x1
jax: 0.10.0
libtpu: 0.0.40
codegen_flags: <defaults>
</compile_context>

<pallas_src>
import jax
import jax.numpy as jnp
from jax.experimental import pallas as pl
from jax.experimental.pallas import tpu as pltpu

EPS = 1e-5  # nn.BatchNorm default eps


# ============================================================================
# Fused Pallas kernel: the whole network in one invocation (no grid).
# Activation layout: rows = (b, y), cols = (x, c)   -> shape (B*H, W*C).
# ============================================================================
def _fused_net_kernel(a0_ref,
                      l1_ref, w1_ref, b1_ref,
                      l2_ref, w2_ref, b2_ref,
                      p1_ref, q1_ref,
                      l3_ref, w3_ref, b3_ref,
                      l4_ref, w4_ref, b4_ref,
                      s1_ref, v1_ref, bf1_ref,
                      w5_ref, b5_ref,
                      w6_ref, b6_ref,
                      out_ref):
    f32, bf16 = jnp.float32, jnp.bfloat16

    def conv3x3_bn_relu(a, l_ref, w_ref, b_ref):
        # a:         (B*H, W*Cin) f32
        # l_ref[ky]: (B*H, B*H)   row-shift band (y taps + zero padding)
        # w_ref[ky]: (W*Cin, W*Cout) column band (x taps + padding), BN folded
        # b_ref:     (1, W*Cout)  BN-folded bias, tiled over x
        ab = a.astype(bf16)
        z = b_ref[...]                                            # (1, N) f32
        for ky in range(3):                                       # unrolled
            rows = jnp.dot(l_ref[ky], ab,
                           preferred_element_type=f32).astype(bf16)
            z = z + jnp.dot(rows, w_ref[ky], preferred_element_type=f32)
        return jnp.maximum(z, 0.0)

    def avg_pool_2x2(a, p_ref, q_ref):
        # row-pair average (left matmul) + x-pair average (right matmul)
        t = jnp.dot(p_ref[...], a.astype(bf16),
                    preferred_element_type=f32).astype(bf16)
        return jnp.dot(t, q_ref[...], preferred_element_type=f32)

    a = a0_ref[...]                                   # (B*8, 8*Cin)
    a = conv3x3_bn_relu(a, l1_ref, w1_ref, b1_ref)    # (B*8, 8*16)
    a = conv3x3_bn_relu(a, l2_ref, w2_ref, b2_ref)    # (B*8, 8*32)
    a = avg_pool_2x2(a, p1_ref, q1_ref)               # (B*4, 4*32)
    # dropout_conv (p=0.25): identity in eval mode
    a = conv3x3_bn_relu(a, l3_ref, w3_ref, b3_ref)    # (B*4, 4*64)
    a = conv3x3_bn_relu(a, l4_ref, w4_ref, b4_ref)    # (B*4, 4*64)
    # dropout_conv (p=0.25): identity in eval mode
    # AvgPool(2,2) + NCHW flatten + fc1 + bn_dense1 + ReLU, all folded into
    # the prepared (s1, v1) banded matrices -> pure matmuls, no transpose.
    ab = a.astype(bf16)
    f = bf1_ref[...]                                  # (1, 256) f32
    for y2 in range(2):                               # unrolled
        rows = jnp.dot(s1_ref[y2], ab,
                       preferred_element_type=f32).astype(bf16)
        f = f + jnp.dot(rows, v1_ref[y2], preferred_element_type=f32)
    f = jnp.maximum(f, 0.0)                           # (B, 256)
    # dropout (p=0.5): identity in eval mode
    f = jnp.maximum(jnp.dot(f.astype(bf16), w5_ref[...],
                            preferred_element_type=f32) + b5_ref[...], 0.0)
    # dropout (p=0.5): identity in eval mode
    out = jnp.dot(f.astype(bf16), w6_ref[...],
                  preferred_element_type=f32) + b6_ref[...]
    out_ref[...] = out.astype(out_ref.dtype)
    # TODO(synk): Dropout/Dropout2d are stochastic train-time ops; modeled as
    # identity (eval mode), matching module.eval() semantics.


# ============================================================================
# Host-side (one-time) parameter preparation: fold BN, build band matrices.
# ============================================================================
def _fold_bn(bn_p):
    gamma, beta, rmean, rvar = bn_p
    s = gamma / jnp.sqrt(rvar + EPS)
    return s, beta - rmean * s


def _conv_band_params(conv_p, bn_p, batch, H, W):
    """3x3/pad=1 conv + BN(inference) as banded matmuls on (B*H, W*Cin)."""
    w, b = conv_p                                     # w: (Cout, Cin, 3, 3)
    s, t = _fold_bn(bn_p)
    cout, cin = w.shape[0], w.shape[1]
    w_f = w * s[:, None, None, None]                  # fold BN scale
    b_eff = b * s + t                                 # fold BN shift
    bands = []
    for ky in range(3):
        m = jnp.zeros((W * cin, W * cout), jnp.float32)
        for kx in range(3):
            # eye(W, k=1-kx)[xi, x] == 1  iff  xi == x + kx - 1  (zero pad in x)
            m = m + jnp.kron(jnp.eye(W, k=1 - kx, dtype=jnp.float32),
                             w_f[:, :, ky, kx].T)
        bands.append(m)
    w_band = jnp.stack(bands, axis=0).astype(jnp.bfloat16)      # (3, W*Cin, W*Cout)
    l_band = jnp.stack(
        [jnp.kron(jnp.eye(batch, dtype=jnp.float32),
                  jnp.eye(H, k=ky - 1, dtype=jnp.float32)) for ky in range(3)],
        axis=0).astype(jnp.bfloat16)                             # (3, B*H, B*H)
    bias_row = jnp.tile(b_eff, (W,)).reshape(1, W * cout).astype(jnp.float32)
    return l_band, w_band, bias_row


def _pool_params(batch, H, W, C):
    H2, W2 = H // 2, W // 2
    p = 0.5 * jnp.kron(jnp.eye(batch * H2, dtype=jnp.float32),
                       jnp.ones((1, 2), jnp.float32))            # (B*H2, B*H)
    q = 0.5 * jnp.kron(jnp.kron(jnp.eye(W2, dtype=jnp.float32),
                                jnp.ones((2, 1), jnp.float32)),
                       jnp.eye(C, dtype=jnp.float32))            # (W*C, W2*C)
    return p.astype(jnp.bfloat16), q.astype(jnp.bfloat16)


def _fc1_params(fc_p, bn_p, batch, C):
    """AvgPool(2,2) on 4x4 + NCHW flatten + fc1 + BN folded into 2 banded stages."""
    w1, b1 = fc_p                                     # (256, C*2*2)
    s, t = _fold_bn(bn_p)
    w1_f = w1 * s[:, None]
    b_eff = b1 * s + t
    J = w1.shape[0]
    w1_r = w1_f.reshape(J, C, 2, 2)                   # [j, c, y2, x2] (NCHW flatten)
    q2 = 0.5 * jnp.kron(jnp.kron(jnp.eye(2, dtype=jnp.float32),
                                 jnp.ones((2, 1), jnp.float32)),
                        jnp.eye(C, dtype=jnp.float32))            # (4C, 2C)
    s_list, v_list = [], []
    for y2 in range(2):
        v = jnp.transpose(w1_r[:, :, y2, :], (2, 1, 0)).reshape(2 * C, J)
        v_list.append(q2 @ v)                                     # (4C, J)
        row = jnp.zeros((1, 4), jnp.float32)
        row = row.at[0, 2 * y2].set(0.5).at[0, 2 * y2 + 1].set(0.5)
        s_list.append(jnp.kron(jnp.eye(batch, dtype=jnp.float32), row))  # (B, 4B)
    return (jnp.stack(s_list, axis=0).astype(jnp.bfloat16),
            jnp.stack(v_list, axis=0).astype(jnp.bfloat16),
            b_eff.reshape(1, J).astype(jnp.float32))


def _fc_params(fc_p, bn_p):
    w, b = fc_p
    if bn_p is not None:
        s, t = _fold_bn(bn_p)
        w_eff = (w * s[:, None]).T
        b_eff = b * s + t
    else:
        w_eff, b_eff = w.T, b
    return w_eff.astype(jnp.bfloat16), b_eff.reshape(1, -1).astype(jnp.float32)


def prepare_params(params, batch_size):
    """One-time host-side prep for the fused kernel (depends on batch_size)."""
    c1 = _conv_band_params(params['conv1'], params['bn1'], batch_size, 8, 8)
    c2 = _conv_band_params(params['conv2'], params['bn2'], batch_size, 8, 8)
    p1 = _pool_params(batch_size, 8, 8, params['conv2'][0].shape[0])
    c3 = _conv_band_params(params['conv3'], params['bn3'], batch_size, 4, 4)
    c4 = _conv_band_params(params['conv4'], params['bn4'], batch_size, 4, 4)
    f1 = _fc1_params(params['fc1'], params['bnd1'], batch_size,
                     params['conv4'][0].shape[0])
    f2 = _fc_params(params['fc2'], params['bnd2'])
    f3 = _fc_params(params['fc3'], None)
    return c1 + c2 + p1 + c3 + c4 + f1 + f2 + f3


# ============================================================================
# Forward pass: one fused pallas_call (input is NCHW, PyTorch convention).
# ============================================================================
def forward(prep, x_nchw):
    (l1, w1, b1, l2, w2, b2, p1, q1, l3, w3, b3, l4, w4, b4,
     s1, v1, bf1, w5, b5, w6, b6) = prep
    B, Cin, H, W = x_nchw.shape
    # NCHW -> (B*H, W*Cin) layout (rows=(b,y), cols=(x,c)); tiny one-time op.
    a0 = jnp.transpose(x_nchw, (0, 2, 3, 1)).reshape(B * H, W * Cin)
    a0 = a0.astype(jnp.float32)
    args = (a0, l1, w1, b1, l2, w2, b2, p1, q1, l3, w3, b3, l4, w4, b4,
            s1, v1, bf1, w5, b5, w6, b6)
    num_classes = w6.shape[-1]

    def band_flops(l, w):
        taps, m, kl = l.shape
        _, k, n = w.shape
        return taps * 2 * (m * kl * k + m * k * n)

    flops = (band_flops(l1, w1) + band_flops(l2, w2) + band_flops(l3, w3)
             + band_flops(l4, w4) + band_flops(s1, v1)
             + 2 * p1.shape[0] * p1.shape[1] * q1.shape[0]
             + 2 * p1.shape[0] * q1.shape[0] * q1.shape[1]
             + 2 * B * w5.shape[0] * w5.shape[1]
             + 2 * B * w6.shape[0] * w6.shape[1])
    bytes_accessed = sum(int(a.size) * a.dtype.itemsize for a in args) \
        + B * num_classes * 4

    vmem = pl.BlockSpec(memory_space=pltpu.MemorySpace.VMEM)
    return pl.pallas_call(
        _fused_net_kernel,
        out_shape=jax.ShapeDtypeStruct((B, num_classes), jnp.float32),
        in_specs=[vmem] * len(args),
        out_specs=vmem,
        cost_estimate=pl.CostEstimate(flops=int(flops), transcendentals=0,
                                      bytes_accessed=int(bytes_accessed)),
    )(*args)


# ============================================================================
# Plain-JAX float32 reference (for a sanity check in __main__).
# ============================================================================
def _reference_forward(params, x_nchw):
    def conv_bn_relu(x, conv_p, bn_p):
        w, b = conv_p
        gamma, beta, rmean, rvar = bn_p
        y = jax.lax.conv_general_dilated(
            x, w, window_strides=(1, 1), padding=((1, 1), (1, 1)),
            dimension_numbers=('NCHW', 'OIHW', 'NCHW'))
        y = y + b[None, :, None, None]
        s = gamma / jnp.sqrt(rvar + EPS)
        y = (y - rmean[None, :, None, None]) * s[None, :, None, None] \
            + beta[None, :, None, None]
        return jnp.maximum(y, 0.0)

    def pool(x):
        b, c, h, w = x.shape
        return x.reshape(b, c, h // 2, 2, w // 2, 2).mean(axis=(3, 5))

    def lin(x, fc_p, bn_p, relu):
        w, b = fc_p
        y = x @ w.T + b
        if bn_p is not None:
            gamma, beta, rmean, rvar = bn_p
            s = gamma / jnp.sqrt(rvar + EPS)
            y = (y - rmean) * s + beta
        return jnp.maximum(y, 0.0) if relu else y

    x = conv_bn_relu(x_nchw, params['conv1'], params['bn1'])
    x = conv_bn_relu(x, params['conv2'], params['bn2'])
    x = pool(x)
    x = conv_bn_relu(x, params['conv3'], params['bn3'])
    x = conv_bn_relu(x, params['conv4'], params['bn4'])
    x = pool(x)
    x = x.reshape(x.shape[0], -1)
    x = lin(x, params['fc1'], params['bnd1'], relu=True)
    x = lin(x, params['fc2'], params['bnd2'], relu=True)
    x = lin(x, params['fc3'], None, relu=False)
    return x


# ============================================================================
# Deterministic parameter initialization (PyTorch-like uniform fan-in bounds)
# ============================================================================
def _linear_init(key, fan_in, shape_w, shape_b):
    k1, k2 = jax.random.split(key)
    bound = float(fan_in) ** -0.5
    w = jax.random.uniform(k1, shape_w, jnp.float32, -bound, bound)
    b = jax.random.uniform(k2, shape_b, jnp.float32, -bound, bound)
    return w, b


def _bn_init(key, n):
    k1, k2 = jax.random.split(key)
    gamma = jax.random.uniform(k1, (n,), jnp.float32, 0.5, 1.5)
    beta = 0.1 * jax.random.normal(k2, (n,), jnp.float32)
    rmean = jnp.zeros((n,), jnp.float32)   # PyTorch default running stats
    rvar = jnp.ones((n,), jnp.float32)
    return gamma, beta, rmean, rvar


def init_params(key, in_channels=3, num_classes=10):
    ks = jax.random.split(key, 13)
    p = {}
    p['conv1'] = _linear_init(ks[0], in_channels * 9, (16, in_channels, 3, 3), (16,))
    p['bn1'] = _bn_init(ks[1], 16)
    p['conv2'] = _linear_init(ks[2], 16 * 9, (32, 16, 3, 3), (32,))
    p['bn2'] = _bn_init(ks[3], 32)
    p['conv3'] = _linear_init(ks[4], 32 * 9, (64, 32, 3, 3), (64,))
    p['bn3'] = _bn_init(ks[5], 64)
    p['conv4'] = _linear_init(ks[6], 64 * 9, (64, 64, 3, 3), (64,))
    p['bn4'] = _bn_init(ks[7], 64)
    p['fc1'] = _linear_init(ks[8], 256, (256, 64 * 2 * 2), (256,))
    p['bnd1'] = _bn_init(ks[9], 256)
    p['fc2'] = _linear_init(ks[10], 256, (128, 256), (128,))
    p['bnd2'] = _bn_init(ks[11], 128)
    p['fc3'] = _linear_init(ks[12], 128, (num_classes, 128), (num_classes,))
    return p


if __name__ == "__main__":
    root = jax.random.PRNGKey(0)
    k_x, k_p = jax.random.split(root)
    batch = 2
    x = jax.random.normal(k_x, (batch, 3, 8, 8), dtype=jnp.float32)  # NCHW input
    params = init_params(k_p)

    prep = prepare_params(params, batch_size=batch)   # one-time host-side prep
    out = jax.jit(forward)(prep, x)
    out = jax.block_until_ready(out)
    assert out.shape == (batch, 10)
    assert bool(jnp.all(jnp.isfinite(out)))

    # Sanity check against a plain-JAX f32 reference (kernel matmuls are bf16).
    ref = _reference_forward(params, x)
    err = float(jnp.max(jnp.abs(out - ref)))
    scale = float(jnp.max(jnp.abs(ref))) + 1e-6
    assert err <= 0.05 * scale + 0.02, ("mismatch vs reference", err, scale)

    print("KERNEL_OK")
</pallas_src>

<mosaic_0001>
module attributes {stable_mosaic.version = 11 : i64} {
  func.func @_fused_net_kernel(%arg0: memref<16x24xf32, #tpu.memory_space<vmem>>, %arg1: memref<3x16x16xbf16, #tpu.memory_space<vmem>>, %arg2: memref<3x24x128xbf16, #tpu.memory_space<vmem>>, %arg3: memref<1x128xf32, #tpu.memory_space<vmem>>, %arg4: memref<3x16x16xbf16, #tpu.memory_space<vmem>>, %arg5: memref<3x128x256xbf16, #tpu.memory_space<vmem>>, %arg6: memref<1x256xf32, #tpu.memory_space<vmem>>, %arg7: memref<8x16xbf16, #tpu.memory_space<vmem>>, %arg8: memref<256x128xbf16, #tpu.memory_space<vmem>>, %arg9: memref<3x8x8xbf16, #tpu.memory_space<vmem>>, %arg10: memref<3x128x256xbf16, #tpu.memory_space<vmem>>, %arg11: memref<1x256xf32, #tpu.memory_space<vmem>>, %arg12: memref<3x8x8xbf16, #tpu.memory_space<vmem>>, %arg13: memref<3x256x256xbf16, #tpu.memory_space<vmem>>, %arg14: memref<1x256xf32, #tpu.memory_space<vmem>>, %arg15: memref<2x2x8xbf16, #tpu.memory_space<vmem>>, %arg16: memref<2x256x256xbf16, #tpu.memory_space<vmem>>, %arg17: memref<1x256xf32, #tpu.memory_space<vmem>>, %arg18: memref<256x128xbf16, #tpu.memory_space<vmem>>, %arg19: memref<1x128xf32, #tpu.memory_space<vmem>>, %arg20: memref<128x10xbf16, #tpu.memory_space<vmem>>, %arg21: memref<1x10xf32, #tpu.memory_space<vmem>>, %arg22: memref<2x10xf32, #tpu.memory_space<vmem>>) attributes {dimension_semantics = [], scalar_prefetch = 0 : i64, scratch_operands = 0 : i64, tpu.core_type = #tpu.core_type<tc>} {
    %c0 = arith.constant 0 : index
    %c0_0 = arith.constant 0 : index
    %0 = vector.load %arg0[%c0, %c0_0] : memref<16x24xf32, #tpu.memory_space<vmem>>, vector<16x24xf32>
    %1 = arith.truncf %0 : vector<16x24xf32> to vector<16x24xbf16>
    %c0_1 = arith.constant 0 : index
    %c0_2 = arith.constant 0 : index
    %2 = vector.load %arg3[%c0_1, %c0_2] : memref<1x128xf32, #tpu.memory_space<vmem>>, vector<1x128xf32>
    %c0_3 = arith.constant 0 : index
    %c0_4 = arith.constant 0 : index
    %c0_5 = arith.constant 0 : index
    %3 = vector.load %arg1[%c0_3, %c0_4, %c0_5] : memref<3x16x16xbf16, #tpu.memory_space<vmem>>, vector<1x16x16xbf16>
    %4 = vector.shape_cast %3 : vector<1x16x16xbf16> to vector<16x16xbf16>
    %cst = arith.constant dense<0.000000e+00> : vector<16x24xf32>
    %5 = tpu.matmul %4, %1, %cst {dimension_numbers = #tpu.dot_dimension_numbers<[1], [0], [0], [1], [0, 0, 1, 1], [], []>} : vector<16x16xbf16>, vector<16x24xbf16>, vector<16x24xf32> -> vector<16x24xf32>
    %6 = arith.truncf %5 : vector<16x24xf32> to vector<16x24xbf16>
    %c0_6 = arith.constant 0 : index
    %c0_7 = arith.constant 0 : index
    %c0_8 = arith.constant 0 : index
    %7 = vector.load %arg2[%c0_6, %c0_7, %c0_8] : memref<3x24x128xbf16, #tpu.memory_space<vmem>>, vector<1x24x128xbf16>
    %8 = vector.shape_cast %7 : vector<1x24x128xbf16> to vector<24x128xbf16>
    %cst_9 = arith.constant dense<0.000000e+00> : vector<16x128xf32>
    %9 = tpu.matmul %6, %8, %cst_9 {dimension_numbers = #tpu.dot_dimension_numbers<[1], [0], [0], [1], [0, 0, 1, 1], [], []>} : vector<16x24xbf16>, vector<24x128xbf16>, vector<16x128xf32> -> vector<16x128xf32>
    %10 = vector.broadcast %2 : vector<1x128xf32> to vector<16x128xf32>
    %11 = arith.addf %10, %9 : vector<16x128xf32>
    %c1 = arith.constant 1 : index
    %c0_10 = arith.constant 0 : index
    %c0_11 = arith.constant 0 : index
    %12 = vector.load %arg1[%c1, %c0_10, %c0_11] : memref<3x16x16xbf16, #tpu.memory_space<vmem>>, vector<1x16x16xbf16>
    %13 = vector.shape_cast %12 : vector<1x16x16xbf16> to vector<16x16xbf16>
    %cst_12 = arith.constant dense<0.000000e+00> : vector<16x24xf32>
    %14 = tpu.matmul %13, %1, %cst_12 {dimension_numbers = #tpu.dot_dimension_numbers<[1], [0], [0], [1], [0, 0, 1, 1], [], []>} : vector<16x16xbf16>, vector<16x24xbf16>, vector<16x24xf32> -> vector<16x24xf32>
    %15 = arith.truncf %14 : vector<16x24xf32> to vector<16x24xbf16>
    %c1_13 = arith.constant 1 : index
    %c0_14 = arith.constant 0 : index
    %c0_15 = arith.constant 0 : index
    %16 = vector.load %arg2[%c1_13, %c0_14, %c0_15] : memref<3x24x128xbf16, #tpu.memory_space<vmem>>, vector<1x24x128xbf16>
    %17 = vector.shape_cast %16 : vector<1x24x128xbf16> to vector<24x128xbf16>
    %cst_16 = arith.constant dense<0.000000e+00> : vector<16x128xf32>
    %18 = tpu.matmul %15, %17, %cst_16 {dimension_numbers = #tpu.dot_dimension_numbers<[1], [0], [0], [1], [0, 0, 1, 1], [], []>} : vector<16x24xbf16>, vector<24x128xbf16>, vector<16x128xf32> -> vector<16x128xf32>
    %19 = arith.addf %11, %18 : vector<16x128xf32>
    %c2 = arith.constant 2 : index
    %c0_17 = arith.constant 0 : index
    %c0_18 = arith.constant 0 : index
    %20 = vector.load %arg1[%c2, %c0_17, %c0_18] : memref<3x16x16xbf16, #tpu.memory_space<vmem>>, vector<1x16x16xbf16>
    %21 = vector.shape_cast %20 : vector<1x16x16xbf16> to vector<16x16xbf16>
    %cst_19 = arith.constant dense<0.000000e+00> : vector<16x24xf32>
    %22 = tpu.matmul %21, %1, %cst_19 {dimension_numbers = #tpu.dot_dimension_numbers<[1], [0], [0], [1], [0, 0, 1, 1], [], []>} : vector<16x16xbf16>, vector<16x24xbf16>, vector<16x24xf32> -> vector<16x24xf32>
    %23 = arith.truncf %22 : vector<16x24xf32> to vector<16x24xbf16>
    %c2_20 = arith.constant 2 : index
    %c0_21 = arith.constant 0 : index
    %c0_22 = arith.constant 0 : index
    %24 = vector.load %arg2[%c2_20, %c0_21, %c0_22] : memref<3x24x128xbf16, #tpu.memory_space<vmem>>, vector<1x24x128xbf16>
    %25 = vector.shape_cast %24 : vector<1x24x128xbf16> to vector<24x128xbf16>
    %cst_23 = arith.constant dense<0.000000e+00> : vector<16x128xf32>
    %26 = tpu.matmul %23, %25, %cst_23 {dimension_numbers = #tpu.dot_dimension_numbers<[1], [0], [0], [1], [0, 0, 1, 1], [], []>} : vector<16x24xbf16>, vector<24x128xbf16>, vector<16x128xf32> -> vector<16x128xf32>
    %27 = arith.addf %19, %26 : vector<16x128xf32>
    %cst_24 = arith.constant 0.000000e+00 : f32
    %28 = vector.broadcast %cst_24 : f32 to vector<16x128xf32>
    %29 = arith.maximumf %27, %28 : vector<16x128xf32>
    %30 = arith.truncf %29 : vector<16x128xf32> to vector<16x128xbf16>
    %c0_25 = arith.constant 0 : index
    %c0_26 = arith.constant 0 : index
    %31 = vector.load %arg6[%c0_25, %c0_26] : memref<1x256xf32, #tpu.memory_space<vmem>>, vector<1x256xf32>
    %c0_27 = arith.constant 0 : index
    %c0_28 = arith.constant 0 : index
    %c0_29 = arith.constant 0 : index
    %32 = vector.load %arg4[%c0_27, %c0_28, %c0_29] : memref<3x16x16xbf16, #tpu.memory_space<vmem>>, vector<1x16x16xbf16>
    %33 = vector.shape_cast %32 : vector<1x16x16xbf16> to vector<16x16xbf16>
    %cst_30 = arith.constant dense<0.000000e+00> : vector<16x128xf32>
    %34 = tpu.matmul %33, %30, %cst_30 {dimension_numbers = #tpu.dot_dimension_numbers<[1], [0], [0], [1], [0, 0, 1, 1], [], []>} : vector<16x16xbf16>, vector<16x128xbf16>, vector<16x128xf32> -> vector<16x128xf32>
    %35 = arith.truncf %34 : vector<16x128xf32> to vector<16x128xbf16>
    %c0_31 = arith.constant 0 : index
    %c0_32 = arith.constant 0 : index
    %c0_33 = arith.constant 0 : index
    %36 = vector.load %arg5[%c0_31, %c0_32, %c0_33] : memref<3x128x256xbf16, #tpu.memory_space<vmem>>, vector<1x128x256xbf16>
    %37 = vector.shape_cast %36 : vector<1x128x256xbf16> to vector<128x256xbf16>
    %cst_34 = arith.constant dense<0.000000e+00> : vector<16x256xf32>
    %38 = tpu.matmul %35, %37, %cst_34 {dimension_numbers = #tpu.dot_dimension_numbers<[1], [0], [0], [1], [0, 0, 1, 1], [], []>} : vector<16x128xbf16>, vector<128x256xbf16>, vector<16x256xf32> -> vector<16x256xf32>
    %39 = vector.broadcast %31 : vector<1x256xf32> to vector<16x256xf32>
    %40 = arith.addf %39, %38 : vector<16x256xf32>
    %c1_35 = arith.constant 1 : index
    %c0_36 = arith.constant 0 : index
    %c0_37 = arith.constant 0 : index
    %41 = vector.load %arg4[%c1_35, %c0_36, %c0_37] : memref<3x16x16xbf16, #tpu.memory_space<vmem>>, vector<1x16x16xbf16>
    %42 = vector.shape_cast %41 : vector<1x16x16xbf16> to vector<16x16xbf16>
    %cst_38 = arith.constant dense<0.000000e+00> : vector<16x128xf32>
    %43 = tpu.matmul %42, %30, %cst_38 {dimension_numbers = #tpu.dot_dimension_numbers<[1], [0], [0], [1], [0, 0, 1, 1], [], []>} : vector<16x16xbf16>, vector<16x128xbf16>, vector<16x128xf32> -> vector<16x128xf32>
    %44 = arith.truncf %43 : vector<16x128xf32> to vector<16x128xbf16>
    %c1_39 = arith.constant 1 : index
    %c0_40 = arith.constant 0 : index
    %c0_41 = arith.constant 0 : index
    %45 = vector.load %arg5[%c1_39, %c0_40, %c0_41] : memref<3x128x256xbf16, #tpu.memory_space<vmem>>, vector<1x128x256xbf16>
    %46 = vector.shape_cast %45 : vector<1x128x256xbf16> to vector<128x256xbf16>
    %cst_42 = arith.constant dense<0.000000e+00> : vector<16x256xf32>
    %47 = tpu.matmul %44, %46, %cst_42 {dimension_numbers = #tpu.dot_dimension_numbers<[1], [0], [0], [1], [0, 0, 1, 1], [], []>} : vector<16x128xbf16>, vector<128x256xbf16>, vector<16x256xf32> -> vector<16x256xf32>
    %48 = arith.addf %40, %47 : vector<16x256xf32>
    %c2_43 = arith.constant 2 : index
    %c0_44 = arith.constant 0 : index
    %c0_45 = arith.constant 0 : index
    %49 = vector.load %arg4[%c2_43, %c0_44, %c0_45] : memref<3x16x16xbf16, #tpu.memory_space<vmem>>, vector<1x16x16xbf16>
    %50 = vector.shape_cast %49 : vector<1x16x16xbf16> to vector<16x16xbf16>
    %cst_46 = arith.constant dense<0.000000e+00> : vector<16x128xf32>
    %51 = tpu.matmul %50, %30, %cst_46 {dimension_numbers = #tpu.dot_dimension_numbers<[1], [0], [0], [1], [0, 0, 1, 1], [], []>} : vector<16x16xbf16>, vector<16x128xbf16>, vector<16x128xf32> -> vector<16x128xf32>
    %52 = arith.truncf %51 : vector<16x128xf32> to vector<16x128xbf16>
    %c2_47 = arith.constant 2 : index
    %c0_48 = arith.constant 0 : index
    %c0_49 = arith.constant 0 : index
    %53 = vector.load %arg5[%c2_47, %c0_48, %c0_49] : memref<3x128x256xbf16, #tpu.memory_space<vmem>>, vector<1x128x256xbf16>
    %54 = vector.shape_cast %53 : vector<1x128x256xbf16> to vector<128x256xbf16>
    %cst_50 = arith.constant dense<0.000000e+00> : vector<16x256xf32>
    %55 = tpu.matmul %52, %54, %cst_50 {dimension_numbers = #tpu.dot_dimension_numbers<[1], [0], [0], [1], [0, 0, 1, 1], [], []>} : vector<16x128xbf16>, vector<128x256xbf16>, vector<16x256xf32> -> vector<16x256xf32>
    %56 = arith.addf %48, %55 : vector<16x256xf32>
    %cst_51 = arith.constant 0.000000e+00 : f32
    %57 = vector.broadcast %cst_51 : f32 to vector<16x256xf32>
    %58 = arith.maximumf %56, %57 : vector<16x256xf32>
    %c0_52 = arith.constant 0 : index
    %c0_53 = arith.constant 0 : index
    %59 = vector.load %arg7[%c0_52, %c0_53] : memref<8x16xbf16, #tpu.memory_space<vmem>>, vector<8x16xbf16>
    %60 = arith.truncf %58 : vector<16x256xf32> to vector<16x256xbf16>
    %cst_54 = arith.constant dense<0.000000e+00> : vector<8x256xf32>
    %61 = tpu.matmul %59, %60, %cst_54 {dimension_numbers = #tpu.dot_dimension_numbers<[1], [0], [0], [1], [0, 0, 1, 1], [], []>} : vector<8x16xbf16>, vector<16x256xbf16>, vector<8x256xf32> -> vector<8x256xf32>
    %62 = arith.truncf %61 : vector<8x256xf32> to vector<8x256xbf16>
    %c0_55 = arith.constant 0 : index
    %c0_56 = arith.constant 0 : index
    %63 = vector.load %arg8[%c0_55, %c0_56] : memref<256x128xbf16, #tpu.memory_space<vmem>>, vector<256x128xbf16>
    %cst_57 = arith.constant dense<0.000000e+00> : vector<8x128xf32>
    %64 = tpu.matmul %62, %63, %cst_57 {dimension_numbers = #tpu.dot_dimension_numbers<[1], [0], [0], [1], [0, 0, 1, 1], [], []>} : vector<8x256xbf16>, vector<256x128xbf16>, vector<8x128xf32> -> vector<8x128xf32>
    %65 = arith.truncf %64 : vector<8x128xf32> to vector<8x128xbf16>
    %c0_58 = arith.constant 0 : index
    %c0_59 = arith.constant 0 : index
    %66 = vector.load %arg11[%c0_58, %c0_59] : memref<1x256xf32, #tpu.memory_space<vmem>>, vector<1x256xf32>
    %c0_60 = arith.constant 0 : index
    %c0_61 = arith.constant 0 : index
    %c0_62 = arith.constant 0 : index
    %67 = vector.load %arg9[%c0_60, %c0_61, %c0_62] : memref<3x8x8xbf16, #tpu.memory_space<vmem>>, vector<1x8x8xbf16>
    %68 = vector.shape_cast %67 : vector<1x8x8xbf16> to vector<8x8xbf16>
    %cst_63 = arith.constant dense<0.000000e+00> : vector<8x128xf32>
    %69 = tpu.matmul %68, %65, %cst_63 {dimension_numbers = #tpu.dot_dimension_numbers<[1], [0], [0], [1], [0, 0, 1, 1], [], []>} : vector<8x8xbf16>, vector<8x128xbf16>, vector<8x128xf32> -> vector<8x128xf32>
    %70 = arith.truncf %69 : vector<8x128xf32> to vector<8x128xbf16>
    %c0_64 = arith.constant 0 : index
    %c0_65 = arith.constant 0 : index
    %c0_66 = arith.constant 0 : index
    %71 = vector.load %arg10[%c0_64, %c0_65, %c0_66] : memref<3x128x256xbf16, #tpu.memory_space<vmem>>, vector<1x128x256xbf16>
    %72 = vector.shape_cast %71 : vector<1x128x256xbf16> to vector<128x256xbf16>
    %cst_67 = arith.constant dense<0.000000e+00> : vector<8x256xf32>
    %73 = tpu.matmul %70, %72, %cst_67 {dimension_numbers = #tpu.dot_dimension_numbers<[1], [0], [0], [1], [0, 0, 1, 1], [], []>} : vector<8x128xbf16>, vector<128x256xbf16>, vector<8x256xf32> -> vector<8x256xf32>
    %74 = vector.broadcast %66 : vector<1x256xf32> to vector<8x256xf32>
    %75 = arith.addf %74, %73 : vector<8x256xf32>
    %c1_68 = arith.constant 1 : index
    %c0_69 = arith.constant 0 : index
    %c0_70 = arith.constant 0 : index
    %76 = vector.load %arg9[%c1_68, %c0_69, %c0_70] : memref<3x8x8xbf16, #tpu.memory_space<vmem>>, vector<1x8x8xbf16>
    %77 = vector.shape_cast %76 : vector<1x8x8xbf16> to vector<8x8xbf16>
    %cst_71 = arith.constant dense<0.000000e+00> : vector<8x128xf32>
    %78 = tpu.matmul %77, %65, %cst_71 {dimension_numbers = #tpu.dot_dimension_numbers<[1], [0], [0], [1], [0, 0, 1, 1], [], []>} : vector<8x8xbf16>, vector<8x128xbf16>, vector<8x128xf32> -> vector<8x128xf32>
    %79 = arith.truncf %78 : vector<8x128xf32> to vector<8x128xbf16>
    %c1_72 = arith.constant 1 : index
    %c0_73 = arith.constant 0 : index
    %c0_74 = arith.constant 0 : index
    %80 = vector.load %arg10[%c1_72, %c0_73, %c0_74] : memref<3x128x256xbf16, #tpu.memory_space<vmem>>, vector<1x128x256xbf16>
    %81 = vector.shape_cast %80 : vector<1x128x256xbf16> to vector<128x256xbf16>
    %cst_75 = arith.constant dense<0.000000e+00> : vector<8x256xf32>
    %82 = tpu.matmul %79, %81, %cst_75 {dimension_numbers = #tpu.dot_dimension_numbers<[1], [0], [0], [1], [0, 0, 1, 1], [], []>} : vector<8x128xbf16>, vector<128x256xbf16>, vector<8x256xf32> -> vector<8x256xf32>
    %83 = arith.addf %75, %82 : vector<8x256xf32>
    %c2_76 = arith.constant 2 : index
    %c0_77 = arith.constant 0 : index
    %c0_78 = arith.constant 0 : index
    %84 = vector.load %arg9[%c2_76, %c0_77, %c0_78] : memref<3x8x8xbf16, #tpu.memory_space<vmem>>, vector<1x8x8xbf16>
    %85 = vector.shape_cast %84 : vector<1x8x8xbf16> to vector<8x8xbf16>
    %cst_79 = arith.constant dense<0.000000e+00> : vector<8x128xf32>
    %86 = tpu.matmul %85, %65, %cst_79 {dimension_numbers = #tpu.dot_dimension_numbers<[1], [0], [0], [1], [0, 0, 1, 1], [], []>} : vector<8x8xbf16>, vector<8x128xbf16>, vector<8x128xf32> -> vector<8x128xf32>
    %87 = arith.truncf %86 : vector<8x128xf32> to vector<8x128xbf16>
    %c2_80 = arith.constant 2 : index
    %c0_81 = arith.constant 0 : index
    %c0_82 = arith.constant 0 : index
    %88 = vector.load %arg10[%c2_80, %c0_81, %c0_82] : memref<3x128x256xbf16, #tpu.memory_space<vmem>>, vector<1x128x256xbf16>
    %89 = vector.shape_cast %88 : vector<1x128x256xbf16> to vector<128x256xbf16>
    %cst_83 = arith.constant dense<0.000000e+00> : vector<8x256xf32>
    %90 = tpu.matmul %87, %89, %cst_83 {dimension_numbers = #tpu.dot_dimension_numbers<[1], [0], [0], [1], [0, 0, 1, 1], [], []>} : vector<8x128xbf16>, vector<128x256xbf16>, vector<8x256xf32> -> vector<8x256xf32>
    %91 = arith.addf %83, %90 : vector<8x256xf32>
    %cst_84 = arith.constant 0.000000e+00 : f32
    %92 = vector.broadcast %cst_84 : f32 to vector<8x256xf32>
    %93 = arith.maximumf %91, %92 : vector<8x256xf32>
    %94 = arith.truncf %93 : vector<8x256xf32> to vector<8x256xbf16>
    %c0_85 = arith.constant 0 : index
    %c0_86 = arith.constant 0 : index
    %95 = vector.load %arg14[%c0_85, %c0_86] : memref<1x256xf32, #tpu.memory_space<vmem>>, vector<1x256xf32>
    %c0_87 = arith.constant 0 : index
    %c0_88 = arith.constant 0 : index
    %c0_89 = arith.constant 0 : index
    %96 = vector.load %arg12[%c0_87, %c0_88, %c0_89] : memref<3x8x8xbf16, #tpu.memory_space<vmem>>, vector<1x8x8xbf16>
    %97 = vector.shape_cast %96 : vector<1x8x8xbf16> to vector<8x8xbf16>
    %cst_90 = arith.constant dense<0.000000e+00> : vector<8x256xf32>
    %98 = tpu.matmul %97, %94, %cst_90 {dimension_numbers = #tpu.dot_dimension_numbers<[1], [0], [0], [1], [0, 0, 1, 1], [], []>} : vector<8x8xbf16>, vector<8x256xbf16>, vector<8x256xf32> -> vector<8x256xf32>
    %99 = arith.truncf %98 : vector<8x256xf32> to vector<8x256xbf16>
    %c0_91 = arith.constant 0 : index
    %c0_92 = arith.constant 0 : index
    %c0_93 = arith.constant 0 : index
    %100 = vector.load %arg13[%c0_91, %c0_92, %c0_93] : memref<3x256x256xbf16, #tpu.memory_space<vmem>>, vector<1x256x256xbf16>
    %101 = vector.shape_cast %100 : vector<1x256x256xbf16> to vector<256x256xbf16>
    %cst_94 = arith.constant dense<0.000000e+00> : vector<8x256xf32>
    %102 = tpu.matmul %99, %101, %cst_94 {dimension_numbers = #tpu.dot_dimension_numbers<[1], [0], [0], [1], [0, 0, 1, 1], [], []>} : vector<8x256xbf16>, vector<256x256xbf16>, vector<8x256xf32> -> vector<8x256xf32>
    %103 = vector.broadcast %95 : vector<1x256xf32> to vector<8x256xf32>
    %104 = arith.addf %103, %102 : vector<8x256xf32>
    %c1_95 = arith.constant 1 : index
    %c0_96 = arith.constant 0 : index
    %c0_97 = arith.constant 0 : index
    %105 = vector.load %arg12[%c1_95, %c0_96, %c0_97] : memref<3x8x8xbf16, #tpu.memory_space<vmem>>, vector<1x8x8xbf16>
    %106 = vector.shape_cast %105 : vector<1x8x8xbf16> to vector<8x8xbf16>
    %cst_98 = arith.constant dense<0.000000e+00> : vector<8x256xf32>
    %107 = tpu.matmul %106, %94, %cst_98 {dimension_numbers = #tpu.dot_dimension_numbers<[1], [0], [0], [1], [0, 0, 1, 1], [], []>} : vector<8x8xbf16>, vector<8x256xbf16>, vector<8x256xf32> -> vector<8x256xf32>
    %108 = arith.truncf %107 : vector<8x256xf32> to vector<8x256xbf16>
    %c1_99 = arith.constant 1 : index
    %c0_100 = arith.constant 0 : index
    %c0_101 = arith.constant 0 : index
    %109 = vector.load %arg13[%c1_99, %c0_100, %c0_101] : memref<3x256x256xbf16, #tpu.memory_space<vmem>>, vector<1x256x256xbf16>
    %110 = vector.shape_cast %109 : vector<1x256x256xbf16> to vector<256x256xbf16>
    %cst_102 = arith.constant dense<0.000000e+00> : vector<8x256xf32>
    %111 = tpu.matmul %108, %110, %cst_102 {dimension_numbers = #tpu.dot_dimension_numbers<[1], [0], [0], [1], [0, 0, 1, 1], [], []>} : vector<8x256xbf16>, vector<256x256xbf16>, vector<8x256xf32> -> vector<8x256xf32>
    %112 = arith.addf %104, %111 : vector<8x256xf32>
    %c2_103 = arith.constant 2 : index
    %c0_104 = arith.constant 0 : index
    %c0_105 = arith.constant 0 : index
    %113 = vector.load %arg12[%c2_103, %c0_104, %c0_105] : memref<3x8x8xbf16, #tpu.memory_space<vmem>>, vector<1x8x8xbf16>
    %114 = vector.shape_cast %113 : vector<1x8x8xbf16> to vector<8x8xbf16>
    %cst_106 = arith.constant dense<0.000000e+00> : vector<8x256xf32>
    %115 = tpu.matmul %114, %94, %cst_106 {dimension_numbers = #tpu.dot_dimension_numbers<[1], [0], [0], [1], [0, 0, 1, 1], [], []>} : vector<8x8xbf16>, vector<8x256xbf16>, vector<8x256xf32> -> vector<8x256xf32>
    %116 = arith.truncf %115 : vector<8x256xf32> to vector<8x256xbf16>
    %c2_107 = arith.constant 2 : index
    %c0_108 = arith.constant 0 : index
    %c0_109 = arith.constant 0 : index
    %117 = vector.load %arg13[%c2_107, %c0_108, %c0_109] : memref<3x256x256xbf16, #tpu.memory_space<vmem>>, vector<1x256x256xbf16>
    %118 = vector.shape_cast %117 : vector<1x256x256xbf16> to vector<256x256xbf16>
    %cst_110 = arith.constant dense<0.000000e+00> : vector<8x256xf32>
    %119 = tpu.matmul %116, %118, %cst_110 {dimension_numbers = #tpu.dot_dimension_numbers<[1], [0], [0], [1], [0, 0, 1, 1], [], []>} : vector<8x256xbf16>, vector<256x256xbf16>, vector<8x256xf32> -> vector<8x256xf32>
    %120 = arith.addf %112, %119 : vector<8x256xf32>
    %cst_111 = arith.constant 0.000000e+00 : f32
    %121 = vector.broadcast %cst_111 : f32 to vector<8x256xf32>
    %122 = arith.maximumf %120, %121 : vector<8x256xf32>
    %123 = arith.truncf %122 : vector<8x256xf32> to vector<8x256xbf16>
    %c0_112 = arith.constant 0 : index
    %c0_113 = arith.constant 0 : index
    %124 = vector.load %arg17[%c0_112, %c0_113] : memref<1x256xf32, #tpu.memory_space<vmem>>, vector<1x256xf32>
    %c0_114 = arith.constant 0 : index
    %c0_115 = arith.constant 0 : index
    %c0_116 = arith.constant 0 : index
    %125 = vector.load %arg15[%c0_114, %c0_115, %c0_116] : memref<2x2x8xbf16, #tpu.memory_space<vmem>>, vector<1x2x8xbf16>
    %126 = vector.shape_cast %125 : vector<1x2x8xbf16> to vector<2x8xbf16>
    %cst_117 = arith.constant dense<0.000000e+00> : vector<2x256xf32>
    %127 = tpu.matmul %126, %123, %cst_117 {dimension_numbers = #tpu.dot_dimension_numbers<[1], [0], [0], [1], [0, 0, 1, 1], [], []>} : vector<2x8xbf16>, vector<8x256xbf16>, vector<2x256xf32> -> vector<2x256xf32>
    %128 = arith.truncf %127 : vector<2x256xf32> to vector<2x256xbf16>
    %c0_118 = arith.constant 0 : index
    %c0_119 = arith.constant 0 : index
    %c0_120 = arith.constant 0 : index
    %129 = vector.load %arg16[%c0_118, %c0_119, %c0_120] : memref<2x256x256xbf16, #tpu.memory_space<vmem>>, vector<1x256x256xbf16>
    %130 = vector.shape_cast %129 : vector<1x256x256xbf16> to vector<256x256xbf16>
    %cst_121 = arith.constant dense<0.000000e+00> : vector<2x256xf32>
    %131 = tpu.matmul %128, %130, %cst_121 {dimension_numbers = #tpu.dot_dimension_numbers<[1], [0], [0], [1], [0, 0, 1, 1], [], []>} : vector<2x256xbf16>, vector<256x256xbf16>, vector<2x256xf32> -> vector<2x256xf32>
    %132 = vector.broadcast %124 : vector<1x256xf32> to vector<2x256xf32>
    %133 = arith.addf %132, %131 : vector<2x256xf32>
    %c1_122 = arith.constant 1 : index
    %c0_123 = arith.constant 0 : index
    %c0_124 = arith.constant 0 : index
    %134 = vector.load %arg15[%c1_122, %c0_123, %c0_124] : memref<2x2x8xbf16, #tpu.memory_space<vmem>>, vector<1x2x8xbf16>
    %135 = vector.shape_cast %134 : vector<1x2x8xbf16> to vector<2x8xbf16>
    %cst_125 = arith.constant dense<0.000000e+00> : vector<2x256xf32>
    %136 = tpu.matmul %135, %123, %cst_125 {dimension_numbers = #tpu.dot_dimension_numbers<[1], [0], [0], [1], [0, 0, 1, 1], [], []>} : vector<2x8xbf16>, vector<8x256xbf16>, vector<2x256xf32> -> vector<2x256xf32>
    %137 = arith.truncf %136 : vector<2x256xf32> to vector<2x256xbf16>
    %c1_126 = arith.constant 1 : index
    %c0_127 = arith.constant 0 : index
    %c0_128 = arith.constant 0 : index
    %138 = vector.load %arg16[%c1_126, %c0_127, %c0_128] : memref<2x256x256xbf16, #tpu.memory_space<vmem>>, vector<1x256x256xbf16>
    %139 = vector.shape_cast %138 : vector<1x256x256xbf16> to vector<256x256xbf16>
    %cst_129 = arith.constant dense<0.000000e+00> : vector<2x256xf32>
    %140 = tpu.matmul %137, %139, %cst_129 {dimension_numbers = #tpu.dot_dimension_numbers<[1], [0], [0], [1], [0, 0, 1, 1], [], []>} : vector<2x256xbf16>, vector<256x256xbf16>, vector<2x256xf32> -> vector<2x256xf32>
    %141 = arith.addf %133, %140 : vector<2x256xf32>
    %cst_130 = arith.constant 0.000000e+00 : f32
    %142 = vector.broadcast %cst_130 : f32 to vector<2x256xf32>
    %143 = arith.maximumf %141, %142 : vector<2x256xf32>
    %144 = arith.truncf %143 : vector<2x256xf32> to vector<2x256xbf16>
    %c0_131 = arith.constant 0 : index
    %c0_132 = arith.constant 0 : index
    %145 = vector.load %arg18[%c0_131, %c0_132] : memref<256x128xbf16, #tpu.memory_space<vmem>>, vector<256x128xbf16>
    %cst_133 = arith.constant dense<0.000000e+00> : vector<2x128xf32>
    %146 = tpu.matmul %144, %145, %cst_133 {dimension_numbers = #tpu.dot_dimension_numbers<[1], [0], [0], [1], [0, 0, 1, 1], [], []>} : vector<2x256xbf16>, vector<256x128xbf16>, vector<2x128xf32> -> vector<2x128xf32>
    %c0_134 = arith.constant 0 : index
    %c0_135 = arith.constant 0 : index
    %147 = vector.load %arg19[%c0_134, %c0_135] : memref<1x128xf32, #tpu.memory_space<vmem>>, vector<1x128xf32>
    %148 = vector.broadcast %147 : vector<1x128xf32> to vector<2x128xf32>
    %149 = arith.addf %146, %148 : vector<2x128xf32>
    %cst_136 = arith.constant 0.000000e+00 : f32
    %150 = vector.broadcast %cst_136 : f32 to vector<2x128xf32>
    %151 = arith.maximumf %149, %150 : vector<2x128xf32>
    %152 = arith.truncf %151 : vector<2x128xf32> to vector<2x128xbf16>
    %c0_137 = arith.constant 0 : index
    %c0_138 = arith.constant 0 : index
    %153 = vector.load %arg20[%c0_137, %c0_138] : memref<128x10xbf16, #tpu.memory_space<vmem>>, vector<128x10xbf16>
    %cst_139 = arith.constant dense<0.000000e+00> : vector<2x10xf32>
    %154 = tpu.matmul %152, %153, %cst_139 {dimension_numbers = #tpu.dot_dimension_numbers<[1], [0], [0], [1], [0, 0, 1, 1], [], []>} : vector<2x128xbf16>, vector<128x10xbf16>, vector<2x10xf32> -> vector<2x10xf32>
    %c0_140 = arith.constant 0 : index
    %c0_141 = arith.constant 0 : index
    %155 = vector.load %arg21[%c0_140, %c0_141] : memref<1x10xf32, #tpu.memory_space<vmem>>, vector<1x10xf32>
    %156 = vector.broadcast %155 : vector<1x10xf32> to vector<2x10xf32>
    %157 = arith.addf %154, %156 : vector<2x10xf32>
    %c0_142 = arith.constant 0 : index
    %c0_143 = arith.constant 0 : index
    %158 = vector.load %arg22[%c0_142, %c0_143] : memref<2x10xf32, #tpu.memory_space<vmem>>, vector<2x10xf32>
    tpu.vector_store %arg22[%c0_142, %c0_143], %157 {strides = array<i32>} : memref<2x10xf32, #tpu.memory_space<vmem>>, vector<2x10xf32>,
    return
  }
}

</mosaic_0001>

<llo_original>
// kernel: forward.1
$region0: #{forward.1}
  #allocation0 [shape = 'u32[]', space=smem, size = 0x4, offset = 0x4, fixed_abs, tag = 'smem constant byte address 0x4 - core index']
  #allocation1 [shape = 'u32[144,128]{1,0:T(1,128)}', space=vmem, size = 0x12000, scoped, tag = 'internal scratch']
  %s0 = inlined_call_operand.vmem [shape: f32[16,24], index: 0, kind: input, shape index: {}]
  %s1 = inlined_call_operand.vmem [shape: bf16[3,16,16], index: 1, kind: input, shape index: {}]
  %s2 = inlined_call_operand.hbm [shape: bf16[3,24,128], index: 2, kind: input, shape index: {}]
  %s3 = inlined_call_operand.vmem [shape: f32[1,128], index: 3, kind: input, shape index: {}]
  %s4 = inlined_call_operand.hbm [shape: bf16[3,16,16], index: 4, kind: input, shape index: {}]
  %s5 = inlined_call_operand.hbm [shape: bf16[3,128,256], index: 5, kind: input, shape index: {}]
  %s6 = inlined_call_operand.hbm [shape: f32[1,256], index: 6, kind: input, shape index: {}]
  %s7 = inlined_call_operand.hbm [shape: bf16[8,16], index: 7, kind: input, shape index: {}]
  %s8 = inlined_call_operand.vmem [shape: bf16[256,128], index: 8, kind: input, shape index: {}]
  %s9 = inlined_call_operand.vmem [shape: bf16[3,8,8], index: 9, kind: input, shape index: {}]
  %s10 = inlined_call_operand.hbm [shape: bf16[3,128,256], index: 10, kind: input, shape index: {}]
  %s11 = inlined_call_operand.hbm [shape: f32[1,256], index: 11, kind: input, shape index: {}]
  %s12 = inlined_call_operand.hbm [shape: bf16[3,8,8], index: 12, kind: input, shape index: {}]
  %s13 = inlined_call_operand.hbm [shape: bf16[3,256,256], index: 13, kind: input, shape index: {}]
  %s14 = inlined_call_operand.vmem [shape: f32[1,256], index: 14, kind: input, shape index: {}]
  %s15 = inlined_call_operand.vmem [shape: bf16[2,2,8], index: 15, kind: input, shape index: {}]
  %s16 = inlined_call_operand.hbm [shape: bf16[2,256,256], index: 16, kind: input, shape index: {}]
  %s17 = inlined_call_operand.vmem [shape: f32[1,256], index: 17, kind: input, shape index: {}]
  %s18 = inlined_call_operand.vmem [shape: bf16[256,128], index: 18, kind: input, shape index: {}]
  %s19 = inlined_call_operand.vmem [shape: f32[1,128], index: 19, kind: input, shape index: {}]
  %s20 = inlined_call_operand.vmem [shape: bf16[128,10], index: 20, kind: input, shape index: {}]
  %s21 = inlined_call_operand.vmem [shape: f32[1,10], index: 21, kind: input, shape index: {}]
  %s22 = inlined_call_operand.hbm [shape: f32[2,10], index: 22, kind: output, shape index: {}]
  %s23 = sld [smem:[#allocation0]]
  $region138: #{forward.1} parent=0
    _
  %s25 = ssub.s32 1, %s23
  %s26 = scalar_select 0, %s25, %s23
  $region1: #{forward.1} parent=0
    #allocation2 [shape = 'u8[18432]{0}', space=vmem, size = 0x4800, scoped, tag = 'input window, operand 2, single buffered']
    #allocation3 [shape = 's32[1]{0}', space=sflag, size = 0x4, scoped, tag = 'scoped memory for forward.1']
    #allocation4 [shape = 's32[1]{0}', space=sflag, size = 0x4, scoped, tag = 'scoped memory for forward.1']
    #allocation5 [shape = 'u8[12288]{0}', space=vmem, size = 0x3000, scoped, tag = 'input window, operand 4, single buffered']
    #allocation6 [shape = 's32[1]{0}', space=sflag, size = 0x4, scoped, tag = 'scoped memory for forward.1']
    #allocation7 [shape = 'u8[196608]{0}', space=vmem, size = 0x30000, scoped, tag = 'input window, operand 5, single buffered']
    #allocation8 [shape = 'u8[1024]{0}', space=vmem, size = 0x400, scoped, tag = 'input window, operand 6, single buffered']
    #allocation9 [shape = 's32[1]{0}', space=sflag, size = 0x4, scoped, tag = 'scoped memory for forward.1']
    #allocation10 [shape = 'u8[2048]{0}', space=vmem, size = 0x800, scoped, tag = 'input window, operand 7, single buffered']
    #allocation11 [shape = 'u8[196608]{0}', space=vmem, size = 0x30000, scoped, tag = 'input window, operand 10, single buffered']
    #allocation12 [shape = 's32[1]{0}', space=sflag, size = 0x4, scoped, tag = 'scoped memory for forward.1']
    #allocation13 [shape = 'u8[1024]{0}', space=vmem, size = 0x400, scoped, tag = 'input window, operand 11, single buffered']
    #allocation14 [shape = 'u8[6144]{0}', space=vmem, size = 0x1800, scoped, tag = 'input window, operand 12, single buffered']
    #allocation15 [shape = 's32[1]{0}', space=sflag, size = 0x4, scoped, tag = 'scoped memory for forward.1']
    #allocation16 [shape = 'u8[393216]{0}', space=vmem, size = 0x60000, scoped, tag = 'input window, operand 13, single buffered']
    #allocation17 [shape = 'u8[262144]{0}', space=vmem, size = 0x40000, scoped, tag = 'input window, operand 16, single buffered']
    #allocation18 [shape = 's32[1]{0}', space=sflag, size = 0x4, scoped, tag = 'scoped memory for forward.1']
    #allocation19 [shape = 'u8[1024]{0}', space=vmem, size = 0x400, scoped, tag = 'output window, operand 0, single buffered']
    %27 = vsyncpa [#allocation3], 0
    %28 = vsyncpa [#allocation6], 0
    %29 = vsyncpa [#allocation9], 0
    %30 = vsyncpa [#allocation12], 0
    %31 = vsyncpa [#allocation15], 0
    %32 = vsyncpa [#allocation18], 0
    %33 = vsyncpa [#allocation4], 0
    // Predicated region
    $region2: #{forward.1} parent=1 // pred_check
      _
    $region3: #{forward.1} parent=1 // pred_check_branch
      %35 = sbr.rel (0) target = $region5
    $region4: #{forward.1} parent=1 // pred_region
      _
    $region5: #{forward.1} parent=1 // pred_fallthru
      _
    // Predicated region
    $region6: #{forward.1} parent=1 // pred_check
      _
    $region7: #{forward.1} parent=1 // pred_check_branch
      %37 = sbr.rel (0) target = $region9
    $region8: #{forward.1} parent=1 // pred_region
      _
    $region9: #{forward.1} parent=1 // pred_fallthru
      _
    // Predicated region
    $region10: #{forward.1} parent=1 // pred_check
      _
    $region11: #{forward.1} parent=1 // pred_check_branch
      %39 = sbr.rel (0) target = $region13
    $region12: #{forward.1} parent=1 // pred_region
      %s41 = ssub.s32 576, 576
      %42 = vsyncadd [#allocation3], %s41
      %s43 = sshll.u32 [#allocation2], 4
      %s44 = int_to_ptr.vmem [resolvable:$true] %s43
      %49 = dma.hbm_to_vmem [thread:$0]  %s2, 576, %s44, [#allocation3], 64, 64, 4
    $region13: #{forward.1} parent=1 // pred_fallthru
      _
    // Predicated region
    $region14: #{forward.1} parent=1 // pred_check
      _
    $region15: #{forward.1} parent=1 // pred_check_branch
      %51 = sbr.rel (0) target = $region17
    $region16: #{forward.1} parent=1 // pred_region
      _
    $region17: #{forward.1} parent=1 // pred_fallthru
      _
    // Predicated region
    $region18: #{forward.1} parent=1 // pred_check
      _
    $region19: #{forward.1} parent=1 // pred_check_branch
      %53 = sbr.rel (0) target = $region21
    $region20: #{forward.1} parent=1 // pred_region
      %s55 = ssub.s32 384, 384
      %56 = vsyncadd [#allocation6], %s55
      %s57 = sshll.u32 [#allocation5], 4
      %s58 = int_to_ptr.vmem [resolvable:$true] %s57
      %63 = dma.hbm_to_vmem [thread:$0]  %s4, 384, %s58, [#allocation6], 64, 64, 4
    $region21: #{forward.1} parent=1 // pred_fallthru
      _
    // Predicated region
    $region22: #{forward.1} parent=1 // pred_check
      _
    $region23: #{forward.1} parent=1 // pred_check_branch
      %65 = sbr.rel (0) target = $region25
    $region24: #{forward.1} parent=1 // pred_region
      %s67 = ssub.s32 6144, 6144
      %68 = vsyncadd [#allocation6], %s67
      %s69 = sshll.u32 [#allocation7], 4
      %s70 = int_to_ptr.vmem [resolvable:$true] %s69
      %75 = dma.hbm_to_vmem [thread:$0]  %s5, 6144, %s70, [#allocation6], 128, 128, 8
    $region25: #{forward.1} parent=1 // pred_fallthru
      _
    // Predicated region
    $region26: #{forward.1} parent=1 // pred_check
      _
    $region27: #{forward.1} parent=1 // pred_check_branch
      %77 = sbr.rel (0) target = $region29
    $region28: #{forward.1} parent=1 // pred_region
      %s79 = ssub.s32 32, 32
      %80 = vsyncadd [#allocation9], %s79
      %s82 = sshll.u32 [#allocation8], 4
      %s83 = int_to_ptr.vmem [resolvable:$true] %s82
      %85 = dma.hbm_to_vmem [thread:$0]  %s6, 32, %s83, [#allocation9]
    $region29: #{forward.1} parent=1 // pred_fallthru
      _
    // Predicated region
    $region30: #{forward.1} parent=1 // pred_check
      _
    $region31: #{forward.1} parent=1 // pred_check_branch
      %87 = sbr.rel (0) target = $region33
    $region32: #{forward.1} parent=1 // pred_region
      %s89 = ssub.s32 64, 64
      %90 = vsyncadd [#allocation9], %s89
      %s92 = sshll.u32 [#allocation10], 4
      %s93 = int_to_ptr.vmem [resolvable:$true] %s92
      %95 = dma.hbm_to_vmem [thread:$0]  %s7, 64, %s93, [#allocation9]
    $region33: #{forward.1} parent=1 // pred_fallthru
      _
    // Predicated region
    $region34: #{forward.1} parent=1 // pred_check
      _
    $region35: #{forward.1} parent=1 // pred_check_branch
      %97 = sbr.rel (0) target = $region37
    $region36: #{forward.1} parent=1 // pred_region
      _
    $region37: #{forward.1} parent=1 // pred_fallthru
      _
    // Predicated region
    $region38: #{forward.1} parent=1 // pred_check
      _
    $region39: #{forward.1} parent=1 // pred_check_branch
      %99 = sbr.rel (0) target = $region41
    $region40: #{forward.1} parent=1 // pred_region
      _
    $region41: #{forward.1} parent=1 // pred_fallthru
      _
    // Predicated region
    $region42: #{forward.1} parent=1 // pred_check
      _
    $region43: #{forward.1} parent=1 // pred_check_branch
      %101 = sbr.rel (0) target = $region45
    $region44: #{forward.1} parent=1 // pred_region
      %s103 = ssub.s32 6144, 6144
      %104 = vsyncadd [#allocation12], %s103
      %s105 = sshll.u32 [#allocation11], 4
      %s106 = int_to_ptr.vmem [resolvable:$true] %s105
      %111 = dma.hbm_to_vmem [thread:$0]  %s10, 6144, %s106, [#allocation12], 128, 128, 8
    $region45: #{forward.1} parent=1 // pred_fallthru
      _
    // Predicated region
    $region46: #{forward.1} parent=1 // pred_check
      _
    $region47: #{forward.1} parent=1 // pred_check_branch
      %113 = sbr.rel (0) target = $region49
    $region48: #{forward.1} parent=1 // pred_region
      %s115 = ssub.s32 32, 32
      %116 = vsyncadd [#allocation12], %s115
      %s118 = sshll.u32 [#allocation13], 4
      %s119 = int_to_ptr.vmem [resolvable:$true] %s118
      %121 = dma.hbm_to_vmem [thread:$0]  %s11, 32, %s119, [#allocation12]
    $region49: #{forward.1} parent=1 // pred_fallthru
      _
    // Predicated region
    $region50: #{forward.1} parent=1 // pred_check
      _
    $region51: #{forward.1} parent=1 // pred_check_branch
      %123 = sbr.rel (0) target = $region53
    $region52: #{forward.1} parent=1 // pred_region
      %s125 = ssub.s32 192, 192
      %126 = vsyncadd [#allocation15], %s125
      %s127 = sshll.u32 [#allocation14], 4
      %s128 = int_to_ptr.vmem [resolvable:$true] %s127
      %133 = dma.hbm_to_vmem [thread:$0]  %s12, 192, %s128, [#allocation15], 64, 64, 4
    $region53: #{forward.1} parent=1 // pred_fallthru
      _
    // Predicated region
    $region54: #{forward.1} parent=1 // pred_check
      _
    $region55: #{forward.1} parent=1 // pred_check_branch
      %135 = sbr.rel (0) target = $region57
    $region56: #{forward.1} parent=1 // pred_region
      %s137 = ssub.s32 12288, 12288
      %138 = vsyncadd [#allocation15], %s137
      %s139 = sshll.u32 [#allocation16], 4
      %s140 = int_to_ptr.vmem [resolvable:$true] %s139
      %145 = dma.hbm_to_vmem [thread:$0]  %s13, 12288, %s140, [#allocation15], 128, 128, 8
    $region57: #{forward.1} parent=1 // pred_fallthru
      _
    // Predicated region
    $region58: #{forward.1} parent=1 // pred_check
      _
    $region59: #{forward.1} parent=1 // pred_check_branch
      %147 = sbr.rel (0) target = $region61
    $region60: #{forward.1} parent=1 // pred_region
      _
    $region61: #{forward.1} parent=1 // pred_fallthru
      _
    // Predicated region
    $region62: #{forward.1} parent=1 // pred_check
      _
    $region63: #{forward.1} parent=1 // pred_check_branch
      %149 = sbr.rel (0) target = $region65
    $region64: #{forward.1} parent=1 // pred_region
      _
    $region65: #{forward.1} parent=1 // pred_fallthru
      _
    // Predicated region
    $region66: #{forward.1} parent=1 // pred_check
      _
    $region67: #{forward.1} parent=1 // pred_check_branch
      %151 = sbr.rel (0) target = $region69
    $region68: #{forward.1} parent=1 // pred_region
      %s153 = ssub.s32 8192, 8192
      %154 = vsyncadd [#allocation18], %s153
      %s155 = sshll.u32 [#allocation17], 4
      %s156 = int_to_ptr.vmem [resolvable:$true] %s155
      %161 = dma.hbm_to_vmem [thread:$0]  %s16, 8192, %s156, [#allocation18], 128, 128, 8
    $region69: #{forward.1} parent=1 // pred_fallthru
      _
    // Predicated region
    $region70: #{forward.1} parent=1 // pred_check
      _
    $region71: #{forward.1} parent=1 // pred_check_branch
      %163 = sbr.rel (0) target = $region73
    $region72: #{forward.1} parent=1 // pred_region
      _
    $region73: #{forward.1} parent=1 // pred_fallthru
      _
    // Predicated region
    $region74: #{forward.1} parent=1 // pred_check
      _
    $region75: #{forward.1} parent=1 // pred_check_branch
      %165 = sbr.rel (0) target = $region77
    $region76: #{forward.1} parent=1 // pred_region
      _
    $region77: #{forward.1} parent=1 // pred_fallthru
      _
    // Predicated region
    $region78: #{forward.1} parent=1 // pred_check
      _
    $region79: #{forward.1} parent=1 // pred_check_branch
      %167 = sbr.rel (0) target = $region81
    $region80: #{forward.1} parent=1 // pred_region
      _
    $region81: #{forward.1} parent=1 // pred_fallthru
      _
    // Predicated region
    $region82: #{forward.1} parent=1 // pred_check
      _
    $region83: #{forward.1} parent=1 // pred_check_branch
      %169 = sbr.rel (0) target = $region85
    $region84: #{forward.1} parent=1 // pred_region
      _
    $region85: #{forward.1} parent=1 // pred_fallthru
      _
    // Predicated region
    $region86: #{forward.1} parent=1 // pred_check
      _
    $region87: #{forward.1} parent=1 // pred_check_branch
      %171 = sbr.rel (0) target = $region89
    $region88: #{forward.1} parent=1 // pred_region
      _
    $region89: #{forward.1} parent=1 // pred_fallthru
      _
    // Predicated region
    $region90: #{forward.1} parent=1 // pred_check
      _
    $region91: #{forward.1} parent=1 // pred_check_branch
      %173 = sbr.rel (0) target = $region93
    $region92: #{forward.1} parent=1 // pred_region
      %174 = dma.done [#allocation3], 576
    $region93: #{forward.1} parent=1 // pred_fallthru
      _
    // Predicated region
    $region94: #{forward.1} parent=1 // pred_check
      _
    $region95: #{forward.1} parent=1 // pred_check_branch
      %176 = sbr.rel (0) target = $region97
    $region96: #{forward.1} parent=1 // pred_region
      %177 = dma.done [#allocation6], 384
    $region97: #{forward.1} parent=1 // pred_fallthru
      _
    // Predicated region
    $region98: #{forward.1} parent=1 // pred_check
      _
    $region99: #{forward.1} parent=1 // pred_check_branch
      %179 = sbr.rel (0) target = $region101
    $region100: #{forward.1} parent=1 // pred_region
      %180 = dma.done [#allocation6], 6144
    $region101: #{forward.1} parent=1 // pred_fallthru
      _
    // Predicated region
    $region102: #{forward.1} parent=1 // pred_check
      _
    $region103: #{forward.1} parent=1 // pred_check_branch
      %182 = sbr.rel (0) target = $region105
    $region104: #{forward.1} parent=1 // pred_region
      %183 = dma.done [#allocation9], 32
    $region105: #{forward.1} parent=1 // pred_fallthru
      _
    // Predicated region
    $region106: #{forward.1} parent=1 // pred_check
      _
    $region107: #{forward.1} parent=1 // pred_check_branch
      %185 = sbr.rel (0) target = $region109
    $region108: #{forward.1} parent=1 // pred_region
      %186 = dma.done [#allocation9], 64
    $region109: #{forward.1} parent=1 // pred_fallthru
      _
    // Predicated region
    $region110: #{forward.1} parent=1 // pred_check
      _
    $region111: #{forward.1} parent=1 // pred_check_branch
      %188 = sbr.rel (0) target = $region113
    $region112: #{forward.1} parent=1 // pred_region
      %189 = dma.done [#allocation12], 6144
    $region113: #{forward.1} parent=1 // pred_fallthru
      _
    // Predicated region
    $region114: #{forward.1} parent=1 // pred_check
      _
    $region115: #{forward.1} parent=1 // pred_check_branch
      %191 = sbr.rel (0) target = $region117
    $region116: #{forward.1} parent=1 // pred_region
      %192 = dma.done [#allocation12], 32
    $region117: #{forward.1} parent=1 // pred_fallthru
      _
    // Predicated region
    $region118: #{forward.1} parent=1 // pred_check
      _
    $region119: #{forward.1} parent=1 // pred_check_branch
      %194 = sbr.rel (0) target = $region121
    $region120: #{forward.1} parent=1 // pred_region
      %195 = dma.done [#allocation15], 192
    $region121: #{forward.1} parent=1 // pred_fallthru
      _
    // Predicated region
    $region122: #{forward.1} parent=1 // pred_check
      _
    $region123: #{forward.1} parent=1 // pred_check_branch
      %197 = sbr.rel (0) target = $region125
    $region124: #{forward.1} parent=1 // pred_region
      %198 = dma.done [#allocation15], 12288
    $region125: #{forward.1} parent=1 // pred_fallthru
      _
    // Predicated region
    $region126: #{forward.1} parent=1 // pred_check
      _
    $region127: #{forward.1} parent=1 // pred_check_branch
      %200 = sbr.rel (0) target = $region129
    $region128: #{forward.1} parent=1 // pred_region
      %201 = dma.done [#allocation18], 8192
    $region129: #{forward.1} parent=1 // pred_fallthru
      _
    %v203 = vld [vmem:[%s0] sm:$0xff]
    %v204 = vld [vmem:[%s0 + $0x8] sm:$0xff]
    %v205 = vpack.c.bf16 %v204, %v203
    %v206 = vld [vmem:[%s3] sm:$0x1]
    %v207 = vld [vmem:[%s1] sm:$0xf]
    %v208 = vld [vmem:[%s1 + $0x4] sm:$0xf]
    %v211 = vunpack.c.l.b16 %v207
    %v212 = vunpack.c.l.b16 %v208
    %v213 = vpack.c.b16 %v212, %v211
    %vm214 = vcmask 130048
    %v216 = vsel %vm214, %v213, 0
    %218 = vmatprep.subr.bf16.mxu0 0
    %219 = vmatpush1.bf16.msra.mxu0 0
    %220 = vmatprep.subr.bf16.mxu0 0
    %221 = vmatpush1.bf16.msra.mxu0 0
    %222 = vmatprep.subr.bf16.mxu0 0
    %223 = vmatpush1.bf16.msra.mxu0 0
    %224 = vmatprep.subr.bf16.mxu0 0
    %225 = vmatpush1.bf16.msra.mxu0 0
    %226 = vmatprep.subr.bf16.mxu0 0
    %227 = vmatpush1.bf16.msra.mxu0 0
    %228 = vmatprep.subr.bf16.mxu0 0
    %229 = vmatpush1.bf16.msra.mxu0 0
    %230 = vmatprep.subr.bf16.mxu0 0
    %231 = vmatpush1.bf16.msra.mxu0 0
    %232 = vmatprep.subr.bf16.mxu0 0
    %233 = vmatpush1.bf16.msra.mxu0 %v205
    %234 = vmatprep.subr.bf16.mxu0 0
    %235 = vmatpush2.bf16.msra.mxu0 0
    %236 = vmatprep.subr.bf16.mxu0 0
    %237 = vmatpush2.bf16.msra.mxu0 0
    %238 = vmatprep.subr.bf16.mxu0 0
    %239 = vmatpush2.bf16.msra.mxu0 0
    %240 = vmatprep.subr.bf16.mxu0 0
    %241 = vmatpush2.bf16.msra.mxu0 0
    %242 = vmatprep.subr.bf16.mxu0 0
    %243 = vmatpush2.bf16.msra.mxu0 0
    %244 = vmatprep.subr.bf16.mxu0 0
    %245 = vmatpush2.bf16.msra.mxu0 0
    %246 = vmatprep.subr.bf16.mxu0 0
    %247 = vmatpush2.bf16.msra.mxu0 0
    %248 = vmatprep.subr.bf16.mxu0 0
    %249 = vmatpush2.bf16.msra.mxu0 0
    %250 = vmatprep.mubr.bf16.mxu0 0
    %251 = vmatmul.mubr.bf16.gmra.mxu0 %v216
    %v252 = vpop.f32.mrf.mxu0
    %v253 = vadd.f32 0.0, %v252
    %v254 = vpop.f32.mrf.mxu0
    %v255 = vpop.f32.mrf.mxu0
    %v256 = vadd.f32 0.0, %v255
    %v257 = vpop.f32.mrf.mxu0
    %258 = vdwg.mxu0
    %v259 = vpack.c.bf16 %v256, %v253
    %v260 = vld [vmem:[#allocation2] sm:$0xf]
    %v261 = vld [vmem:[#allocation2 + $0x4] sm:$0xf]
    %v262 = vld [vmem:[#allocation2 + $0x8] sm:$0xf]
    %v266 = vunpack.c.l.b16 %v260
    %v267 = vunpack.c.l.b16 %v261
    %v268 = vunpack.c.l.b16 %v262
    %v269 = vpack.c.b16 %v267, %v266
    %v270 = vpack.c.b16 %v268, %v268
    %vm272 = vcmask 195584
    %v274 = vsel %vm272, %v259, 0
    %vm276 = vcmask 1043456
    %v278 = vsel %vm276, %v270, 0
    %280 = vmatprep.subr.bf16.mxu0 0
    %281 = vmatpush1.bf16.msra.mxu0 0
    %282 = vmatprep.subr.bf16.mxu0 0
    %283 = vmatpush1.bf16.msra.mxu0 0
    %284 = vmatprep.subr.bf16.mxu0 0
    %285 = vmatpush1.bf16.msra.mxu0 0
    %286 = vmatprep.subr.bf16.mxu0 0
    %287 = vmatpush1.bf16.msra.mxu0 0
    %288 = vmatprep.subr.bf16.mxu0 0
    %289 = vmatpush1.bf16.msra.mxu0 0
    %290 = vmatprep.subr.bf16.mxu0 0
    %291 = vmatpush1.bf16.msra.mxu0 0
    %292 = vmatprep.subr.bf16.mxu0 0
    %293 = vmatpush1.bf16.msra.mxu0 %v278
    %294 = vmatprep.subr.bf16.mxu0 0
    %295 = vmatpush1.bf16.msra.mxu0 %v269
    %296 = vmatprep.subr.bf16.mxu0 0
    %297 = vmatpush2.bf16.msra.mxu0 0
    %298 = vmatprep.subr.bf16.mxu0 0
    %299 = vmatpush2.bf16.msra.mxu0 0
    %300 = vmatprep.subr.bf16.mxu0 0
    %301 = vmatpush2.bf16.msra.mxu0 0
    %302 = vmatprep.subr.bf16.mxu0 0
    %303 = vmatpush2.bf16.msra.mxu0 0
    %304 = vmatprep.subr.bf16.mxu0 0
    %305 = vmatpush2.bf16.msra.mxu0 0
    %306 = vmatprep.subr.bf16.mxu0 0
    %307 = vmatpush2.bf16.msra.mxu0 0
    %308 = vmatprep.subr.bf16.mxu0 0
    %309 = vmatpush2.bf16.msra.mxu0 0
    %310 = vmatprep.subr.bf16.mxu0 0
    %311 = vmatpush2.bf16.msra.mxu0 0
    %312 = vmatprep.mubr.bf16.mxu0 0
    %313 = vmatmul.mubr.bf16.gmra.mxu0 %v274
    %v314 = vpop.f32.mrf.mxu0
    %v315 = vadd.f32 0.0, %v314
    %v316 = vpop.f32.mrf.mxu0
    %v317 = vpop.f32.mrf.mxu0
    %v318 = vadd.f32 0.0, %v317
    %v319 = vpop.f32.mrf.mxu0
    %320 = vdwg.mxu0
    %v322 = vlaneseq
    %v323 = vshrl.u32 %v322, 7
    %v324 = vsub.s32 0, %v323
    %v325 = vrot.slane %v206, %v324
    %v327 = vadd.f32 %v325, %v315
    %v328 = vadd.f32 %v325, %v318
    %s329 = scalar_lea.vmem %s1, 8
    %v330 = vld [vmem:[%s329] sm:$0xf]
    %v331 = vld [vmem:[%s329 + $0x4] sm:$0xf]
    %v334 = vunpack.c.l.b16 %v330
    %v335 = vunpack.c.l.b16 %v331
    %v336 = vpack.c.b16 %v335, %v334
    %v338 = vsel %vm214, %v336, 0
    %340 = vmatprep.subr.bf16.mxu0 0
    %341 = vmatpush1.bf16.msra.mxu0 0
    %342 = vmatprep.subr.bf16.mxu0 0
    %343 = vmatpush1.bf16.msra.mxu0 0
    %344 = vmatprep.subr.bf16.mxu0 0
    %345 = vmatpush1.bf16.msra.mxu0 0
    %346 = vmatprep.subr.bf16.mxu0 0
    %347 = vmatpush1.bf16.msra.mxu0 0
    %348 = vmatprep.subr.bf16.mxu0 0
    %349 = vmatpush1.bf16.msra.mxu0 0
    %350 = vmatprep.subr.bf16.mxu0 0
    %351 = vmatpush1.bf16.msra.mxu0 0
    %352 = vmatprep.subr.bf16.mxu0 0
    %353 = vmatpush1.bf16.msra.mxu0 0
    %354 = vmatprep.subr.bf16.mxu0 0
    %355 = vmatpush1.bf16.msra.mxu0 %v205
    %356 = vmatprep.subr.bf16.mxu0 0
    %357 = vmatpush2.bf16.msra.mxu0 0
    %358 = vmatprep.subr.bf16.mxu0 0
    %359 = vmatpush2.bf16.msra.mxu0 0
    %360 = vmatprep.subr.bf16.mxu0 0
    %361 = vmatpush2.bf16.msra.mxu0 0
    %362 = vmatprep.subr.bf16.mxu0 0
    %363 = vmatpush2.bf16.msra.mxu0 0
    %364 = vmatprep.subr.bf16.mxu0 0
    %365 = vmatpush2.bf16.msra.mxu0 0
    %366 = vmatprep.subr.bf16.mxu0 0
    %367 = vmatpush2.bf16.msra.mxu0 0
    %368 = vmatprep.subr.bf16.mxu0 0
    %369 = vmatpush2.bf16.msra.mxu0 0
    %370 = vmatprep.subr.bf16.mxu0 0
    %371 = vmatpush2.bf16.msra.mxu0 0
    %372 = vmatprep.mubr.bf16.mxu0 0
    %373 = vmatmul.mubr.bf16.gmra.mxu0 %v338
    %v374 = vpop.f32.mrf.mxu0
    %v375 = vadd.f32 0.0, %v374
    %v376 = vpop.f32.mrf.mxu0
    %v377 = vpop.f32.mrf.mxu0
    %v378 = vadd.f32 0.0, %v377
    %v379 = vpop.f32.mrf.mxu0
    %380 = vdwg.mxu0
    %v381 = vpack.c.bf16 %v378, %v375
    %s382 = scalar_lea.vmem [#allocation2], 12
    %v383 = vld [vmem:[%s382] sm:$0xf]
    %v384 = vld [vmem:[%s382 + $0x4] sm:$0xf]
    %v385 = vld [vmem:[%s382 + $0x8] sm:$0xf]
    %v389 = vunpack.c.l.b16 %v383
    %v390 = vunpack.c.l.b16 %v384
    %v391 = vunpack.c.l.b16 %v385
    %v392 = vpack.c.b16 %v390, %v389
    %v393 = vpack.c.b16 %v391, %v391
    %v396 = vsel %vm272, %v381, 0
    %v399 = vsel %vm276, %v393, 0
    %401 = vmatprep.subr.bf16.mxu0 0
    %402 = vmatpush1.bf16.msra.mxu0 0
    %403 = vmatprep.subr.bf16.mxu0 0
    %404 = vmatpush1.bf16.msra.mxu0 0
    %405 = vmatprep.subr.bf16.mxu0 0
    %406 = vmatpush1.bf16.msra.mxu0 0
    %407 = vmatprep.subr.bf16.mxu0 0
    %408 = vmatpush1.bf16.msra.mxu0 0
    %409 = vmatprep.subr.bf16.mxu0 0
    %410 = vmatpush1.bf16.msra.mxu0 0
    %411 = vmatprep.subr.bf16.mxu0 0
    %412 = vmatpush1.bf16.msra.mxu0 0
    %413 = vmatprep.subr.bf16.mxu0 0
    %414 = vmatpush1.bf16.msra.mxu0 %v399
    %415 = vmatprep.subr.bf16.mxu0 0
    %416 = vmatpush1.bf16.msra.mxu0 %v392
    %417 = vmatprep.subr.bf16.mxu0 0
    %418 = vmatpush2.bf16.msra.mxu0 0
    %419 = vmatprep.subr.bf16.mxu0 0
    %420 = vmatpush2.bf16.msra.mxu0 0
    %421 = vmatprep.subr.bf16.mxu0 0
    %422 = vmatpush2.bf16.msra.mxu0 0
    %423 = vmatprep.subr.bf16.mxu0 0
    %424 = vmatpush2.bf16.msra.mxu0 0
    %425 = vmatprep.subr.bf16.mxu0 0
    %426 = vmatpush2.bf16.msra.mxu0 0
    %427 = vmatprep.subr.bf16.mxu0 0
    %428 = vmatpush2.bf16.msra.mxu0 0
    %429 = vmatprep.subr.bf16.mxu0 0
    %430 = vmatpush2.bf16.msra.mxu0 0
    %431 = vmatprep.subr.bf16.mxu0 0
    %432 = vmatpush2.bf16.msra.mxu0 0
    %433 = vmatprep.mubr.bf16.mxu0 0
    %434 = vmatmul.mubr.bf16.gmra.mxu0 %v396
    %v435 = vpop.f32.mrf.mxu0
    %v436 = vadd.f32 0.0, %v435
    %v437 = vpop.f32.mrf.mxu0
    %v438 = vpop.f32.mrf.mxu0
    %v439 = vadd.f32 0.0, %v438
    %v440 = vpop.f32.mrf.mxu0
    %441 = vdwg.mxu0
    %v442 = vadd.f32 %v327, %v436
    %v443 = vadd.f32 %v328, %v439
    %s444 = scalar_lea.vmem %s1, 16
    %v445 = vld [vmem:[%s444] sm:$0xf]
    %v446 = vld [vmem:[%s444 + $0x4] sm:$0xf]
    %v449 = vunpack.c.l.b16 %v445
    %v450 = vunpack.c.l.b16 %v446
    %v451 = vpack.c.b16 %v450, %v449
    %v453 = vsel %vm214, %v451, 0
    %455 = vmatprep.subr.bf16.mxu0 0
    %456 = vmatpush1.bf16.msra.mxu0 0
    %457 = vmatprep.subr.bf16.mxu0 0
    %458 = vmatpush1.bf16.msra.mxu0 0
    %459 = vmatprep.subr.bf16.mxu0 0
    %460 = vmatpush1.bf16.msra.mxu0 0
    %461 = vmatprep.subr.bf16.mxu0 0
    %462 = vmatpush1.bf16.msra.mxu0 0
    %463 = vmatprep.subr.bf16.mxu0 0
    %464 = vmatpush1.bf16.msra.mxu0 0
    %465 = vmatprep.subr.bf16.mxu0 0
    %466 = vmatpush1.bf16.msra.mxu0 0
    %467 = vmatprep.subr.bf16.mxu0 0
    %468 = vmatpush1.bf16.msra.mxu0 0
    %469 = vmatprep.subr.bf16.mxu0 0
    %470 = vmatpush1.bf16.msra.mxu0 %v205
    %471 = vmatprep.subr.bf16.mxu0 0
    %472 = vmatpush2.bf16.msra.mxu0 0
    %473 = vmatprep.subr.bf16.mxu0 0
    %474 = vmatpush2.bf16.msra.mxu0 0
    %475 = vmatprep.subr.bf16.mxu0 0
    %476 = vmatpush2.bf16.msra.mxu0 0
    %477 = vmatprep.subr.bf16.mxu0 0
    %478 = vmatpush2.bf16.msra.mxu0 0
    %479 = vmatprep.subr.bf16.mxu0 0
    %480 = vmatpush2.bf16.msra.mxu0 0
    %481 = vmatprep.subr.bf16.mxu0 0
    %482 = vmatpush2.bf16.msra.mxu0 0
    %483 = vmatprep.subr.bf16.mxu0 0
    %484 = vmatpush2.bf16.msra.mxu0 0
    %485 = vmatprep.subr.bf16.mxu0 0
    %486 = vmatpush2.bf16.msra.mxu0 0
    %487 = vmatprep.mubr.bf16.mxu0 0
    %488 = vmatmul.mubr.bf16.gmra.mxu0 %v453
    %v489 = vpop.f32.mrf.mxu0
    %v490 = vadd.f32 0.0, %v489
    %v491 = vpop.f32.mrf.mxu0
    %v492 = vpop.f32.mrf.mxu0
    %v493 = vadd.f32 0.0, %v492
    %v494 = vpop.f32.mrf.mxu0
    %495 = vdwg.mxu0
    %v496 = vpack.c.bf16 %v493, %v490
    %s497 = scalar_lea.vmem [#allocation2], 24
    %v498 = vld [vmem:[%s497] sm:$0xf]
    %v499 = vld [vmem:[%s497 + $0x4] sm:$0xf]
    %v500 = vld [vmem:[%s497 + $0x8] sm:$0xf]
    %v504 = vunpack.c.l.b16 %v498
    %v505 = vunpack.c.l.b16 %v499
    %v506 = vunpack.c.l.b16 %v500
    %v507 = vpack.c.b16 %v505, %v504
    %v508 = vpack.c.b16 %v506, %v506
    %v511 = vsel %vm272, %v496, 0
    %v514 = vsel %vm276, %v508, 0
    %516 = vmatprep.subr.bf16.mxu0 0
    %517 = vmatpush1.bf16.msra.mxu0 0
    %518 = vmatprep.subr.bf16.mxu0 0
    %519 = vmatpush1.bf16.msra.mxu0 0
    %520 = vmatprep.subr.bf16.mxu0 0
    %521 = vmatpush1.bf16.msra.mxu0 0
    %522 = vmatprep.subr.bf16.mxu0 0
    %523 = vmatpush1.bf16.msra.mxu0 0
    %524 = vmatprep.subr.bf16.mxu0 0
    %525 = vmatpush1.bf16.msra.mxu0 0
    %526 = vmatprep.subr.bf16.mxu0 0
    %527 = vmatpush1.bf16.msra.mxu0 0
    %528 = vmatprep.subr.bf16.mxu0 0
    %529 = vmatpush1.bf16.msra.mxu0 %v514
    %530 = vmatprep.subr.bf16.mxu0 0
    %531 = vmatpush1.bf16.msra.mxu0 %v507
    %532 = vmatprep.subr.bf16.mxu0 0
    %533 = vmatpush2.bf16.msra.mxu0 0
    %534 = vmatprep.subr.bf16.mxu0 0
    %535 = vmatpush2.bf16.msra.mxu0 0
    %536 = vmatprep.subr.bf16.mxu0 0
    %537 = vmatpush2.bf16.msra.mxu0 0
    %538 = vmatprep.subr.bf16.mxu0 0
    %539 = vmatpush2.bf16.msra.mxu0 0
    %540 = vmatprep.subr.bf16.mxu0 0
    %541 = vmatpush2.bf16.msra.mxu0 0
    %542 = vmatprep.subr.bf16.mxu0 0
    %543 = vmatpush2.bf16.msra.mxu0 0
    %544 = vmatprep.subr.bf16.mxu0 0
    %545 = vmatpush2.bf16.msra.mxu0 0
    %546 = vmatprep.subr.bf16.mxu0 0
    %547 = vmatpush2.bf16.msra.mxu0 0
    %548 = vmatprep.mubr.bf16.mxu0 0
    %549 = vmatmul.mubr.bf16.gmra.mxu0 %v511
    %v550 = vpop.f32.mrf.mxu0
    %v551 = vadd.f32 0.0, %v550
    %v552 = vpop.f32.mrf.mxu0
    %v553 = vpop.f32.mrf.mxu0
    %v554 = vadd.f32 0.0, %v553
    %v555 = vpop.f32.mrf.mxu0
    %556 = vdwg.mxu0
    %v557 = vadd.f32 %v442, %v551
    %v558 = vadd.f32 %v443, %v554
    %v559 = vmax.f32 %v557, 0.0
    %v560 = vmax.f32 %v558, 0.0
    %v561 = vpack.c.bf16 %v560, %v559
    %v562 = vld [vmem:[#allocation8] sm:$0x3]
    %v563 = vld [vmem:[#allocation5] sm:$0xf]
    %v564 = vld [vmem:[#allocation5 + $0x4] sm:$0xf]
    %v567 = vunpack.c.l.b16 %v563
    %v568 = vunpack.c.l.b16 %v564
    %v569 = vpack.c.b16 %v568, %v567
    %v571 = vsel %vm214, %v569, 0
    %573 = vmatprep.subr.bf16.mxu0 0
    %574 = vmatpush1.bf16.msra.mxu0 0
    %575 = vmatprep.subr.bf16.mxu0 0
    %576 = vmatpush1.bf16.msra.mxu0 0
    %577 = vmatprep.subr.bf16.mxu0 0
    %578 = vmatpush1.bf16.msra.mxu0 0
    %579 = vmatprep.subr.bf16.mxu0 0
    %580 = vmatpush1.bf16.msra.mxu0 0
    %581 = vmatprep.subr.bf16.mxu0 0
    %582 = vmatpush1.bf16.msra.mxu0 0
    %583 = vmatprep.subr.bf16.mxu0 0
    %584 = vmatpush1.bf16.msra.mxu0 0
    %585 = vmatprep.subr.bf16.mxu0 0
    %586 = vmatpush1.bf16.msra.mxu0 0
    %587 = vmatprep.subr.bf16.mxu0 0
    %588 = vmatpush1.bf16.msra.mxu0 %v561
    %589 = vmatprep.subr.bf16.mxu0 0
    %590 = vmatpush2.bf16.msra.mxu0 0
    %591 = vmatprep.subr.bf16.mxu0 0
    %592 = vmatpush2.bf16.msra.mxu0 0
    %593 = vmatprep.subr.bf16.mxu0 0
    %594 = vmatpush2.bf16.msra.mxu0 0
    %595 = vmatprep.subr.bf16.mxu0 0
    %596 = vmatpush2.bf16.msra.mxu0 0
    %597 = vmatprep.subr.bf16.mxu0 0
    %598 = vmatpush2.bf16.msra.mxu0 0
    %599 = vmatprep.subr.bf16.mxu0 0
    %600 = vmatpush2.bf16.msra.mxu0 0
    %601 = vmatprep.subr.bf16.mxu0 0
    %602 = vmatpush2.bf16.msra.mxu0 0
    %603 = vmatprep.subr.bf16.mxu0 0
    %604 = vmatpush2.bf16.msra.mxu0 0
    %605 = vmatprep.mubr.bf16.mxu0 0
    %606 = vmatmul.mubr.bf16.gmra.mxu0 %v571
    %v607 = vpop.f32.mrf.mxu0
    %v608 = vadd.f32 0.0, %v607
    %v609 = vpop.f32.mrf.mxu0
    %v610 = vpop.f32.mrf.mxu0
    %v611 = vadd.f32 0.0, %v610
    %v612 = vpop.f32.mrf.mxu0
    %613 = vdwg.mxu0
    %v614 = vpack.c.bf16 %v611, %v608
    %v615 = vld [vmem:[#allocation7] sm:$0xff]
    %v616 = vld [vmem:[#allocation7 + $0x8] sm:$0xff]
    %v617 = vld [vmem:[#allocation7 + $0x10] sm:$0xff]
    %v618 = vld [vmem:[#allocation7 + $0x18] sm:$0xff]
    %v619 = vld [vmem:[#allocation7 + $0x20] sm:$0xff]
    %v620 = vld [vmem:[#allocation7 + $0x28] sm:$0xff]
    %v621 = vld [vmem:[#allocation7 + $0x30] sm:$0xff]
    %v622 = vld [vmem:[#allocation7 + $0x38] sm:$0xff]
    %v623 = vld [vmem:[#allocation7 + $0x40] sm:$0xff]
    %v624 = vld [vmem:[#allocation7 + $0x48] sm:$0xff]
    %v625 = vld [vmem:[#allocation7 + $0x50] sm:$0xff]
    %v626 = vld [vmem:[#allocation7 + $0x58] sm:$0xff]
    %v627 = vld [vmem:[#allocation7 + $0x60] sm:$0xff]
    %v628 = vld [vmem:[#allocation7 + $0x68] sm:$0xff]
    %v629 = vld [vmem:[#allocation7 + $0x70] sm:$0xff]
    %v630 = vld [vmem:[#allocation7 + $0x78] sm:$0xff]
    %v647 = vunpack.c.l.b16 %v615
    %v648 = vunpack.c.h.b16 %v615
    %v649 = vunpack.c.l.b16 %v616
    %v650 = vunpack.c.h.b16 %v616
    %v651 = vunpack.c.l.b16 %v617
    %v652 = vunpack.c.h.b16 %v617
    %v653 = vunpack.c.l.b16 %v618
    %v654 = vunpack.c.h.b16 %v618
    %v655 = vunpack.c.l.b16 %v619
    %v656 = vunpack.c.h.b16 %v619
    %v657 = vunpack.c.l.b16 %v620
    %v658 = vunpack.c.h.b16 %v620
    %v659 = vunpack.c.l.b16 %v621
    %v660 = vunpack.c.h.b16 %v621
    %v661 = vunpack.c.l.b16 %v622
    %v662 = vunpack.c.h.b16 %v622
    %v663 = vunpack.c.l.b16 %v623
    %v664 = vunpack.c.h.b16 %v623
    %v665 = vunpack.c.l.b16 %v624
    %v666 = vunpack.c.h.b16 %v624
    %v667 = vunpack.c.l.b16 %v625
    %v668 = vunpack.c.h.b16 %v625
    %v669 = vunpack.c.l.b16 %v626
    %v670 = vunpack.c.h.b16 %v626
    %v671 = vunpack.c.l.b16 %v627
    %v672 = vunpack.c.h.b16 %v627
    %v673 = vunpack.c.l.b16 %v628
    %v674 = vunpack.c.h.b16 %v628
    %v675 = vunpack.c.l.b16 %v629
    %v676 = vunpack.c.h.b16 %v629
    %v677 = vunpack.c.l.b16 %v630
    %v678 = vunpack.c.h.b16 %v630
    %v679 = vpack.c.b16 %v649, %v647
    %v680 = vpack.c.b16 %v650, %v648
    %v681 = vpack.c.b16 %v653, %v651
    %v682 = vpack.c.b16 %v654, %v652
    %v683 = vpack.c.b16 %v657, %v655
    %v684 = vpack.c.b16 %v658, %v656
    %v685 = vpack.c.b16 %v661, %v659
    %v686 = vpack.c.b16 %v662, %v660
    %v687 = vpack.c.b16 %v665, %v663
    %v688 = vpack.c.b16 %v666, %v664
    %v689 = vpack.c.b16 %v669, %v667
    %v690 = vpack.c.b16 %v670, %v668
    %v691 = vpack.c.b16 %v673, %v671
    %v692 = vpack.c.b16 %v674, %v672
    %v693 = vpack.c.b16 %v677, %v675
    %v694 = vpack.c.b16 %v678, %v676
    %711 = vmatprep.subr.bf16.mxu0 %v694
    %712 = vmatpush1.bf16.msra.mxu0 %v693
    %713 = vmatprep.subr.bf16.mxu0 %v692
    %714 = vmatpush1.bf16.msra.mxu0 %v691
    %715 = vmatprep.subr.bf16.mxu0 %v690
    %716 = vmatpush1.bf16.msra.mxu0 %v689
    %717 = vmatprep.subr.bf16.mxu0 %v688
    %718 = vmatpush1.bf16.msra.mxu0 %v687
    %719 = vmatprep.subr.bf16.mxu0 %v686
    %720 = vmatpush1.bf16.msra.mxu0 %v685
    %721 = vmatprep.subr.bf16.mxu0 %v684
    %722 = vmatpush1.bf16.msra.mxu0 %v683
    %723 = vmatprep.subr.bf16.mxu0 %v682
    %724 = vmatpush1.bf16.msra.mxu0 %v681
    %725 = vmatprep.subr.bf16.mxu0 %v680
    %726 = vmatpush1.bf16.msra.mxu0 %v679
    %727 = vmatprep.subr.bf16.mxu0 0
    %728 = vmatpush2.bf16.msra.mxu0 0
    %729 = vmatprep.subr.bf16.mxu0 0
    %730 = vmatpush2.bf16.msra.mxu0 0
    %731 = vmatprep.subr.bf16.mxu0 0
    %732 = vmatpush2.bf16.msra.mxu0 0
    %733 = vmatprep.subr.bf16.mxu0 0
    %734 = vmatpush2.bf16.msra.mxu0 0
    %735 = vmatprep.subr.bf16.mxu0 0
    %736 = vmatpush2.bf16.msra.mxu0 0
    %737 = vmatprep.subr.bf16.mxu0 0
    %738 = vmatpush2.bf16.msra.mxu0 0
    %739 = vmatprep.subr.bf16.mxu0 0
    %740 = vmatpush2.bf16.msra.mxu0 0
    %741 = vmatprep.subr.bf16.mxu0 0
    %742 = vmatpush2.bf16.msra.mxu0 0
    %743 = vmatprep.mubr.bf16.mxu0 0
    %744 = vmatmul.mubr.bf16.gmra.mxu0 %v614
    %v745 = vpop.f32.mrf.mxu0
    %v746 = vadd.f32 0.0, %v745
    %v747 = vpop.f32.mrf.mxu0
    %v748 = vadd.f32 0.0, %v747
    %v749 = vpop.f32.mrf.mxu0
    %v750 = vadd.f32 0.0, %v749
    %v751 = vpop.f32.mrf.mxu0
    %v752 = vadd.f32 0.0, %v751
    %753 = vdwg.mxu0
    %v755 = vlaneseq
    %v756 = vshrl.u32 %v755, 7
    %v757 = vsub.s32 0, %v756
    %v758 = vrot.slane %v562, %v757
    %v759 = vlaneseq
    %v760 = vshrl.u32 %v759, 7
    %v761 = vsub.s32 1, %v760
    %v762 = vrot.slane %v562, %v761
    %v765 = vadd.f32 %v758, %v746
    %v766 = vadd.f32 %v762, %v748
    %v767 = vadd.f32 %v758, %v750
    %v768 = vadd.f32 %v762, %v752
    %s769 = scalar_lea.vmem [#allocation5], 8
    %v770 = vld [vmem:[%s769] sm:$0xf]
    %v771 = vld [vmem:[%s769 + $0x4] sm:$0xf]
    %v774 = vunpack.c.l.b16 %v770
    %v775 = vunpack.c.l.b16 %v771
    %v776 = vpack.c.b16 %v775, %v774
    %v778 = vsel %vm214, %v776, 0
    %780 = vmatprep.subr.bf16.mxu0 0
    %781 = vmatpush1.bf16.msra.mxu0 0
    %782 = vmatprep.subr.bf16.mxu0 0
    %783 = vmatpush1.bf16.msra.mxu0 0
    %784 = vmatprep.subr.bf16.mxu0 0
    %785 = vmatpush1.bf16.msra.mxu0 0
    %786 = vmatprep.subr.bf16.mxu0 0
    %787 = vmatpush1.bf16.msra.mxu0 0
    %788 = vmatprep.subr.bf16.mxu0 0
    %789 = vmatpush1.bf16.msra.mxu0 0
    %790 = vmatprep.subr.bf16.mxu0 0
    %791 = vmatpush1.bf16.msra.mxu0 0
    %792 = vmatprep.subr.bf16.mxu0 0
    %793 = vmatpush1.bf16.msra.mxu0 0
    %794 = vmatprep.subr.bf16.mxu0 0
    %795 = vmatpush1.bf16.msra.mxu0 %v561
    %796 = vmatprep.subr.bf16.mxu0 0
    %797 = vmatpush2.bf16.msra.mxu0 0
    %798 = vmatprep.subr.bf16.mxu0 0
    %799 = vmatpush2.bf16.msra.mxu0 0
    %800 = vmatprep.subr.bf16.mxu0 0
    %801 = vmatpush2.bf16.msra.mxu0 0
    %802 = vmatprep.subr.bf16.mxu0 0
    %803 = vmatpush2.bf16.msra.mxu0 0
    %804 = vmatprep.subr.bf16.mxu0 0
    %805 = vmatpush2.bf16.msra.mxu0 0
    %806 = vmatprep.subr.bf16.mxu0 0
    %807 = vmatpush2.bf16.msra.mxu0 0
    %808 = vmatprep.subr.bf16.mxu0 0
    %809 = vmatpush2.bf16.msra.mxu0 0
    %810 = vmatprep.subr.bf16.mxu0 0
    %811 = vmatpush2.bf16.msra.mxu0 0
    %812 = vmatprep.mubr.bf16.mxu0 0
    %813 = vmatmul.mubr.bf16.gmra.mxu0 %v778
    %v814 = vpop.f32.mrf.mxu0
    %v815 = vadd.f32 0.0, %v814
    %v816 = vpop.f32.mrf.mxu0
    %v817 = vpop.f32.mrf.mxu0
    %v818 = vadd.f32 0.0, %v817
    %v819 = vpop.f32.mrf.mxu0
    %820 = vdwg.mxu0
    %v821 = vpack.c.bf16 %v818, %v815
    %s822 = scalar_lea.vmem [#allocation7], 128
    %v823 = vld [vmem:[%s822] sm:$0xff]
    %v824 = vld [vmem:[%s822 + $0x8] sm:$0xff]
    %v825 = vld [vmem:[%s822 + $0x10] sm:$0xff]
    %v826 = vld [vmem:[%s822 + $0x18] sm:$0xff]
    %v827 = vld [vmem:[%s822 + $0x20] sm:$0xff]
    %v828 = vld [vmem:[%s822 + $0x28] sm:$0xff]
    %v829 = vld [vmem:[%s822 + $0x30] sm:$0xff]
    %v830 = vld [vmem:[%s822 + $0x38] sm:$0xff]
    %v831 = vld [vmem:[%s822 + $0x40] sm:$0xff]
    %v832 = vld [vmem:[%s822 + $0x48] sm:$0xff]
    %v833 = vld [vmem:[%s822 + $0x50] sm:$0xff]
    %v834 = vld [vmem:[%s822 + $0x58] sm:$0xff]
    %v835 = vld [vmem:[%s822 + $0x60] sm:$0xff]
    %v836 = vld [vmem:[%s822 + $0x68] sm:$0xff]
    %v837 = vld [vmem:[%s822 + $0x70] sm:$0xff]
    %v838 = vld [vmem:[%s822 + $0x78] sm:$0xff]
    %v855 = vunpack.c.l.b16 %v823
    %v856 = vunpack.c.h.b16 %v823
    %v857 = vunpack.c.l.b16 %v824
    %v858 = vunpack.c.h.b16 %v824
    %v859 = vunpack.c.l.b16 %v825
    %v860 = vunpack.c.h.b16 %v825
    %v861 = vunpack.c.l.b16 %v826
    %v862 = vunpack.c.h.b16 %v826
    %v863 = vunpack.c.l.b16 %v827
    %v864 = vunpack.c.h.b16 %v827
    %v865 = vunpack.c.l.b16 %v828
    %v866 = vunpack.c.h.b16 %v828
    %v867 = vunpack.c.l.b16 %v829
    %v868 = vunpack.c.h.b16 %v829
    %v869 = vunpack.c.l.b16 %v830
    %v870 = vunpack.c.h.b16 %v830
    %v871 = vunpack.c.l.b16 %v831
    %v872 = vunpack.c.h.b16 %v831
    %v873 = vunpack.c.l.b16 %v832
    %v874 = vunpack.c.h.b16 %v832
    %v875 = vunpack.c.l.b16 %v833
    %v876 = vunpack.c.h.b16 %v833
    %v877 = vunpack.c.l.b16 %v834
    %v878 = vunpack.c.h.b16 %v834
    %v879 = vunpack.c.l.b16 %v835
    %v880 = vunpack.c.h.b16 %v835
    %v881 = vunpack.c.l.b16 %v836
    %v882 = vunpack.c.h.b16 %v836
    %v883 = vunpack.c.l.b16 %v837
    %v884 = vunpack.c.h.b16 %v837
    %v885 = vunpack.c.l.b16 %v838
    %v886 = vunpack.c.h.b16 %v838
    %v887 = vpack.c.b16 %v857, %v855
    %v888 = vpack.c.b16 %v858, %v856
    %v889 = vpack.c.b16 %v861, %v859
    %v890 = vpack.c.b16 %v862, %v860
    %v891 = vpack.c.b16 %v865, %v863
    %v892 = vpack.c.b16 %v866, %v864
    %v893 = vpack.c.b16 %v869, %v867
    %v894 = vpack.c.b16 %v870, %v868
    %v895 = vpack.c.b16 %v873, %v871
    %v896 = vpack.c.b16 %v874, %v872
    %v897 = vpack.c.b16 %v877, %v875
    %v898 = vpack.c.b16 %v878, %v876
    %v899 = vpack.c.b16 %v881, %v879
    %v900 = vpack.c.b16 %v882, %v880
    %v901 = vpack.c.b16 %v885, %v883
    %v902 = vpack.c.b16 %v886, %v884
    %919 = vmatprep.subr.bf16.mxu0 %v902
    %920 = vmatpush1.bf16.msra.mxu0 %v901
    %921 = vmatprep.subr.bf16.mxu0 %v900
    %922 = vmatpush1.bf16.msra.mxu0 %v899
    %923 = vmatprep.subr.bf16.mxu0 %v898
    %924 = vmatpush1.bf16.msra.mxu0 %v897
    %925 = vmatprep.subr.bf16.mxu0 %v896
    %926 = vmatpush1.bf16.msra.mxu0 %v895
    %927 = vmatprep.subr.bf16.mxu0 %v894
    %928 = vmatpush1.bf16.msra.mxu0 %v893
    %929 = vmatprep.subr.bf16.mxu0 %v892
    %930 = vmatpush1.bf16.msra.mxu0 %v891
    %931 = vmatprep.subr.bf16.mxu0 %v890
    %932 = vmatpush1.bf16.msra.mxu0 %v889
    %933 = vmatprep.subr.bf16.mxu0 %v888
    %934 = vmatpush1.bf16.msra.mxu0 %v887
    %935 = vmatprep.subr.bf16.mxu0 0
    %936 = vmatpush2.bf16.msra.mxu0 0
    %937 = vmatprep.subr.bf16.mxu0 0
    %938 = vmatpush2.bf16.msra.mxu0 0
    %939 = vmatprep.subr.bf16.mxu0 0
    %940 = vmatpush2.bf16.msra.mxu0 0
    %941 = vmatprep.subr.bf16.mxu0 0
    %942 = vmatpush2.bf16.msra.mxu0 0
    %943 = vmatprep.subr.bf16.mxu0 0
    %944 = vmatpush2.bf16.msra.mxu0 0
    %945 = vmatprep.subr.bf16.mxu0 0
    %946 = vmatpush2.bf16.msra.mxu0 0
    %947 = vmatprep.subr.bf16.mxu0 0
    %948 = vmatpush2.bf16.msra.mxu0 0
    %949 = vmatprep.subr.bf16.mxu0 0
    %950 = vmatpush2.bf16.msra.mxu0 0
    %951 = vmatprep.mubr.bf16.mxu0 0
    %952 = vmatmul.mubr.bf16.gmra.mxu0 %v821
    %v953 = vpop.f32.mrf.mxu0
    %v954 = vadd.f32 0.0, %v953
    %v955 = vpop.f32.mrf.mxu0
    %v956 = vadd.f32 0.0, %v955
    %v957 = vpop.f32.mrf.mxu0
    %v958 = vadd.f32 0.0, %v957
    %v959 = vpop.f32.mrf.mxu0
    %v960 = vadd.f32 0.0, %v959
    %961 = vdwg.mxu0
    %v962 = vadd.f32 %v765, %v954
    %v963 = vadd.f32 %v766, %v956
    %v964 = vadd.f32 %v767, %v958
    %v965 = vadd.f32 %v768, %v960
    %s966 = scalar_lea.vmem [#allocation5], 16
    %v967 = vld [vmem:[%s966] sm:$0xf]
    %v968 = vld [vmem:[%s966 + $0x4] sm:$0xf]
    %v971 = vunpack.c.l.b16 %v967
    %v972 = vunpack.c.l.b16 %v968
    %v973 = vpack.c.b16 %v972, %v971
    %v975 = vsel %vm214, %v973, 0
    %977 = vmatprep.subr.bf16.mxu0 0
    %978 = vmatpush1.bf16.msra.mxu0 0
    %979 = vmatprep.subr.bf16.mxu0 0
    %980 = vmatpush1.bf16.msra.mxu0 0
    %981 = vmatprep.subr.bf16.mxu0 0
    %982 = vmatpush1.bf16.msra.mxu0 0
    %983 = vmatprep.subr.bf16.mxu0 0
    %984 = vmatpush1.bf16.msra.mxu0 0
    %985 = vmatprep.subr.bf16.mxu0 0
    %986 = vmatpush1.bf16.msra.mxu0 0
    %987 = vmatprep.subr.bf16.mxu0 0
    %988 = vmatpush1.bf16.msra.mxu0 0
    %989 = vmatprep.subr.bf16.mxu0 0
    %990 = vmatpush1.bf16.msra.mxu0 0
    %991 = vmatprep.subr.bf16.mxu0 0
    %992 = vmatpush1.bf16.msra.mxu0 %v561
    %993 = vmatprep.subr.bf16.mxu0 0
    %994 = vmatpush2.bf16.msra.mxu0 0
    %995 = vmatprep.subr.bf16.mxu0 0
    %996 = vmatpush2.bf16.msra.mxu0 0
    %997 = vmatprep.subr.bf16.mxu0 0
    %998 = vmatpush2.bf16.msra.mxu0 0
    %999 = vmatprep.subr.bf16.mxu0 0
    %1000 = vmatpush2.bf16.msra.mxu0 0
    %1001 = vmatprep.subr.bf16.mxu0 0
    %1002 = vmatpush2.bf16.msra.mxu0 0
    %1003 = vmatprep.subr.bf16.mxu0 0
    %1004 = vmatpush2.bf16.msra.mxu0 0
    %1005 = vmatprep.subr.bf16.mxu0 0
    %1006 = vmatpush2.bf16.msra.mxu0 0
    %1007 = vmatprep.subr.bf16.mxu0 0
    %1008 = vmatpush2.bf16.msra.mxu0 0
    %1009 = vmatprep.mubr.bf16.mxu0 0
    %1010 = vmatmul.mubr.bf16.gmra.mxu0 %v975
    %v1011 = vpop.f32.mrf.mxu0
    %v1012 = vadd.f32 0.0, %v1011
    %v1013 = vpop.f32.mrf.mxu0
    %v1014 = vpop.f32.mrf.mxu0
    %v1015 = vadd.f32 0.0, %v1014
    %v1016 = vpop.f32.mrf.mxu0
    %1017 = vdwg.mxu0
    %v1018 = vpack.c.bf16 %v1015, %v1012
    %s1019 = scalar_lea.vmem [#allocation7], 256
    %v1020 = vld [vmem:[%s1019] sm:$0xff]
    %v1021 = vld [vmem:[%s1019 + $0x8] sm:$0xff]
    %v1022 = vld [vmem:[%s1019 + $0x10] sm:$0xff]
    %v1023 = vld [vmem:[%s1019 + $0x18] sm:$0xff]
    %v1024 = vld [vmem:[%s1019 + $0x20] sm:$0xff]
    %v1025 = vld [vmem:[%s1019 + $0x28] sm:$0xff]
    %v1026 = vld [vmem:[%s1019 + $0x30] sm:$0xff]
    %v1027 = vld [vmem:[%s1019 + $0x38] sm:$0xff]
    %v1028 = vld [vmem:[%s1019 + $0x40] sm:$0xff]
    %v1029 = vld [vmem:[%s1019 + $0x48] sm:$0xff]
    %v1030 = vld [vmem:[%s1019 + $0x50] sm:$0xff]
    %v1031 = vld [vmem:[%s1019 + $0x58] sm:$0xff]
    %v1032 = vld [vmem:[%s1019 + $0x60] sm:$0xff]
    %v1033 = vld [vmem:[%s1019 + $0x68] sm:$0xff]
    %v1034 = vld [vmem:[%s1019 + $0x70] sm:$0xff]
    %v1035 = vld [vmem:[%s1019 + $0x78] sm:$0xff]
    %v1052 = vunpack.c.l.b16 %v1020
    %v1053 = vunpack.c.h.b16 %v1020
    %v1054 = vunpack.c.l.b16 %v1021
    %v1055 = vunpack.c.h.b16 %v1021
    %v1056 = vunpack.c.l.b16 %v1022
    %v1057 = vunpack.c.h.b16 %v1022
    %v1058 = vunpack.c.l.b16 %v1023
    %v1059 = vunpack.c.h.b16 %v1023
    %v1060 = vunpack.c.l.b16 %v1024
    %v1061 = vunpack.c.h.b16 %v1024
    %v1062 = vunpack.c.l.b16 %v1025
    %v1063 = vunpack.c.h.b16 %v1025
    %v1064 = vunpack.c.l.b16 %v1026
    %v1065 = vunpack.c.h.b16 %v1026
    %v1066 = vunpack.c.l.b16 %v1027
    %v1067 = vunpack.c.h.b16 %v1027
    %v1068 = vunpack.c.l.b16 %v1028
    %v1069 = vunpack.c.h.b16 %v1028
    %v1070 = vunpack.c.l.b16 %v1029
    %v1071 = vunpack.c.h.b16 %v1029
    %v1072 = vunpack.c.l.b16 %v1030
    %v1073 = vunpack.c.h.b16 %v1030
    %v1074 = vunpack.c.l.b16 %v1031
    %v1075 = vunpack.c.h.b16 %v1031
    %v1076 = vunpack.c.l.b16 %v1032
    %v1077 = vunpack.c.h.b16 %v1032
    %v1078 = vunpack.c.l.b16 %v1033
    %v1079 = vunpack.c.h.b16 %v1033
    %v1080 = vunpack.c.l.b16 %v1034
    %v1081 = vunpack.c.h.b16 %v1034
    %v1082 = vunpack.c.l.b16 %v1035
    %v1083 = vunpack.c.h.b16 %v1035
    %v1084 = vpack.c.b16 %v1054, %v1052
    %v1085 = vpack.c.b16 %v1055, %v1053
    %v1086 = vpack.c.b16 %v1058, %v1056
    %v1087 = vpack.c.b16 %v1059, %v1057
    %v1088 = vpack.c.b16 %v1062, %v1060
    %v1089 = vpack.c.b16 %v1063, %v1061
    %v1090 = vpack.c.b16 %v1066, %v1064
    %v1091 = vpack.c.b16 %v1067, %v1065
    %v1092 = vpack.c.b16 %v1070, %v1068
    %v1093 = vpack.c.b16 %v1071, %v1069
    %v1094 = vpack.c.b16 %v1074, %v1072
    %v1095 = vpack.c.b16 %v1075, %v1073
    %v1096 = vpack.c.b16 %v1078, %v1076
    %v1097 = vpack.c.b16 %v1079, %v1077
    %v1098 = vpack.c.b16 %v1082, %v1080
    %v1099 = vpack.c.b16 %v1083, %v1081
    %1116 = vmatprep.subr.bf16.mxu0 %v1099
    %1117 = vmatpush1.bf16.msra.mxu0 %v1098
    %1118 = vmatprep.subr.bf16.mxu0 %v1097
    %1119 = vmatpush1.bf16.msra.mxu0 %v1096
    %1120 = vmatprep.subr.bf16.mxu0 %v1095
    %1121 = vmatpush1.bf16.msra.mxu0 %v1094
    %1122 = vmatprep.subr.bf16.mxu0 %v1093
    %1123 = vmatpush1.bf16.msra.mxu0 %v1092
    %1124 = vmatprep.subr.bf16.mxu0 %v1091
    %1125 = vmatpush1.bf16.msra.mxu0 %v1090
    %1126 = vmatprep.subr.bf16.mxu0 %v1089
    %1127 = vmatpush1.bf16.msra.mxu0 %v1088
    %1128 = vmatprep.subr.bf16.mxu0 %v1087
    %1129 = vmatpush1.bf16.msra.mxu0 %v1086
    %1130 = vmatprep.subr.bf16.mxu0 %v1085
    %1131 = vmatpush1.bf16.msra.mxu0 %v1084
    %1132 = vmatprep.subr.bf16.mxu0 0
    %1133 = vmatpush2.bf16.msra.mxu0 0
    %1134 = vmatprep.subr.bf16.mxu0 0
    %1135 = vmatpush2.bf16.msra.mxu0 0
    %1136 = vmatprep.subr.bf16.mxu0 0
    %1137 = vmatpush2.bf16.msra.mxu0 0
    %1138 = vmatprep.subr.bf16.mxu0 0
    %1139 = vmatpush2.bf16.msra.mxu0 0
    %1140 = vmatprep.subr.bf16.mxu0 0
    %1141 = vmatpush2.bf16.msra.mxu0 0
    %1142 = vmatprep.subr.bf16.mxu0 0
    %1143 = vmatpush2.bf16.msra.mxu0 0
    %1144 = vmatprep.subr.bf16.mxu0 0
    %1145 = vmatpush2.bf16.msra.mxu0 0
    %1146 = vmatprep.subr.bf16.mxu0 0
    %1147 = vmatpush2.bf16.msra.mxu0 0
    %1148 = vmatprep.mubr.bf16.mxu0 0
    %1149 = vmatmul.mubr.bf16.gmra.mxu0 %v1018
    %v1150 = vpop.f32.mrf.mxu0
    %v1151 = vadd.f32 0.0, %v1150
    %v1152 = vpop.f32.mrf.mxu0
    %v1153 = vadd.f32 0.0, %v1152
    %v1154 = vpop.f32.mrf.mxu0
    %v1155 = vadd.f32 0.0, %v1154
    %v1156 = vpop.f32.mrf.mxu0
    %v1157 = vadd.f32 0.0, %v1156
    %1158 = vdwg.mxu0
    %v1159 = vadd.f32 %v962, %v1151
    %v1160 = vadd.f32 %v963, %v1153
    %v1161 = vadd.f32 %v964, %v1155
    %v1162 = vadd.f32 %v965, %v1157
    %v1163 = vmax.f32 %v1159, 0.0
    %v1164 = vmax.f32 %v1160, 0.0
    %v1165 = vmax.f32 %v1161, 0.0
    %v1166 = vmax.f32 %v1162, 0.0
    %v1167 = vld [vmem:[#allocation10] sm:$0xf]
    %v1168 = vpack.c.bf16 %v1165, %v1163
    %v1169 = vpack.c.bf16 %v1166, %v1164
    %v1171 = vsel %vm214, %v1167, 0
    %1173 = vmatprep.subr.bf16.mxu0 0
    %1174 = vmatpush1.bf16.msra.mxu0 0
    %1175 = vmatprep.subr.bf16.mxu0 0
    %1176 = vmatpush1.bf16.msra.mxu0 0
    %1177 = vmatprep.subr.bf16.mxu0 0
    %1178 = vmatpush1.bf16.msra.mxu0 0
    %1179 = vmatprep.subr.bf16.mxu0 0
    %1180 = vmatpush1.bf16.msra.mxu0 0
    %1181 = vmatprep.subr.bf16.mxu0 0
    %1182 = vmatpush1.bf16.msra.mxu0 0
    %1183 = vmatprep.subr.bf16.mxu0 0
    %1184 = vmatpush1.bf16.msra.mxu0 0
    %1185 = vmatprep.subr.bf16.mxu0 0
    %1186 = vmatpush1.bf16.msra.mxu0 0
    %1187 = vmatprep.subr.bf16.mxu0 %v1169
    %1188 = vmatpush1.bf16.msra.mxu0 %v1168
    %1189 = vmatprep.subr.bf16.mxu0 0
    %1190 = vmatpush2.bf16.msra.mxu0 0
    %1191 = vmatprep.subr.bf16.mxu0 0
    %1192 = vmatpush2.bf16.msra.mxu0 0
    %1193 = vmatprep.subr.bf16.mxu0 0
    %1194 = vmatpush2.bf16.msra.mxu0 0
    %1195 = vmatprep.subr.bf16.mxu0 0
    %1196 = vmatpush2.bf16.msra.mxu0 0
    %1197 = vmatprep.subr.bf16.mxu0 0
    %1198 = vmatpush2.bf16.msra.mxu0 0
    %1199 = vmatprep.subr.bf16.mxu0 0
    %1200 = vmatpush2.bf16.msra.mxu0 0
    %1201 = vmatprep.subr.bf16.mxu0 0
    %1202 = vmatpush2.bf16.msra.mxu0 0
    %1203 = vmatprep.subr.bf16.mxu0 0
    %1204 = vmatpush2.bf16.msra.mxu0 0
    %1205 = vmatprep.mubr.bf16.mxu0 0
    %1206 = vmatmul.mubr.bf16.gmra.mxu0 %v1171
    %v1207 = vpop.f32.mrf.mxu0
    %v1208 = vadd.f32 0.0, %v1207
    %v1209 = vpop.f32.mrf.mxu0
    %v1210 = vadd.f32 0.0, %v1209
    %v1211 = vpop.f32.mrf.mxu0
    %v1212 = vpop.f32.mrf.mxu0
    %1213 = vdwg.mxu0
    %v1214 = vpack.c.bf16 %v1208, %v1208
    %v1215 = vpack.c.bf16 %v1210, %v1210
    %v1216 = vld [vmem:[%s8] sm:$0xf]
    %v1217 = vld [vmem:[%s8 + $0x4] sm:$0xf]
    %v1218 = vld [vmem:[%s8 + $0x8] sm:$0xf]
    %v1219 = vld [vmem:[%s8 + $0xc] sm:$0xf]
    %v1220 = vld [vmem:[%s8 + $0x10] sm:$0xf]
    %v1221 = vld [vmem:[%s8 + $0x14] sm:$0xf]
    %v1222 = vld [vmem:[%s8 + $0x18] sm:$0xf]
    %v1223 = vld [vmem:[%s8 + $0x1c] sm:$0xf]
    %v1224 = vld [vmem:[%s8 + $0x20] sm:$0xf]
    %v1225 = vld [vmem:[%s8 + $0x24] sm:$0xf]
    %v1226 = vld [vmem:[%s8 + $0x28] sm:$0xf]
    %v1227 = vld [vmem:[%s8 + $0x2c] sm:$0xf]
    %v1228 = vld [vmem:[%s8 + $0x30] sm:$0xf]
    %v1229 = vld [vmem:[%s8 + $0x34] sm:$0xf]
    %v1230 = vld [vmem:[%s8 + $0x38] sm:$0xf]
    %v1231 = vld [vmem:[%s8 + $0x3c] sm:$0xf]
    %v1232 = vld [vmem:[%s8 + $0x40] sm:$0xf]
    %v1233 = vld [vmem:[%s8 + $0x44] sm:$0xf]
    %v1234 = vld [vmem:[%s8 + $0x48] sm:$0xf]
    %v1235 = vld [vmem:[%s8 + $0x4c] sm:$0xf]
    %v1236 = vld [vmem:[%s8 + $0x50] sm:$0xf]
    %v1237 = vld [vmem:[%s8 + $0x54] sm:$0xf]
    %v1238 = vld [vmem:[%s8 + $0x58] sm:$0xf]
    %v1239 = vld [vmem:[%s8 + $0x5c] sm:$0xf]
    %v1240 = vld [vmem:[%s8 + $0x60] sm:$0xf]
    %v1241 = vld [vmem:[%s8 + $0x64] sm:$0xf]
    %v1242 = vld [vmem:[%s8 + $0x68] sm:$0xf]
    %v1243 = vld [vmem:[%s8 + $0x6c] sm:$0xf]
    %v1244 = vld [vmem:[%s8 + $0x70] sm:$0xf]
    %v1245 = vld [vmem:[%s8 + $0x74] sm:$0xf]
    %v1246 = vld [vmem:[%s8 + $0x78] sm:$0xf]
    %v1247 = vld [vmem:[%s8 + $0x7c] sm:$0xf]
    %v1280 = vunpack.c.l.b16 %v1216
    %v1281 = vunpack.c.l.b16 %v1217
    %v1282 = vunpack.c.l.b16 %v1218
    %v1283 = vunpack.c.l.b16 %v1219
    %v1284 = vunpack.c.l.b16 %v1220
    %v1285 = vunpack.c.l.b16 %v1221
    %v1286 = vunpack.c.l.b16 %v1222
    %v1287 = vunpack.c.l.b16 %v1223
    %v1288 = vunpack.c.l.b16 %v1224
    %v1289 = vunpack.c.l.b16 %v1225
    %v1290 = vunpack.c.l.b16 %v1226
    %v1291 = vunpack.c.l.b16 %v1227
    %v1292 = vunpack.c.l.b16 %v1228
    %v1293 = vunpack.c.l.b16 %v1229
    %v1294 = vunpack.c.l.b16 %v1230
    %v1295 = vunpack.c.l.b16 %v1231
    %v1296 = vunpack.c.l.b16 %v1232
    %v1297 = vunpack.c.l.b16 %v1233
    %v1298 = vunpack.c.l.b16 %v1234
    %v1299 = vunpack.c.l.b16 %v1235
    %v1300 = vunpack.c.l.b16 %v1236
    %v1301 = vunpack.c.l.b16 %v1237
    %v1302 = vunpack.c.l.b16 %v1238
    %v1303 = vunpack.c.l.b16 %v1239
    %v1304 = vunpack.c.l.b16 %v1240
    %v1305 = vunpack.c.l.b16 %v1241
    %v1306 = vunpack.c.l.b16 %v1242
    %v1307 = vunpack.c.l.b16 %v1243
    %v1308 = vunpack.c.l.b16 %v1244
    %v1309 = vunpack.c.l.b16 %v1245
    %v1310 = vunpack.c.l.b16 %v1246
    %v1311 = vunpack.c.l.b16 %v1247
    %v1312 = vpack.c.b16 %v1281, %v1280
    %v1313 = vpack.c.b16 %v1283, %v1282
    %v1314 = vpack.c.b16 %v1285, %v1284
    %v1315 = vpack.c.b16 %v1287, %v1286
    %v1316 = vpack.c.b16 %v1289, %v1288
    %v1317 = vpack.c.b16 %v1291, %v1290
    %v1318 = vpack.c.b16 %v1293, %v1292
    %v1319 = vpack.c.b16 %v1295, %v1294
    %v1320 = vpack.c.b16 %v1297, %v1296
    %v1321 = vpack.c.b16 %v1299, %v1298
    %v1322 = vpack.c.b16 %v1301, %v1300
    %v1323 = vpack.c.b16 %v1303, %v1302
    %v1324 = vpack.c.b16 %v1305, %v1304
    %v1325 = vpack.c.b16 %v1307, %v1306
    %v1326 = vpack.c.b16 %v1309, %v1308
    %v1327 = vpack.c.b16 %v1311, %v1310
    %1344 = vmatprep.subr.bf16.mxu0 0
    %1345 = vmatpush1.bf16.msra.mxu0 %v1319
    %1346 = vmatprep.subr.bf16.mxu0 0
    %1347 = vmatpush1.bf16.msra.mxu0 %v1318
    %1348 = vmatprep.subr.bf16.mxu0 0
    %1349 = vmatpush1.bf16.msra.mxu0 %v1317
    %1350 = vmatprep.subr.bf16.mxu0 0
    %1351 = vmatpush1.bf16.msra.mxu0 %v1316
    %1352 = vmatprep.subr.bf16.mxu0 0
    %1353 = vmatpush1.bf16.msra.mxu0 %v1315
    %1354 = vmatprep.subr.bf16.mxu0 0
    %1355 = vmatpush1.bf16.msra.mxu0 %v1314
    %1356 = vmatprep.subr.bf16.mxu0 0
    %1357 = vmatpush1.bf16.msra.mxu0 %v1313
    %1358 = vmatprep.subr.bf16.mxu0 0
    %1359 = vmatpush1.bf16.msra.mxu0 %v1312
    %1360 = vmatprep.subr.bf16.mxu0 0
    %1361 = vmatpush2.bf16.msra.mxu0 %v1327
    %1362 = vmatprep.subr.bf16.mxu0 0
    %1363 = vmatpush2.bf16.msra.mxu0 %v1326
    %1364 = vmatprep.subr.bf16.mxu0 0
    %1365 = vmatpush2.bf16.msra.mxu0 %v1325
    %1366 = vmatprep.subr.bf16.mxu0 0
    %1367 = vmatpush2.bf16.msra.mxu0 %v1324
    %1368 = vmatprep.subr.bf16.mxu0 0
    %1369 = vmatpush2.bf16.msra.mxu0 %v1323
    %1370 = vmatprep.subr.bf16.mxu0 0
    %1371 = vmatpush2.bf16.msra.mxu0 %v1322
    %1372 = vmatprep.subr.bf16.mxu0 0
    %1373 = vmatpush2.bf16.msra.mxu0 %v1321
    %1374 = vmatprep.subr.bf16.mxu0 0
    %1375 = vmatpush2.bf16.msra.mxu0 %v1320
    %1376 = vmatprep.mubr.bf16.mxu0 %v1215
    %1377 = vmatmul.mubr.bf16.gmra.mxu0 %v1214
    %v1378 = vpop.f32.mrf.mxu0
    %v1379 = vadd.f32 0.0, %v1378
    %v1380 = vpop.f32.mrf.mxu0
    %v1381 = vpop.f32.mrf.mxu0
    %v1382 = vpop.f32.mrf.mxu0
    %1383 = vdwg.mxu0
    %v1384 = vpack.c.bf16 %v1379, %v1379
    %v1385 = vld [vmem:[#allocation13] sm:$0x3]
    %v1386 = vld [vmem:[%s9] sm:$0xf]
    %vm1387 = vcmask 64512
    %v1389 = vsel %vm1387, %v1386, 0
    %v1392 = vsel %vm276, %v1384, 0
    %1394 = vmatprep.subr.bf16.mxu0 0
    %1395 = vmatpush1.bf16.msra.mxu0 0
    %1396 = vmatprep.subr.bf16.mxu0 0
    %1397 = vmatpush1.bf16.msra.mxu0 0
    %1398 = vmatprep.subr.bf16.mxu0 0
    %1399 = vmatpush1.bf16.msra.mxu0 0
    %1400 = vmatprep.subr.bf16.mxu0 0
    %1401 = vmatpush1.bf16.msra.mxu0 0
    %1402 = vmatprep.subr.bf16.mxu0 0
    %1403 = vmatpush1.bf16.msra.mxu0 0
    %1404 = vmatprep.subr.bf16.mxu0 0
    %1405 = vmatpush1.bf16.msra.mxu0 0
    %1406 = vmatprep.subr.bf16.mxu0 0
    %1407 = vmatpush1.bf16.msra.mxu0 0
    %1408 = vmatprep.subr.bf16.mxu0 0
    %1409 = vmatpush1.bf16.msra.mxu0 %v1392
    %1410 = vmatprep.subr.bf16.mxu0 0
    %1411 = vmatpush2.bf16.msra.mxu0 0
    %1412 = vmatprep.subr.bf16.mxu0 0
    %1413 = vmatpush2.bf16.msra.mxu0 0
    %1414 = vmatprep.subr.bf16.mxu0 0
    %1415 = vmatpush2.bf16.msra.mxu0 0
    %1416 = vmatprep.subr.bf16.mxu0 0
    %1417 = vmatpush2.bf16.msra.mxu0 0
    %1418 = vmatprep.subr.bf16.mxu0 0
    %1419 = vmatpush2.bf16.msra.mxu0 0
    %1420 = vmatprep.subr.bf16.mxu0 0
    %1421 = vmatpush2.bf16.msra.mxu0 0
    %1422 = vmatprep.subr.bf16.mxu0 0
    %1423 = vmatpush2.bf16.msra.mxu0 0
    %1424 = vmatprep.subr.bf16.mxu0 0
    %1425 = vmatpush2.bf16.msra.mxu0 0
    %1426 = vmatprep.mubr.bf16.mxu0 0
    %1427 = vmatmul.mubr.bf16.gmra.mxu0 %v1389
    %v1428 = vpop.f32.mrf.mxu0
    %v1429 = vadd.f32 0.0, %v1428
    %v1430 = vpop.f32.mrf.mxu0
    %v1431 = vpop.f32.mrf.mxu0
    %v1432 = vpop.f32.mrf.mxu0
    %1433 = vdwg.mxu0
    %v1434 = vpack.c.bf16 %v1429, %v1429
    %v1435 = vld [vmem:[#allocation11] sm:$0xff]
    %v1436 = vld [vmem:[#allocation11 + $0x8] sm:$0xff]
    %v1437 = vld [vmem:[#allocation11 + $0x10] sm:$0xff]
    %v1438 = vld [vmem:[#allocation11 + $0x18] sm:$0xff]
    %v1439 = vld [vmem:[#allocation11 + $0x20] sm:$0xff]
    %v1440 = vld [vmem:[#allocation11 + $0x28] sm:$0xff]
    %v1441 = vld [vmem:[#allocation11 + $0x30] sm:$0xff]
    %v1442 = vld [vmem:[#allocation11 + $0x38] sm:$0xff]
    %v1443 = vld [vmem:[#allocation11 + $0x40] sm:$0xff]
    %v1444 = vld [vmem:[#allocation11 + $0x48] sm:$0xff]
    %v1445 = vld [vmem:[#allocation11 + $0x50] sm:$0xff]
    %v1446 = vld [vmem:[#allocation11 + $0x58] sm:$0xff]
    %v1447 = vld [vmem:[#allocation11 + $0x60] sm:$0xff]
    %v1448 = vld [vmem:[#allocation11 + $0x68] sm:$0xff]
    %v1449 = vld [vmem:[#allocation11 + $0x70] sm:$0xff]
    %v1450 = vld [vmem:[#allocation11 + $0x78] sm:$0xff]
    %v1467 = vunpack.c.l.b16 %v1435
    %v1468 = vunpack.c.h.b16 %v1435
    %v1469 = vunpack.c.l.b16 %v1436
    %v1470 = vunpack.c.h.b16 %v1436
    %v1471 = vunpack.c.l.b16 %v1437
    %v1472 = vunpack.c.h.b16 %v1437
    %v1473 = vunpack.c.l.b16 %v1438
    %v1474 = vunpack.c.h.b16 %v1438
    %v1475 = vunpack.c.l.b16 %v1439
    %v1476 = vunpack.c.h.b16 %v1439
    %v1477 = vunpack.c.l.b16 %v1440
    %v1478 = vunpack.c.h.b16 %v1440
    %v1479 = vunpack.c.l.b16 %v1441
    %v1480 = vunpack.c.h.b16 %v1441
    %v1481 = vunpack.c.l.b16 %v1442
    %v1482 = vunpack.c.h.b16 %v1442
    %v1483 = vunpack.c.l.b16 %v1443
    %v1484 = vunpack.c.h.b16 %v1443
    %v1485 = vunpack.c.l.b16 %v1444
    %v1486 = vunpack.c.h.b16 %v1444
    %v1487 = vunpack.c.l.b16 %v1445
    %v1488 = vunpack.c.h.b16 %v1445
    %v1489 = vunpack.c.l.b16 %v1446
    %v1490 = vunpack.c.h.b16 %v1446
    %v1491 = vunpack.c.l.b16 %v1447
    %v1492 = vunpack.c.h.b16 %v1447
    %v1493 = vunpack.c.l.b16 %v1448
    %v1494 = vunpack.c.h.b16 %v1448
    %v1495 = vunpack.c.l.b16 %v1449
    %v1496 = vunpack.c.h.b16 %v1449
    %v1497 = vunpack.c.l.b16 %v1450
    %v1498 = vunpack.c.h.b16 %v1450
    %v1499 = vpack.c.b16 %v1469, %v1467
    %v1500 = vpack.c.b16 %v1470, %v1468
    %v1501 = vpack.c.b16 %v1473, %v1471
    %v1502 = vpack.c.b16 %v1474, %v1472
    %v1503 = vpack.c.b16 %v1477, %v1475
    %v1504 = vpack.c.b16 %v1478, %v1476
    %v1505 = vpack.c.b16 %v1481, %v1479
    %v1506 = vpack.c.b16 %v1482, %v1480
    %v1507 = vpack.c.b16 %v1485, %v1483
    %v1508 = vpack.c.b16 %v1486, %v1484
    %v1509 = vpack.c.b16 %v1489, %v1487
    %v1510 = vpack.c.b16 %v1490, %v1488
    %v1511 = vpack.c.b16 %v1493, %v1491
    %v1512 = vpack.c.b16 %v1494, %v1492
    %v1513 = vpack.c.b16 %v1497, %v1495
    %v1514 = vpack.c.b16 %v1498, %v1496
    %1531 = vmatprep.subr.bf16.mxu0 %v1514
    %1532 = vmatpush1.bf16.msra.mxu0 %v1513
    %1533 = vmatprep.subr.bf16.mxu0 %v1512
    %1534 = vmatpush1.bf16.msra.mxu0 %v1511
    %1535 = vmatprep.subr.bf16.mxu0 %v1510
    %1536 = vmatpush1.bf16.msra.mxu0 %v1509
    %1537 = vmatprep.subr.bf16.mxu0 %v1508
    %1538 = vmatpush1.bf16.msra.mxu0 %v1507
    %1539 = vmatprep.subr.bf16.mxu0 %v1506
    %1540 = vmatpush1.bf16.msra.mxu0 %v1505
    %1541 = vmatprep.subr.bf16.mxu0 %v1504
    %1542 = vmatpush1.bf16.msra.mxu0 %v1503
    %1543 = vmatprep.subr.bf16.mxu0 %v1502
    %1544 = vmatpush1.bf16.msra.mxu0 %v1501
    %1545 = vmatprep.subr.bf16.mxu0 %v1500
    %1546 = vmatpush1.bf16.msra.mxu0 %v1499
    %1547 = vmatprep.subr.bf16.mxu0 0
    %1548 = vmatpush2.bf16.msra.mxu0 0
    %1549 = vmatprep.subr.bf16.mxu0 0
    %1550 = vmatpush2.bf16.msra.mxu0 0
    %1551 = vmatprep.subr.bf16.mxu0 0
    %1552 = vmatpush2.bf16.msra.mxu0 0
    %1553 = vmatprep.subr.bf16.mxu0 0
    %1554 = vmatpush2.bf16.msra.mxu0 0
    %1555 = vmatprep.subr.bf16.mxu0 0
    %1556 = vmatpush2.bf16.msra.mxu0 0
    %1557 = vmatprep.subr.bf16.mxu0 0
    %1558 = vmatpush2.bf16.msra.mxu0 0
    %1559 = vmatprep.subr.bf16.mxu0 0
    %1560 = vmatpush2.bf16.msra.mxu0 0
    %1561 = vmatprep.subr.bf16.mxu0 0
    %1562 = vmatpush2.bf16.msra.mxu0 0
    %1563 = vmatprep.mubr.bf16.mxu0 0
    %1564 = vmatmul.mubr.bf16.gmra.mxu0 %v1434
    %v1565 = vpop.f32.mrf.mxu0
    %v1566 = vadd.f32 0.0, %v1565
    %v1567 = vpop.f32.mrf.mxu0
    %v1568 = vadd.f32 0.0, %v1567
    %v1569 = vpop.f32.mrf.mxu0
    %v1570 = vpop.f32.mrf.mxu0
    %1571 = vdwg.mxu0
    %v1573 = vlaneseq
    %v1574 = vshrl.u32 %v1573, 7
    %v1575 = vsub.s32 0, %v1574
    %v1576 = vrot.slane %v1385, %v1575
    %v1577 = vlaneseq
    %v1578 = vshrl.u32 %v1577, 7
    %v1579 = vsub.s32 1, %v1578
    %v1580 = vrot.slane %v1385, %v1579
    %v1583 = vadd.f32 %v1576, %v1566
    %v1584 = vadd.f32 %v1580, %v1568
    %s1585 = scalar_lea.vmem %s9, 4
    %v1586 = vld [vmem:[%s1585] sm:$0xf]
    %v1588 = vsel %vm1387, %v1586, 0
    %1590 = vmatprep.subr.bf16.mxu0 0
    %1591 = vmatpush1.bf16.msra.mxu0 0
    %1592 = vmatprep.subr.bf16.mxu0 0
    %1593 = vmatpush1.bf16.msra.mxu0 0
    %1594 = vmatprep.subr.bf16.mxu0 0
    %1595 = vmatpush1.bf16.msra.mxu0 0
    %1596 = vmatprep.subr.bf16.mxu0 0
    %1597 = vmatpush1.bf16.msra.mxu0 0
    %1598 = vmatprep.subr.bf16.mxu0 0
    %1599 = vmatpush1.bf16.msra.mxu0 0
    %1600 = vmatprep.subr.bf16.mxu0 0
    %1601 = vmatpush1.bf16.msra.mxu0 0
    %1602 = vmatprep.subr.bf16.mxu0 0
    %1603 = vmatpush1.bf16.msra.mxu0 0
    %1604 = vmatprep.subr.bf16.mxu0 0
    %1605 = vmatpush1.bf16.msra.mxu0 %v1392
    %1606 = vmatprep.subr.bf16.mxu0 0
    %1607 = vmatpush2.bf16.msra.mxu0 0
    %1608 = vmatprep.subr.bf16.mxu0 0
    %1609 = vmatpush2.bf16.msra.mxu0 0
    %1610 = vmatprep.subr.bf16.mxu0 0
    %1611 = vmatpush2.bf16.msra.mxu0 0
    %1612 = vmatprep.subr.bf16.mxu0 0
    %1613 = vmatpush2.bf16.msra.mxu0 0
    %1614 = vmatprep.subr.bf16.mxu0 0
    %1615 = vmatpush2.bf16.msra.mxu0 0
    %1616 = vmatprep.subr.bf16.mxu0 0
    %1617 = vmatpush2.bf16.msra.mxu0 0
    %1618 = vmatprep.subr.bf16.mxu0 0
    %1619 = vmatpush2.bf16.msra.mxu0 0
    %1620 = vmatprep.subr.bf16.mxu0 0
    %1621 = vmatpush2.bf16.msra.mxu0 0
    %1622 = vmatprep.mubr.bf16.mxu0 0
    %1623 = vmatmul.mubr.bf16.gmra.mxu0 %v1588
    %v1624 = vpop.f32.mrf.mxu0
    %v1625 = vadd.f32 0.0, %v1624
    %v1626 = vpop.f32.mrf.mxu0
    %v1627 = vpop.f32.mrf.mxu0
    %v1628 = vpop.f32.mrf.mxu0
    %1629 = vdwg.mxu0
    %v1630 = vpack.c.bf16 %v1625, %v1625
    %s1631 = scalar_lea.vmem [#allocation11], 128
    %v1632 = vld [vmem:[%s1631] sm:$0xff]
    %v1633 = vld [vmem:[%s1631 + $0x8] sm:$0xff]
    %v1634 = vld [vmem:[%s1631 + $0x10] sm:$0xff]
    %v1635 = vld [vmem:[%s1631 + $0x18] sm:$0xff]
    %v1636 = vld [vmem:[%s1631 + $0x20] sm:$0xff]
    %v1637 = vld [vmem:[%s1631 + $0x28] sm:$0xff]
    %v1638 = vld [vmem:[%s1631 + $0x30] sm:$0xff]
    %v1639 = vld [vmem:[%s1631 + $0x38] sm:$0xff]
    %v1640 = vld [vmem:[%s1631 + $0x40] sm:$0xff]
    %v1641 = vld [vmem:[%s1631 + $0x48] sm:$0xff]
    %v1642 = vld [vmem:[%s1631 + $0x50] sm:$0xff]
    %v1643 = vld [vmem:[%s1631 + $0x58] sm:$0xff]
    %v1644 = vld [vmem:[%s1631 + $0x60] sm:$0xff]
    %v1645 = vld [vmem:[%s1631 + $0x68] sm:$0xff]
    %v1646 = vld [vmem:[%s1631 + $0x70] sm:$0xff]
    %v1647 = vld [vmem:[%s1631 + $0x78] sm:$0xff]
    %v1664 = vunpack.c.l.b16 %v1632
    %v1665 = vunpack.c.h.b16 %v1632
    %v1666 = vunpack.c.l.b16 %v1633
    %v1667 = vunpack.c.h.b16 %v1633
    %v1668 = vunpack.c.l.b16 %v1634
    %v1669 = vunpack.c.h.b16 %v1634
    %v1670 = vunpack.c.l.b16 %v1635
    %v1671 = vunpack.c.h.b16 %v1635
    %v1672 = vunpack.c.l.b16 %v1636
    %v1673 = vunpack.c.h.b16 %v1636
    %v1674 = vunpack.c.l.b16 %v1637
    %v1675 = vunpack.c.h.b16 %v1637
    %v1676 = vunpack.c.l.b16 %v1638
    %v1677 = vunpack.c.h.b16 %v1638
    %v1678 = vunpack.c.l.b16 %v1639
    %v1679 = vunpack.c.h.b16 %v1639
    %v1680 = vunpack.c.l.b16 %v1640
    %v1681 = vunpack.c.h.b16 %v1640
    %v1682 = vunpack.c.l.b16 %v1641
    %v1683 = vunpack.c.h.b16 %v1641
    %v1684 = vunpack.c.l.b16 %v1642
    %v1685 = vunpack.c.h.b16 %v1642
    %v1686 = vunpack.c.l.b16 %v1643
    %v1687 = vunpack.c.h.b16 %v1643
    %v1688 = vunpack.c.l.b16 %v1644
    %v1689 = vunpack.c.h.b16 %v1644
    %v1690 = vunpack.c.l.b16 %v1645
    %v1691 = vunpack.c.h.b16 %v1645
    %v1692 = vunpack.c.l.b16 %v1646
    %v1693 = vunpack.c.h.b16 %v1646
    %v1694 = vunpack.c.l.b16 %v1647
    %v1695 = vunpack.c.h.b16 %v1647
    %v1696 = vpack.c.b16 %v1666, %v1664
    %v1697 = vpack.c.b16 %v1667, %v1665
    %v1698 = vpack.c.b16 %v1670, %v1668
    %v1699 = vpack.c.b16 %v1671, %v1669
    %v1700 = vpack.c.b16 %v1674, %v1672
    %v1701 = vpack.c.b16 %v1675, %v1673
    %v1702 = vpack.c.b16 %v1678, %v1676
    %v1703 = vpack.c.b16 %v1679, %v1677
    %v1704 = vpack.c.b16 %v1682, %v1680
    %v1705 = vpack.c.b16 %v1683, %v1681
    %v1706 = vpack.c.b16 %v1686, %v1684
    %v1707 = vpack.c.b16 %v1687, %v1685
    %v1708 = vpack.c.b16 %v1690, %v1688
    %v1709 = vpack.c.b16 %v1691, %v1689
    %v1710 = vpack.c.b16 %v1694, %v1692
    %v1711 = vpack.c.b16 %v1695, %v1693
    %1728 = vmatprep.subr.bf16.mxu0 %v1711
    %1729 = vmatpush1.bf16.msra.mxu0 %v1710
    %1730 = vmatprep.subr.bf16.mxu0 %v1709
    %1731 = vmatpush1.bf16.msra.mxu0 %v1708
    %1732 = vmatprep.subr.bf16.mxu0 %v1707
    %1733 = vmatpush1.bf16.msra.mxu0 %v1706
    %1734 = vmatprep.subr.bf16.mxu0 %v1705
    %1735 = vmatpush1.bf16.msra.mxu0 %v1704
    %1736 = vmatprep.subr.bf16.mxu0 %v1703
    %1737 = vmatpush1.bf16.msra.mxu0 %v1702
    %1738 = vmatprep.subr.bf16.mxu0 %v1701
    %1739 = vmatpush1.bf16.msra.mxu0 %v1700
    %1740 = vmatprep.subr.bf16.mxu0 %v1699
    %1741 = vmatpush1.bf16.msra.mxu0 %v1698
    %1742 = vmatprep.subr.bf16.mxu0 %v1697
    %1743 = vmatpush1.bf16.msra.mxu0 %v1696
    %1744 = vmatprep.subr.bf16.mxu0 0
    %1745 = vmatpush2.bf16.msra.mxu0 0
    %1746 = vmatprep.subr.bf16.mxu0 0
    %1747 = vmatpush2.bf16.msra.mxu0 0
    %1748 = vmatprep.subr.bf16.mxu0 0
    %1749 = vmatpush2.bf16.msra.mxu0 0
    %1750 = vmatprep.subr.bf16.mxu0 0
    %1751 = vmatpush2.bf16.msra.mxu0 0
    %1752 = vmatprep.subr.bf16.mxu0 0
    %1753 = vmatpush2.bf16.msra.mxu0 0
    %1754 = vmatprep.subr.bf16.mxu0 0
    %1755 = vmatpush2.bf16.msra.mxu0 0
    %1756 = vmatprep.subr.bf16.mxu0 0
    %1757 = vmatpush2.bf16.msra.mxu0 0
    %1758 = vmatprep.subr.bf16.mxu0 0
    %1759 = vmatpush2.bf16.msra.mxu0 0
    %1760 = vmatprep.mubr.bf16.mxu0 0
    %1761 = vmatmul.mubr.bf16.gmra.mxu0 %v1630
    %v1762 = vpop.f32.mrf.mxu0
    %v1763 = vadd.f32 0.0, %v1762
    %v1764 = vpop.f32.mrf.mxu0
    %v1765 = vadd.f32 0.0, %v1764
    %v1766 = vpop.f32.mrf.mxu0
    %v1767 = vpop.f32.mrf.mxu0
    %1768 = vdwg.mxu0
    %v1769 = vadd.f32 %v1583, %v1763
    %v1770 = vadd.f32 %v1584, %v1765
    %s1771 = scalar_lea.vmem %s9, 8
    %v1772 = vld [vmem:[%s1771] sm:$0xf]
    %v1774 = vsel %vm1387, %v1772, 0
    %1776 = vmatprep.subr.bf16.mxu0 0
    %1777 = vmatpush1.bf16.msra.mxu0 0
    %1778 = vmatprep.subr.bf16.mxu0 0
    %1779 = vmatpush1.bf16.msra.mxu0 0
    %1780 = vmatprep.subr.bf16.mxu0 0
    %1781 = vmatpush1.bf16.msra.mxu0 0
    %1782 = vmatprep.subr.bf16.mxu0 0
    %1783 = vmatpush1.bf16.msra.mxu0 0
    %1784 = vmatprep.subr.bf16.mxu0 0
    %1785 = vmatpush1.bf16.msra.mxu0 0
    %1786 = vmatprep.subr.bf16.mxu0 0
    %1787 = vmatpush1.bf16.msra.mxu0 0
    %1788 = vmatprep.subr.bf16.mxu0 0
    %1789 = vmatpush1.bf16.msra.mxu0 0
    %1790 = vmatprep.subr.bf16.mxu0 0
    %1791 = vmatpush1.bf16.msra.mxu0 %v1392
    %1792 = vmatprep.subr.bf16.mxu0 0
    %1793 = vmatpush2.bf16.msra.mxu0 0
    %1794 = vmatprep.subr.bf16.mxu0 0
    %1795 = vmatpush2.bf16.msra.mxu0 0
    %1796 = vmatprep.subr.bf16.mxu0 0
    %1797 = vmatpush2.bf16.msra.mxu0 0
    %1798 = vmatprep.subr.bf16.mxu0 0
    %1799 = vmatpush2.bf16.msra.mxu0 0
    %1800 = vmatprep.subr.bf16.mxu0 0
    %1801 = vmatpush2.bf16.msra.mxu0 0
    %1802 = vmatprep.subr.bf16.mxu0 0
    %1803 = vmatpush2.bf16.msra.mxu0 0
    %1804 = vmatprep.subr.bf16.mxu0 0
    %1805 = vmatpush2.bf16.msra.mxu0 0
    %1806 = vmatprep.subr.bf16.mxu0 0
    %1807 = vmatpush2.bf16.msra.mxu0 0
    %1808 = vmatprep.mubr.bf16.mxu0 0
    %1809 = vmatmul.mubr.bf16.gmra.mxu0 %v1774
    %v1810 = vpop.f32.mrf.mxu0
    %v1811 = vadd.f32 0.0, %v1810
    %v1812 = vpop.f32.mrf.mxu0
    %v1813 = vpop.f32.mrf.mxu0
    %v1814 = vpop.f32.mrf.mxu0
    %1815 = vdwg.mxu0
    %v1816 = vpack.c.bf16 %v1811, %v1811
    %s1817 = scalar_lea.vmem [#allocation11], 256
    %v1818 = vld [vmem:[%s1817] sm:$0xff]
    %v1819 = vld [vmem:[%s1817 + $0x8] sm:$0xff]
    %v1820 = vld [vmem:[%s1817 + $0x10] sm:$0xff]
    %v1821 = vld [vmem:[%s1817 + $0x18] sm:$0xff]
    %v1822 = vld [vmem:[%s1817 + $0x20] sm:$0xff]
    %v1823 = vld [vmem:[%s1817 + $0x28] sm:$0xff]
    %v1824 = vld [vmem:[%s1817 + $0x30] sm:$0xff]
    %v1825 = vld [vmem:[%s1817 + $0x38] sm:$0xff]
    %v1826 = vld [vmem:[%s1817 + $0x40] sm:$0xff]
    %v1827 = vld [vmem:[%s1817 + $0x48] sm:$0xff]
    %v1828 = vld [vmem:[%s1817 + $0x50] sm:$0xff]
    %v1829 = vld [vmem:[%s1817 + $0x58] sm:$0xff]
    %v1830 = vld [vmem:[%s1817 + $0x60] sm:$0xff]
    %v1831 = vld [vmem:[%s1817 + $0x68] sm:$0xff]
    %v1832 = vld [vmem:[%s1817 + $0x70] sm:$0xff]
    %v1833 = vld [vmem:[%s1817 + $0x78] sm:$0xff]
    %v1850 = vunpack.c.l.b16 %v1818
    %v1851 = vunpack.c.h.b16 %v1818
    %v1852 = vunpack.c.l.b16 %v1819
    %v1853 = vunpack.c.h.b16 %v1819
    %v1854 = vunpack.c.l.b16 %v1820
    %v1855 = vunpack.c.h.b16 %v1820
    %v1856 = vunpack.c.l.b16 %v1821
    %v1857 = vunpack.c.h.b16 %v1821
    %v1858 = vunpack.c.l.b16 %v1822
    %v1859 = vunpack.c.h.b16 %v1822
    %v1860 = vunpack.c.l.b16 %v1823
    %v1861 = vunpack.c.h.b16 %v1823
    %v1862 = vunpack.c.l.b16 %v1824
    %v1863 = vunpack.c.h.b16 %v1824
    %v1864 = vunpack.c.l.b16 %v1825
    %v1865 = vunpack.c.h.b16 %v1825
    %v1866 = vunpack.c.l.b16 %v1826
    %v1867 = vunpack.c.h.b16 %v1826
    %v1868 = vunpack.c.l.b16 %v1827
    %v1869 = vunpack.c.h.b16 %v1827
    %v1870 = vunpack.c.l.b16 %v1828
    %v1871 = vunpack.c.h.b16 %v1828
    %v1872 = vunpack.c.l.b16 %v1829
    %v1873 = vunpack.c.h.b16 %v1829
    %v1874 = vunpack.c.l.b16 %v1830
    %v1875 = vunpack.c.h.b16 %v1830
    %v1876 = vunpack.c.l.b16 %v1831
    %v1877 = vunpack.c.h.b16 %v1831
    %v1878 = vunpack.c.l.b16 %v1832
    %v1879 = vunpack.c.h.b16 %v1832
    %v1880 = vunpack.c.l.b16 %v1833
    %v1881 = vunpack.c.h.b16 %v1833
    %v1882 = vpack.c.b16 %v1852, %v1850
    %v1883 = vpack.c.b16 %v1853, %v1851
    %v1884 = vpack.c.b16 %v1856, %v1854
    %v1885 = vpack.c.b16 %v1857, %v1855
    %v1886 = vpack.c.b16 %v1860, %v1858
    %v1887 = vpack.c.b16 %v1861, %v1859
    %v1888 = vpack.c.b16 %v1864, %v1862
    %v1889 = vpack.c.b16 %v1865, %v1863
    %v1890 = vpack.c.b16 %v1868, %v1866
    %v1891 = vpack.c.b16 %v1869, %v1867
    %v1892 = vpack.c.b16 %v1872, %v1870
    %v1893 = vpack.c.b16 %v1873, %v1871
    %v1894 = vpack.c.b16 %v1876, %v1874
    %v1895 = vpack.c.b16 %v1877, %v1875
    %v1896 = vpack.c.b16 %v1880, %v1878
    %v1897 = vpack.c.b16 %v1881, %v1879
    %1914 = vmatprep.subr.bf16.mxu0 %v1897
    %1915 = vmatpush1.bf16.msra.mxu0 %v1896
    %1916 = vmatprep.subr.bf16.mxu0 %v1895
    %1917 = vmatpush1.bf16.msra.mxu0 %v1894
    %1918 = vmatprep.subr.bf16.mxu0 %v1893
    %1919 = vmatpush1.bf16.msra.mxu0 %v1892
    %1920 = vmatprep.subr.bf16.mxu0 %v1891
    %1921 = vmatpush1.bf16.msra.mxu0 %v1890
    %1922 = vmatprep.subr.bf16.mxu0 %v1889
    %1923 = vmatpush1.bf16.msra.mxu0 %v1888
    %1924 = vmatprep.subr.bf16.mxu0 %v1887
    %1925 = vmatpush1.bf16.msra.mxu0 %v1886
    %1926 = vmatprep.subr.bf16.mxu0 %v1885
    %1927 = vmatpush1.bf16.msra.mxu0 %v1884
    %1928 = vmatprep.subr.bf16.mxu0 %v1883
    %1929 = vmatpush1.bf16.msra.mxu0 %v1882
    %1930 = vmatprep.subr.bf16.mxu0 0
    %1931 = vmatpush2.bf16.msra.mxu0 0
    %1932 = vmatprep.subr.bf16.mxu0 0
    %1933 = vmatpush2.bf16.msra.mxu0 0
    %1934 = vmatprep.subr.bf16.mxu0 0
    %1935 = vmatpush2.bf16.msra.mxu0 0
    %1936 = vmatprep.subr.bf16.mxu0 0
    %1937 = vmatpush2.bf16.msra.mxu0 0
    %1938 = vmatprep.subr.bf16.mxu0 0
    %1939 = vmatpush2.bf16.msra.mxu0 0
    %1940 = vmatprep.subr.bf16.mxu0 0
    %1941 = vmatpush2.bf16.msra.mxu0 0
    %1942 = vmatprep.subr.bf16.mxu0 0
    %1943 = vmatpush2.bf16.msra.mxu0 0
    %1944 = vmatprep.subr.bf16.mxu0 0
    %1945 = vmatpush2.bf16.msra.mxu0 0
    %1946 = vmatprep.mubr.bf16.mxu0 0
    %1947 = vmatmul.mubr.bf16.gmra.mxu0 %v1816
    %v1948 = vpop.f32.mrf.mxu0
    %v1949 = vadd.f32 0.0, %v1948
    %v1950 = vpop.f32.mrf.mxu0
    %v1951 = vadd.f32 0.0, %v1950
    %v1952 = vpop.f32.mrf.mxu0
    %v1953 = vpop.f32.mrf.mxu0
    %1954 = vdwg.mxu0
    %v1955 = vadd.f32 %v1769, %v1949
    %v1956 = vadd.f32 %v1770, %v1951
    %v1957 = vmax.f32 %v1955, 0.0
    %v1958 = vmax.f32 %v1956, 0.0
    %v1959 = vpack.c.bf16 %v1957, %v1957
    %v1960 = vpack.c.bf16 %v1958, %v1958
    %v1961 = vld [vmem:[%s14] sm:$0x3]
    %v1962 = vld [vmem:[#allocation14] sm:$0xf]
    %v1964 = vsel %vm1387, %v1962, 0
    %v1967 = vsel %vm276, %v1959, 0
    %v1970 = vsel %vm276, %v1960, 0
    %1972 = vmatprep.subr.bf16.mxu0 0
    %1973 = vmatpush1.bf16.msra.mxu0 0
    %1974 = vmatprep.subr.bf16.mxu0 0
    %1975 = vmatpush1.bf16.msra.mxu0 0
    %1976 = vmatprep.subr.bf16.mxu0 0
    %1977 = vmatpush1.bf16.msra.mxu0 0
    %1978 = vmatprep.subr.bf16.mxu0 0
    %1979 = vmatpush1.bf16.msra.mxu0 0
    %1980 = vmatprep.subr.bf16.mxu0 0
    %1981 = vmatpush1.bf16.msra.mxu0 0
    %1982 = vmatprep.subr.bf16.mxu0 0
    %1983 = vmatpush1.bf16.msra.mxu0 0
    %1984 = vmatprep.subr.bf16.mxu0 0
    %1985 = vmatpush1.bf16.msra.mxu0 0
    %1986 = vmatprep.subr.bf16.mxu0 %v1970
    %1987 = vmatpush1.bf16.msra.mxu0 %v1967
    %1988 = vmatprep.subr.bf16.mxu0 0
    %1989 = vmatpush2.bf16.msra.mxu0 0
    %1990 = vmatprep.subr.bf16.mxu0 0
    %1991 = vmatpush2.bf16.msra.mxu0 0
    %1992 = vmatprep.subr.bf16.mxu0 0
    %1993 = vmatpush2.bf16.msra.mxu0 0
    %1994 = vmatprep.subr.bf16.mxu0 0
    %1995 = vmatpush2.bf16.msra.mxu0 0
    %1996 = vmatprep.subr.bf16.mxu0 0
    %1997 = vmatpush2.bf16.msra.mxu0 0
    %1998 = vmatprep.subr.bf16.mxu0 0
    %1999 = vmatpush2.bf16.msra.mxu0 0
    %2000 = vmatprep.subr.bf16.mxu0 0
    %2001 = vmatpush2.bf16.msra.mxu0 0
    %2002 = vmatprep.subr.bf16.mxu0 0
    %2003 = vmatpush2.bf16.msra.mxu0 0
    %2004 = vmatprep.mubr.bf16.mxu0 0
    %2005 = vmatmul.mubr.bf16.gmra.mxu0 %v1964
    %v2006 = vpop.f32.mrf.mxu0
    %v2007 = vadd.f32 0.0, %v2006
    %v2008 = vpop.f32.mrf.mxu0
    %v2009 = vadd.f32 0.0, %v2008
    %v2010 = vpop.f32.mrf.mxu0
    %v2011 = vpop.f32.mrf.mxu0
    %2012 = vdwg.mxu0
    %v2013 = vpack.c.bf16 %v2007, %v2007
    %v2014 = vpack.c.bf16 %v2009, %v2009
    %v2015 = vld [vmem:[#allocation16] sm:$0xff]
    %v2016 = vld [vmem:[#allocation16 + $0x8] sm:$0xff]
    %v2017 = vld [vmem:[#allocation16 + $0x10] sm:$0xff]
    %v2018 = vld [vmem:[#allocation16 + $0x18] sm:$0xff]
    %v2019 = vld [vmem:[#allocation16 + $0x20] sm:$0xff]
    %v2020 = vld [vmem:[#allocation16 + $0x28] sm:$0xff]
    %v2021 = vld [vmem:[#allocation16 + $0x30] sm:$0xff]
    %v2022 = vld [vmem:[#allocation16 + $0x38] sm:$0xff]
    %v2023 = vld [vmem:[#allocation16 + $0x40] sm:$0xff]
    %v2024 = vld [vmem:[#allocation16 + $0x48] sm:$0xff]
    %v2025 = vld [vmem:[#allocation16 + $0x50] sm:$0xff]
    %v2026 = vld [vmem:[#allocation16 + $0x58] sm:$0xff]
    %v2027 = vld [vmem:[#allocation16 + $0x60] sm:$0xff]
    %v2028 = vld [vmem:[#allocation16 + $0x68] sm:$0xff]
    %v2029 = vld [vmem:[#allocation16 + $0x70] sm:$0xff]
    %v2030 = vld [vmem:[#allocation16 + $0x78] sm:$0xff]
    %v2031 = vld [vmem:[#allocation16 + $0x80] sm:$0xff]
    %v2032 = vld [vmem:[#allocation16 + $0x88] sm:$0xff]
    %v2033 = vld [vmem:[#allocation16 + $0x90] sm:$0xff]
    %v2034 = vld [vmem:[#allocation16 + $0x98] sm:$0xff]
    %v2035 = vld [vmem:[#allocation16 + $0xa0] sm:$0xff]
    %v2036 = vld [vmem:[#allocation16 + $0xa8] sm:$0xff]
    %v2037 = vld [vmem:[#allocation16 + $0xb0] sm:$0xff]
    %v2038 = vld [vmem:[#allocation16 + $0xb8] sm:$0xff]
    %v2039 = vld [vmem:[#allocation16 + $0xc0] sm:$0xff]
    %v2040 = vld [vmem:[#allocation16 + $0xc8] sm:$0xff]
    %v2041 = vld [vmem:[#allocation16 + $0xd0] sm:$0xff]
    %v2042 = vld [vmem:[#allocation16 + $0xd8] sm:$0xff]
    %v2043 = vld [vmem:[#allocation16 + $0xe0] sm:$0xff]
    %v2044 = vld [vmem:[#allocation16 + $0xe8] sm:$0xff]
    %v2045 = vld [vmem:[#allocation16 + $0xf0] sm:$0xff]
    %v2046 = vld [vmem:[#allocation16 + $0xf8] sm:$0xff]
    %v2079 = vunpack.c.l.b16 %v2015
    %v2080 = vunpack.c.h.b16 %v2015
    %v2081 = vunpack.c.l.b16 %v2016
    %v2082 = vunpack.c.h.b16 %v2016
    %v2083 = vunpack.c.l.b16 %v2017
    %v2084 = vunpack.c.h.b16 %v2017
    %v2085 = vunpack.c.l.b16 %v2018
    %v2086 = vunpack.c.h.b16 %v2018
    %v2087 = vunpack.c.l.b16 %v2019
    %v2088 = vunpack.c.h.b16 %v2019
    %v2089 = vunpack.c.l.b16 %v2020
    %v2090 = vunpack.c.h.b16 %v2020
    %v2091 = vunpack.c.l.b16 %v2021
    %v2092 = vunpack.c.h.b16 %v2021
    %v2093 = vunpack.c.l.b16 %v2022
    %v2094 = vunpack.c.h.b16 %v2022
    %v2095 = vunpack.c.l.b16 %v2023
    %v2096 = vunpack.c.h.b16 %v2023
    %v2097 = vunpack.c.l.b16 %v2024
    %v2098 = vunpack.c.h.b16 %v2024
    %v2099 = vunpack.c.l.b16 %v2025
    %v2100 = vunpack.c.h.b16 %v2025
    %v2101 = vunpack.c.l.b16 %v2026
    %v2102 = vunpack.c.h.b16 %v2026
    %v2103 = vunpack.c.l.b16 %v2027
    %v2104 = vunpack.c.h.b16 %v2027
    %v2105 = vunpack.c.l.b16 %v2028
    %v2106 = vunpack.c.h.b16 %v2028
    %v2107 = vunpack.c.l.b16 %v2029
    %v2108 = vunpack.c.h.b16 %v2029
    %v2109 = vunpack.c.l.b16 %v2030
    %v2110 = vunpack.c.h.b16 %v2030
    %v2111 = vunpack.c.l.b16 %v2031
    %v2112 = vunpack.c.h.b16 %v2031
    %v2113 = vunpack.c.l.b16 %v2032
    %v2114 = vunpack.c.h.b16 %v2032
    %v2115 = vunpack.c.l.b16 %v2033
    %v2116 = vunpack.c.h.b16 %v2033
    %v2117 = vunpack.c.l.b16 %v2034
    %v2118 = vunpack.c.h.b16 %v2034
    %v2119 = vunpack.c.l.b16 %v2035
    %v2120 = vunpack.c.h.b16 %v2035
    %v2121 = vunpack.c.l.b16 %v2036
    %v2122 = vunpack.c.h.b16 %v2036
    %v2123 = vunpack.c.l.b16 %v2037
    %v2124 = vunpack.c.h.b16 %v2037
    %v2125 = vunpack.c.l.b16 %v2038
    %v2126 = vunpack.c.h.b16 %v2038
    %v2127 = vunpack.c.l.b16 %v2039
    %v2128 = vunpack.c.h.b16 %v2039
    %v2129 = vunpack.c.l.b16 %v2040
    %v2130 = vunpack.c.h.b16 %v2040
    %v2131 = vunpack.c.l.b16 %v2041
    %v2132 = vunpack.c.h.b16 %v2041
    %v2133 = vunpack.c.l.b16 %v2042
    %v2134 = vunpack.c.h.b16 %v2042
    %v2135 = vunpack.c.l.b16 %v2043
    %v2136 = vunpack.c.h.b16 %v2043
    %v2137 = vunpack.c.l.b16 %v2044
    %v2138 = vunpack.c.h.b16 %v2044
    %v2139 = vunpack.c.l.b16 %v2045
    %v2140 = vunpack.c.h.b16 %v2045
    %v2141 = vunpack.c.l.b16 %v2046
    %v2142 = vunpack.c.h.b16 %v2046
    %v2143 = vpack.c.b16 %v2081, %v2079
    %v2144 = vpack.c.b16 %v2082, %v2080
    %v2145 = vpack.c.b16 %v2085, %v2083
    %v2146 = vpack.c.b16 %v2086, %v2084
    %v2147 = vpack.c.b16 %v2089, %v2087
    %v2148 = vpack.c.b16 %v2090, %v2088
    %v2149 = vpack.c.b16 %v2093, %v2091
    %v2150 = vpack.c.b16 %v2094, %v2092
    %v2151 = vpack.c.b16 %v2097, %v2095
    %v2152 = vpack.c.b16 %v2098, %v2096
    %v2153 = vpack.c.b16 %v2101, %v2099
    %v2154 = vpack.c.b16 %v2102, %v2100
    %v2155 = vpack.c.b16 %v2105, %v2103
    %v2156 = vpack.c.b16 %v2106, %v2104
    %v2157 = vpack.c.b16 %v2109, %v2107
    %v2158 = vpack.c.b16 %v2110, %v2108
    %v2159 = vpack.c.b16 %v2113, %v2111
    %v2160 = vpack.c.b16 %v2114, %v2112
    %v2161 = vpack.c.b16 %v2117, %v2115
    %v2162 = vpack.c.b16 %v2118, %v2116
    %v2163 = vpack.c.b16 %v2121, %v2119
    %v2164 = vpack.c.b16 %v2122, %v2120
    %v2165 = vpack.c.b16 %v2125, %v2123
    %v2166 = vpack.c.b16 %v2126, %v2124
    %v2167 = vpack.c.b16 %v2129, %v2127
    %v2168 = vpack.c.b16 %v2130, %v2128
    %v2169 = vpack.c.b16 %v2133, %v2131
    %v2170 = vpack.c.b16 %v2134, %v2132
    %v2171 = vpack.c.b16 %v2137, %v2135
    %v2172 = vpack.c.b16 %v2138, %v2136
    %v2173 = vpack.c.b16 %v2141, %v2139
    %v2174 = vpack.c.b16 %v2142, %v2140
    %2207 = vmatprep.subr.bf16.mxu0 %v2158
    %2208 = vmatpush1.bf16.msra.mxu0 %v2157
    %2209 = vmatprep.subr.bf16.mxu0 %v2156
    %2210 = vmatpush1.bf16.msra.mxu0 %v2155
    %2211 = vmatprep.subr.bf16.mxu0 %v2154
    %2212 = vmatpush1.bf16.msra.mxu0 %v2153
    %2213 = vmatprep.subr.bf16.mxu0 %v2152
    %2214 = vmatpush1.bf16.msra.mxu0 %v2151
    %2215 = vmatprep.subr.bf16.mxu0 %v2150
    %2216 = vmatpush1.bf16.msra.mxu0 %v2149
    %2217 = vmatprep.subr.bf16.mxu0 %v2148
    %2218 = vmatpush1.bf16.msra.mxu0 %v2147
    %2219 = vmatprep.subr.bf16.mxu0 %v2146
    %2220 = vmatpush1.bf16.msra.mxu0 %v2145
    %2221 = vmatprep.subr.bf16.mxu0 %v2144
    %2222 = vmatpush1.bf16.msra.mxu0 %v2143
    %2223 = vmatprep.subr.bf16.mxu0 %v2174
    %2224 = vmatpush2.bf16.msra.mxu0 %v2173
    %2225 = vmatprep.subr.bf16.mxu0 %v2172
    %2226 = vmatpush2.bf16.msra.mxu0 %v2171
    %2227 = vmatprep.subr.bf16.mxu0 %v2170
    %2228 = vmatpush2.bf16.msra.mxu0 %v2169
    %2229 = vmatprep.subr.bf16.mxu0 %v2168
    %2230 = vmatpush2.bf16.msra.mxu0 %v2167
    %2231 = vmatprep.subr.bf16.mxu0 %v2166
    %2232 = vmatpush2.bf16.msra.mxu0 %v2165
    %2233 = vmatprep.subr.bf16.mxu0 %v2164
    %2234 = vmatpush2.bf16.msra.mxu0 %v2163
    %2235 = vmatprep.subr.bf16.mxu0 %v2162
    %2236 = vmatpush2.bf16.msra.mxu0 %v2161
    %2237 = vmatprep.subr.bf16.mxu0 %v2160
    %2238 = vmatpush2.bf16.msra.mxu0 %v2159
    %2239 = vmatprep.mubr.bf16.mxu0 %v2014
    %2240 = vmatmul.mubr.bf16.gmra.mxu0 %v2013
    %v2241 = vpop.f32.mrf.mxu0
    %v2242 = vadd.f32 0.0, %v2241
    %v2243 = vpop.f32.mrf.mxu0
    %v2244 = vadd.f32 0.0, %v2243
    %v2245 = vpop.f32.mrf.mxu0
    %v2246 = vpop.f32.mrf.mxu0
    %2247 = vdwg.mxu0
    %v2249 = vlaneseq
    %v2250 = vshrl.u32 %v2249, 7
    %v2251 = vsub.s32 0, %v2250
    %v2252 = vrot.slane %v1961, %v2251
    %v2253 = vlaneseq
    %v2254 = vshrl.u32 %v2253, 7
    %v2255 = vsub.s32 1, %v2254
    %v2256 = vrot.slane %v1961, %v2255
    %v2259 = vadd.f32 %v2252, %v2242
    %v2260 = vadd.f32 %v2256, %v2244
    %s2261 = scalar_lea.vmem [#allocation14], 4
    %v2262 = vld [vmem:[%s2261] sm:$0xf]
    %v2264 = vsel %vm1387, %v2262, 0
    %2266 = vmatprep.subr.bf16.mxu0 0
    %2267 = vmatpush1.bf16.msra.mxu0 0
    %2268 = vmatprep.subr.bf16.mxu0 0
    %2269 = vmatpush1.bf16.msra.mxu0 0
    %2270 = vmatprep.subr.bf16.mxu0 0
    %2271 = vmatpush1.bf16.msra.mxu0 0
    %2272 = vmatprep.subr.bf16.mxu0 0
    %2273 = vmatpush1.bf16.msra.mxu0 0
    %2274 = vmatprep.subr.bf16.mxu0 0
    %2275 = vmatpush1.bf16.msra.mxu0 0
    %2276 = vmatprep.subr.bf16.mxu0 0
    %2277 = vmatpush1.bf16.msra.mxu0 0
    %2278 = vmatprep.subr.bf16.mxu0 0
    %2279 = vmatpush1.bf16.msra.mxu0 0
    %2280 = vmatprep.subr.bf16.mxu0 %v1970
    %2281 = vmatpush1.bf16.msra.mxu0 %v1967
    %2282 = vmatprep.subr.bf16.mxu0 0
    %2283 = vmatpush2.bf16.msra.mxu0 0
    %2284 = vmatprep.subr.bf16.mxu0 0
    %2285 = vmatpush2.bf16.msra.mxu0 0
    %2286 = vmatprep.subr.bf16.mxu0 0
    %2287 = vmatpush2.bf16.msra.mxu0 0
    %2288 = vmatprep.subr.bf16.mxu0 0
    %2289 = vmatpush2.bf16.msra.mxu0 0
    %2290 = vmatprep.subr.bf16.mxu0 0
    %2291 = vmatpush2.bf16.msra.mxu0 0
    %2292 = vmatprep.subr.bf16.mxu0 0
    %2293 = vmatpush2.bf16.msra.mxu0 0
    %2294 = vmatprep.subr.bf16.mxu0 0
    %2295 = vmatpush2.bf16.msra.mxu0 0
    %2296 = vmatprep.subr.bf16.mxu0 0
    %2297 = vmatpush2.bf16.msra.mxu0 0
    %2298 = vmatprep.mubr.bf16.mxu0 0
    %2299 = vmatmul.mubr.bf16.gmra.mxu0 %v2264
    %v2300 = vpop.f32.mrf.mxu0
    %v2301 = vadd.f32 0.0, %v2300
    %v2302 = vpop.f32.mrf.mxu0
    %v2303 = vadd.f32 0.0, %v2302
    %v2304 = vpop.f32.mrf.mxu0
    %v2305 = vpop.f32.mrf.mxu0
    %2306 = vdwg.mxu0
    %v2307 = vpack.c.bf16 %v2301, %v2301
    %v2308 = vpack.c.bf16 %v2303, %v2303
    %s2309 = scalar_lea.vmem [#allocation16], 256
    %v2310 = vld [vmem:[%s2309] sm:$0xff]
    %v2311 = vld [vmem:[%s2309 + $0x8] sm:$0xff]
    %v2312 = vld [vmem:[%s2309 + $0x10] sm:$0xff]
    %v2313 = vld [vmem:[%s2309 + $0x18] sm:$0xff]
    %v2314 = vld [vmem:[%s2309 + $0x20] sm:$0xff]
    %v2315 = vld [vmem:[%s2309 + $0x28] sm:$0xff]
    %v2316 = vld [vmem:[%s2309 + $0x30] sm:$0xff]
    %v2317 = vld [vmem:[%s2309 + $0x38] sm:$0xff]
    %v2318 = vld [vmem:[%s2309 + $0x40] sm:$0xff]
    %v2319 = vld [vmem:[%s2309 + $0x48] sm:$0xff]
    %v2320 = vld [vmem:[%s2309 + $0x50] sm:$0xff]
    %v2321 = vld [vmem:[%s2309 + $0x58] sm:$0xff]
    %v2322 = vld [vmem:[%s2309 + $0x60] sm:$0xff]
    %v2323 = vld [vmem:[%s2309 + $0x68] sm:$0xff]
    %v2324 = vld [vmem:[%s2309 + $0x70] sm:$0xff]
    %v2325 = vld [vmem:[%s2309 + $0x78] sm:$0xff]
    %v2326 = vld [vmem:[%s2309 + $0x80] sm:$0xff]
    %v2327 = vld [vmem:[%s2309 + $0x88] sm:$0xff]
    %v2328 = vld [vmem:[%s2309 + $0x90] sm:$0xff]
    %v2329 = vld [vmem:[%s2309 + $0x98] sm:$0xff]
    %v2330 = vld [vmem:[%s2309 + $0xa0] sm:$0xff]
    %v2331 = vld [vmem:[%s2309 + $0xa8] sm:$0xff]
    %v2332 = vld [vmem:[%s2309 + $0xb0] sm:$0xff]
    %v2333 = vld [vmem:[%s2309 + $0xb8] sm:$0xff]
    %v2334 = vld [vmem:[%s2309 + $0xc0] sm:$0xff]
    %v2335 = vld [vmem:[%s2309 + $0xc8] sm:$0xff]
    %v2336 = vld [vmem:[%s2309 + $0xd0] sm:$0xff]
    %v2337 = vld [vmem:[%s2309 + $0xd8] sm:$0xff]
    %v2338 = vld [vmem:[%s2309 + $0xe0] sm:$0xff]
    %v2339 = vld [vmem:[%s2309 + $0xe8] sm:$0xff]
    %v2340 = vld [vmem:[%s2309 + $0xf0] sm:$0xff]
    %v2341 = vld [vmem:[%s2309 + $0xf8] sm:$0xff]
    %v2374 = vunpack.c.l.b16 %v2310
    %v2375 = vunpack.c.h.b16 %v2310
    %v2376 = vunpack.c.l.b16 %v2311
    %v2377 = vunpack.c.h.b16 %v2311
    %v2378 = vunpack.c.l.b16 %v2312
    %v2379 = vunpack.c.h.b16 %v2312
    %v2380 = vunpack.c.l.b16 %v2313
    %v2381 = vunpack.c.h.b16 %v2313
    %v2382 = vunpack.c.l.b16 %v2314
    %v2383 = vunpack.c.h.b16 %v2314
    %v2384 = vunpack.c.l.b16 %v2315
    %v2385 = vunpack.c.h.b16 %v2315
    %v2386 = vunpack.c.l.b16 %v2316
    %v2387 = vunpack.c.h.b16 %v2316
    %v2388 = vunpack.c.l.b16 %v2317
    %v2389 = vunpack.c.h.b16 %v2317
    %v2390 = vunpack.c.l.b16 %v2318
    %v2391 = vunpack.c.h.b16 %v2318
    %v2392 = vunpack.c.l.b16 %v2319
    %v2393 = vunpack.c.h.b16 %v2319
    %v2394 = vunpack.c.l.b16 %v2320
    %v2395 = vunpack.c.h.b16 %v2320
    %v2396 = vunpack.c.l.b16 %v2321
    %v2397 = vunpack.c.h.b16 %v2321
    %v2398 = vunpack.c.l.b16 %v2322
    %v2399 = vunpack.c.h.b16 %v2322
    %v2400 = vunpack.c.l.b16 %v2323
    %v2401 = vunpack.c.h.b16 %v2323
    %v2402 = vunpack.c.l.b16 %v2324
    %v2403 = vunpack.c.h.b16 %v2324
    %v2404 = vunpack.c.l.b16 %v2325
    %v2405 = vunpack.c.h.b16 %v2325
    %v2406 = vunpack.c.l.b16 %v2326
    %v2407 = vunpack.c.h.b16 %v2326
    %v2408 = vunpack.c.l.b16 %v2327
    %v2409 = vunpack.c.h.b16 %v2327
    %v2410 = vunpack.c.l.b16 %v2328
    %v2411 = vunpack.c.h.b16 %v2328
    %v2412 = vunpack.c.l.b16 %v2329
    %v2413 = vunpack.c.h.b16 %v2329
    %v2414 = vunpack.c.l.b16 %v2330
    %v2415 = vunpack.c.h.b16 %v2330
    %v2416 = vunpack.c.l.b16 %v2331
    %v2417 = vunpack.c.h.b16 %v2331
    %v2418 = vunpack.c.l.b16 %v2332
    %v2419 = vunpack.c.h.b16 %v2332
    %v2420 = vunpack.c.l.b16 %v2333
    %v2421 = vunpack.c.h.b16 %v2333
    %v2422 = vunpack.c.l.b16 %v2334
    %v2423 = vunpack.c.h.b16 %v2334
    %v2424 = vunpack.c.l.b16 %v2335
    %v2425 = vunpack.c.h.b16 %v2335
    %v2426 = vunpack.c.l.b16 %v2336
    %v2427 = vunpack.c.h.b16 %v2336
    %v2428 = vunpack.c.l.b16 %v2337
    %v2429 = vunpack.c.h.b16 %v2337
    %v2430 = vunpack.c.l.b16 %v2338
    %v2431 = vunpack.c.h.b16 %v2338
    %v2432 = vunpack.c.l.b16 %v2339
    %v2433 = vunpack.c.h.b16 %v2339
    %v2434 = vunpack.c.l.b16 %v2340
    %v2435 = vunpack.c.h.b16 %v2340
    %v2436 = vunpack.c.l.b16 %v2341
    %v2437 = vunpack.c.h.b16 %v2341
    %v2438 = vpack.c.b16 %v2376, %v2374
    %v2439 = vpack.c.b16 %v2377, %v2375
    %v2440 = vpack.c.b16 %v2380, %v2378
    %v2441 = vpack.c.b16 %v2381, %v2379
    %v2442 = vpack.c.b16 %v2384, %v2382
    %v2443 = vpack.c.b16 %v2385, %v2383
    %v2444 = vpack.c.b16 %v2388, %v2386
    %v2445 = vpack.c.b16 %v2389, %v2387
    %v2446 = vpack.c.b16 %v2392, %v2390
    %v2447 = vpack.c.b16 %v2393, %v2391
    %v2448 = vpack.c.b16 %v2396, %v2394
    %v2449 = vpack.c.b16 %v2397, %v2395
    %v2450 = vpack.c.b16 %v2400, %v2398
    %v2451 = vpack.c.b16 %v2401, %v2399
    %v2452 = vpack.c.b16 %v2404, %v2402
    %v2453 = vpack.c.b16 %v2405, %v2403
    %v2454 = vpack.c.b16 %v2408, %v2406
    %v2455 = vpack.c.b16 %v2409, %v2407
    %v2456 = vpack.c.b16 %v2412, %v2410
    %v2457 = vpack.c.b16 %v2413, %v2411
    %v2458 = vpack.c.b16 %v2416, %v2414
    %v2459 = vpack.c.b16 %v2417, %v2415
    %v2460 = vpack.c.b16 %v2420, %v2418
    %v2461 = vpack.c.b16 %v2421, %v2419
    %v2462 = vpack.c.b16 %v2424, %v2422
    %v2463 = vpack.c.b16 %v2425, %v2423
    %v2464 = vpack.c.b16 %v2428, %v2426
    %v2465 = vpack.c.b16 %v2429, %v2427
    %v2466 = vpack.c.b16 %v2432, %v2430
    %v2467 = vpack.c.b16 %v2433, %v2431
    %v2468 = vpack.c.b16 %v2436, %v2434
    %v2469 = vpack.c.b16 %v2437, %v2435
    %2502 = vmatprep.subr.bf16.mxu0 %v2453
    %2503 = vmatpush1.bf16.msra.mxu0 %v2452
    %2504 = vmatprep.subr.bf16.mxu0 %v2451
    %2505 = vmatpush1.bf16.msra.mxu0 %v2450
    %2506 = vmatprep.subr.bf16.mxu0 %v2449
    %2507 = vmatpush1.bf16.msra.mxu0 %v2448
    %2508 = vmatprep.subr.bf16.mxu0 %v2447
    %2509 = vmatpush1.bf16.msra.mxu0 %v2446
    %2510 = vmatprep.subr.bf16.mxu0 %v2445
    %2511 = vmatpush1.bf16.msra.mxu0 %v2444
    %2512 = vmatprep.subr.bf16.mxu0 %v2443
    %2513 = vmatpush1.bf16.msra.mxu0 %v2442
    %2514 = vmatprep.subr.bf16.mxu0 %v2441
    %2515 = vmatpush1.bf16.msra.mxu0 %v2440
    %2516 = vmatprep.subr.bf16.mxu0 %v2439
    %2517 = vmatpush1.bf16.msra.mxu0 %v2438
    %2518 = vmatprep.subr.bf16.mxu0 %v2469
    %2519 = vmatpush2.bf16.msra.mxu0 %v2468
    %2520 = vmatprep.subr.bf16.mxu0 %v2467
    %2521 = vmatpush2.bf16.msra.mxu0 %v2466
    %2522 = vmatprep.subr.bf16.mxu0 %v2465
    %2523 = vmatpush2.bf16.msra.mxu0 %v2464
    %2524 = vmatprep.subr.bf16.mxu0 %v2463
    %2525 = vmatpush2.bf16.msra.mxu0 %v2462
    %2526 = vmatprep.subr.bf16.mxu0 %v2461
    %2527 = vmatpush2.bf16.msra.mxu0 %v2460
    %2528 = vmatprep.subr.bf16.mxu0 %v2459
    %2529 = vmatpush2.bf16.msra.mxu0 %v2458
    %2530 = vmatprep.subr.bf16.mxu0 %v2457
    %2531 = vmatpush2.bf16.msra.mxu0 %v2456
    %2532 = vmatprep.subr.bf16.mxu0 %v2455
    %2533 = vmatpush2.bf16.msra.mxu0 %v2454
    %2534 = vmatprep.mubr.bf16.mxu0 %v2308
    %2535 = vmatmul.mubr.bf16.gmra.mxu0 %v2307
    %v2536 = vpop.f32.mrf.mxu0
    %v2537 = vadd.f32 0.0, %v2536
    %v2538 = vpop.f32.mrf.mxu0
    %v2539 = vadd.f32 0.0, %v2538
    %v2540 = vpop.f32.mrf.mxu0
    %v2541 = vpop.f32.mrf.mxu0
    %2542 = vdwg.mxu0
    %v2543 = vadd.f32 %v2259, %v2537
    %v2544 = vadd.f32 %v2260, %v2539
    %s2545 = scalar_lea.vmem [#allocation14], 8
    %v2546 = vld [vmem:[%s2545] sm:$0xf]
    %v2548 = vsel %vm1387, %v2546, 0
    %2550 = vmatprep.subr.bf16.mxu0 0
    %2551 = vmatpush1.bf16.msra.mxu0 0
    %2552 = vmatprep.subr.bf16.mxu0 0
    %2553 = vmatpush1.bf16.msra.mxu0 0
    %2554 = vmatprep.subr.bf16.mxu0 0
    %2555 = vmatpush1.bf16.msra.mxu0 0
    %2556 = vmatprep.subr.bf16.mxu0 0
    %2557 = vmatpush1.bf16.msra.mxu0 0
    %2558 = vmatprep.subr.bf16.mxu0 0
    %2559 = vmatpush1.bf16.msra.mxu0 0
    %2560 = vmatprep.subr.bf16.mxu0 0
    %2561 = vmatpush1.bf16.msra.mxu0 0
    %2562 = vmatprep.subr.bf16.mxu0 0
    %2563 = vmatpush1.bf16.msra.mxu0 0
    %2564 = vmatprep.subr.bf16.mxu0 %v1970
    %2565 = vmatpush1.bf16.msra.mxu0 %v1967
    %2566 = vmatprep.subr.bf16.mxu0 0
    %2567 = vmatpush2.bf16.msra.mxu0 0
    %2568 = vmatprep.subr.bf16.mxu0 0
    %2569 = vmatpush2.bf16.msra.mxu0 0
    %2570 = vmatprep.subr.bf16.mxu0 0
    %2571 = vmatpush2.bf16.msra.mxu0 0
    %2572 = vmatprep.subr.bf16.mxu0 0
    %2573 = vmatpush2.bf16.msra.mxu0 0
    %2574 = vmatprep.subr.bf16.mxu0 0
    %2575 = vmatpush2.bf16.msra.mxu0 0
    %2576 = vmatprep.subr.bf16.mxu0 0
    %2577 = vmatpush2.bf16.msra.mxu0 0
    %2578 = vmatprep.subr.bf16.mxu0 0
    %2579 = vmatpush2.bf16.msra.mxu0 0
    %2580 = vmatprep.subr.bf16.mxu0 0
    %2581 = vmatpush2.bf16.msra.mxu0 0
    %2582 = vmatprep.mubr.bf16.mxu0 0
    %2583 = vmatmul.mubr.bf16.gmra.mxu0 %v2548
    %v2584 = vpop.f32.mrf.mxu0
    %v2585 = vadd.f32 0.0, %v2584
    %v2586 = vpop.f32.mrf.mxu0
    %v2587 = vadd.f32 0.0, %v2586
    %v2588 = vpop.f32.mrf.mxu0
    %v2589 = vpop.f32.mrf.mxu0
    %2590 = vdwg.mxu0
    %v2591 = vpack.c.bf16 %v2585, %v2585
    %v2592 = vpack.c.bf16 %v2587, %v2587
    %s2593 = scalar_lea.vmem [#allocation16], 512
    %v2594 = vld [vmem:[%s2593] sm:$0xff]
    %v2595 = vld [vmem:[%s2593 + $0x8] sm:$0xff]
    %v2596 = vld [vmem:[%s2593 + $0x10] sm:$0xff]
    %v2597 = vld [vmem:[%s2593 + $0x18] sm:$0xff]
    %v2598 = vld [vmem:[%s2593 + $0x20] sm:$0xff]
    %v2599 = vld [vmem:[%s2593 + $0x28] sm:$0xff]
    %v2600 = vld [vmem:[%s2593 + $0x30] sm:$0xff]
    %v2601 = vld [vmem:[%s2593 + $0x38] sm:$0xff]
    %v2602 = vld [vmem:[%s2593 + $0x40] sm:$0xff]
    %v2603 = vld [vmem:[%s2593 + $0x48] sm:$0xff]
    %v2604 = vld [vmem:[%s2593 + $0x50] sm:$0xff]
    %v2605 = vld [vmem:[%s2593 + $0x58] sm:$0xff]
    %v2606 = vld [vmem:[%s2593 + $0x60] sm:$0xff]
    %v2607 = vld [vmem:[%s2593 + $0x68] sm:$0xff]
    %v2608 = vld [vmem:[%s2593 + $0x70] sm:$0xff]
    %v2609 = vld [vmem:[%s2593 + $0x78] sm:$0xff]
    %v2610 = vld [vmem:[%s2593 + $0x80] sm:$0xff]
    %v2611 = vld [vmem:[%s2593 + $0x88] sm:$0xff]
    %v2612 = vld [vmem:[%s2593 + $0x90] sm:$0xff]
    %v2613 = vld [vmem:[%s2593 + $0x98] sm:$0xff]
    %v2614 = vld [vmem:[%s2593 + $0xa0] sm:$0xff]
    %v2615 = vld [vmem:[%s2593 + $0xa8] sm:$0xff]
    %v2616 = vld [vmem:[%s2593 + $0xb0] sm:$0xff]
    %v2617 = vld [vmem:[%s2593 + $0xb8] sm:$0xff]
    %v2618 = vld [vmem:[%s2593 + $0xc0] sm:$0xff]
    %v2619 = vld [vmem:[%s2593 + $0xc8] sm:$0xff]
    %v2620 = vld [vmem:[%s2593 + $0xd0] sm:$0xff]
    %v2621 = vld [vmem:[%s2593 + $0xd8] sm:$0xff]
    %v2622 = vld [vmem:[%s2593 + $0xe0] sm:$0xff]
    %v2623 = vld [vmem:[%s2593 + $0xe8] sm:$0xff]
    %v2624 = vld [vmem:[%s2593 + $0xf0] sm:$0xff]
    %v2625 = vld [vmem:[%s2593 + $0xf8] sm:$0xff]
    %v2658 = vunpack.c.l.b16 %v2594
    %v2659 = vunpack.c.h.b16 %v2594
    %v2660 = vunpack.c.l.b16 %v2595
    %v2661 = vunpack.c.h.b16 %v2595
    %v2662 = vunpack.c.l.b16 %v2596
    %v2663 = vunpack.c.h.b16 %v2596
    %v2664 = vunpack.c.l.b16 %v2597
    %v2665 = vunpack.c.h.b16 %v2597
    %v2666 = vunpack.c.l.b16 %v2598
    %v2667 = vunpack.c.h.b16 %v2598
    %v2668 = vunpack.c.l.b16 %v2599
    %v2669 = vunpack.c.h.b16 %v2599
    %v2670 = vunpack.c.l.b16 %v2600
    %v2671 = vunpack.c.h.b16 %v2600
    %v2672 = vunpack.c.l.b16 %v2601
    %v2673 = vunpack.c.h.b16 %v2601
    %v2674 = vunpack.c.l.b16 %v2602
    %v2675 = vunpack.c.h.b16 %v2602
    %v2676 = vunpack.c.l.b16 %v2603
    %v2677 = vunpack.c.h.b16 %v2603
    %v2678 = vunpack.c.l.b16 %v2604
    %v2679 = vunpack.c.h.b16 %v2604
    %v2680 = vunpack.c.l.b16 %v2605
    %v2681 = vunpack.c.h.b16 %v2605
    %v2682 = vunpack.c.l.b16 %v2606
    %v2683 = vunpack.c.h.b16 %v2606
    %v2684 = vunpack.c.l.b16 %v2607
    %v2685 = vunpack.c.h.b16 %v2607
    %v2686 = vunpack.c.l.b16 %v2608
    %v2687 = vunpack.c.h.b16 %v2608
    %v2688 = vunpack.c.l.b16 %v2609
    %v2689 = vunpack.c.h.b16 %v2609
    %v2690 = vunpack.c.l.b16 %v2610
    %v2691 = vunpack.c.h.b16 %v2610
    %v2692 = vunpack.c.l.b16 %v2611
    %v2693 = vunpack.c.h.b16 %v2611
    %v2694 = vunpack.c.l.b16 %v2612
    %v2695 = vunpack.c.h.b16 %v2612
    %v2696 = vunpack.c.l.b16 %v2613
    %v2697 = vunpack.c.h.b16 %v2613
    %v2698 = vunpack.c.l.b16 %v2614
    %v2699 = vunpack.c.h.b16 %v2614
    %v2700 = vunpack.c.l.b16 %v2615
    %v2701 = vunpack.c.h.b16 %v2615
    %v2702 = vunpack.c.l.b16 %v2616
    %v2703 = vunpack.c.h.b16 %v2616
    %v2704 = vunpack.c.l.b16 %v2617
    %v2705 = vunpack.c.h.b16 %v2617
    %v2706 = vunpack.c.l.b16 %v2618
    %v2707 = vunpack.c.h.b16 %v2618
    %v2708 = vunpack.c.l.b16 %v2619
    %v2709 = vunpack.c.h.b16 %v2619
    %v2710 = vunpack.c.l.b16 %v2620
    %v2711 = vunpack.c.h.b16 %v2620
    %v2712 = vunpack.c.l.b16 %v2621
    %v2713 = vunpack.c.h.b16 %v2621
    %v2714 = vunpack.c.l.b16 %v2622
    %v2715 = vunpack.c.h.b16 %v2622
    %v2716 = vunpack.c.l.b16 %v2623
    %v2717 = vunpack.c.h.b16 %v2623
    %v2718 = vunpack.c.l.b16 %v2624
    %v2719 = vunpack.c.h.b16 %v2624
    %v2720 = vunpack.c.l.b16 %v2625
    %v2721 = vunpack.c.h.b16 %v2625
    %v2722 = vpack.c.b16 %v2660, %v2658
    %v2723 = vpack.c.b16 %v2661, %v2659
    %v2724 = vpack.c.b16 %v2664, %v2662
    %v2725 = vpack.c.b16 %v2665, %v2663
    %v2726 = vpack.c.b16 %v2668, %v2666
    %v2727 = vpack.c.b16 %v2669, %v2667
    %v2728 = vpack.c.b16 %v2672, %v2670
    %v2729 = vpack.c.b16 %v2673, %v2671
    %v2730 = vpack.c.b16 %v2676, %v2674
    %v2731 = vpack.c.b16 %v2677, %v2675
    %v2732 = vpack.c.b16 %v2680, %v2678
    %v2733 = vpack.c.b16 %v2681, %v2679
    %v2734 = vpack.c.b16 %v2684, %v2682
    %v2735 = vpack.c.b16 %v2685, %v2683
    %v2736 = vpack.c.b16 %v2688, %v2686
    %v2737 = vpack.c.b16 %v2689, %v2687
    %v2738 = vpack.c.b16 %v2692, %v2690
    %v2739 = vpack.c.b16 %v2693, %v2691
    %v2740 = vpack.c.b16 %v2696, %v2694
    %v2741 = vpack.c.b16 %v2697, %v2695
    %v2742 = vpack.c.b16 %v2700, %v2698
    %v2743 = vpack.c.b16 %v2701, %v2699
    %v2744 = vpack.c.b16 %v2704, %v2702
    %v2745 = vpack.c.b16 %v2705, %v2703
    %v2746 = vpack.c.b16 %v2708, %v2706
    %v2747 = vpack.c.b16 %v2709, %v2707
    %v2748 = vpack.c.b16 %v2712, %v2710
    %v2749 = vpack.c.b16 %v2713, %v2711
    %v2750 = vpack.c.b16 %v2716, %v2714
    %v2751 = vpack.c.b16 %v2717, %v2715
    %v2752 = vpack.c.b16 %v2720, %v2718
    %v2753 = vpack.c.b16 %v2721, %v2719
    %2786 = vmatprep.subr.bf16.mxu0 %v2737
    %2787 = vmatpush1.bf16.msra.mxu0 %v2736
    %2788 = vmatprep.subr.bf16.mxu0 %v2735
    %2789 = vmatpush1.bf16.msra.mxu0 %v2734
    %2790 = vmatprep.subr.bf16.mxu0 %v2733
    %2791 = vmatpush1.bf16.msra.mxu0 %v2732
    %2792 = vmatprep.subr.bf16.mxu0 %v2731
    %2793 = vmatpush1.bf16.msra.mxu0 %v2730
    %2794 = vmatprep.subr.bf16.mxu0 %v2729
    %2795 = vmatpush1.bf16.msra.mxu0 %v2728
    %2796 = vmatprep.subr.bf16.mxu0 %v2727
    %2797 = vmatpush1.bf16.msra.mxu0 %v2726
    %2798 = vmatprep.subr.bf16.mxu0 %v2725
    %2799 = vmatpush1.bf16.msra.mxu0 %v2724
    %2800 = vmatprep.subr.bf16.mxu0 %v2723
    %2801 = vmatpush1.bf16.msra.mxu0 %v2722
    %2802 = vmatprep.subr.bf16.mxu0 %v2753
    %2803 = vmatpush2.bf16.msra.mxu0 %v2752
    %2804 = vmatprep.subr.bf16.mxu0 %v2751
    %2805 = vmatpush2.bf16.msra.mxu0 %v2750
    %2806 = vmatprep.subr.bf16.mxu0 %v2749
    %2807 = vmatpush2.bf16.msra.mxu0 %v2748
    %2808 = vmatprep.subr.bf16.mxu0 %v2747
    %2809 = vmatpush2.bf16.msra.mxu0 %v2746
    %2810 = vmatprep.subr.bf16.mxu0 %v2745
    %2811 = vmatpush2.bf16.msra.mxu0 %v2744
    %2812 = vmatprep.subr.bf16.mxu0 %v2743
    %2813 = vmatpush2.bf16.msra.mxu0 %v2742
    %2814 = vmatprep.subr.bf16.mxu0 %v2741
    %2815 = vmatpush2.bf16.msra.mxu0 %v2740
    %2816 = vmatprep.subr.bf16.mxu0 %v2739
    %2817 = vmatpush2.bf16.msra.mxu0 %v2738
    %2818 = vmatprep.mubr.bf16.mxu0 %v2592
    %2819 = vmatmul.mubr.bf16.gmra.mxu0 %v2591
    %v2820 = vpop.f32.mrf.mxu0
    %v2821 = vadd.f32 0.0, %v2820
    %v2822 = vpop.f32.mrf.mxu0
    %v2823 = vadd.f32 0.0, %v2822
    %v2824 = vpop.f32.mrf.mxu0
    %v2825 = vpop.f32.mrf.mxu0
    %2826 = vdwg.mxu0
    %v2827 = vadd.f32 %v2543, %v2821
    %v2828 = vadd.f32 %v2544, %v2823
    %v2829 = vmax.f32 %v2827, 0.0
    %v2830 = vmax.f32 %v2828, 0.0
    %v2831 = vpack.c.bf16 %v2829, %v2829
    %v2832 = vpack.c.bf16 %v2830, %v2830
    %v2833 = vld [vmem:[%s17] sm:$0x3]
    %v2834 = vld [vmem:[%s15] sm:$0x1]
    %v2836 = vsel %vm1387, %v2834, 0
    %v2839 = vsel %vm276, %v2831, 0
    %v2842 = vsel %vm276, %v2832, 0
    %2844 = vmatprep.subr.bf16.mxu0 0
    %2845 = vmatpush1.bf16.msra.mxu0 0
    %2846 = vmatprep.subr.bf16.mxu0 0
    %2847 = vmatpush1.bf16.msra.mxu0 0
    %2848 = vmatprep.subr.bf16.mxu0 0
    %2849 = vmatpush1.bf16.msra.mxu0 0
    %2850 = vmatprep.subr.bf16.mxu0 0
    %2851 = vmatpush1.bf16.msra.mxu0 0
    %2852 = vmatprep.subr.bf16.mxu0 0
    %2853 = vmatpush1.bf16.msra.mxu0 0
    %2854 = vmatprep.subr.bf16.mxu0 0
    %2855 = vmatpush1.bf16.msra.mxu0 0
    %2856 = vmatprep.subr.bf16.mxu0 0
    %2857 = vmatpush1.bf16.msra.mxu0 0
    %2858 = vmatprep.subr.bf16.mxu0 %v2842
    %2859 = vmatpush1.bf16.msra.mxu0 %v2839
    %2860 = vmatprep.subr.bf16.mxu0 0
    %2861 = vmatpush2.bf16.msra.mxu0 0
    %2862 = vmatprep.subr.bf16.mxu0 0
    %2863 = vmatpush2.bf16.msra.mxu0 0
    %2864 = vmatprep.subr.bf16.mxu0 0
    %2865 = vmatpush2.bf16.msra.mxu0 0
    %2866 = vmatprep.subr.bf16.mxu0 0
    %2867 = vmatpush2.bf16.msra.mxu0 0
    %2868 = vmatprep.subr.bf16.mxu0 0
    %2869 = vmatpush2.bf16.msra.mxu0 0
    %2870 = vmatprep.subr.bf16.mxu0 0
    %2871 = vmatpush2.bf16.msra.mxu0 0
    %2872 = vmatprep.subr.bf16.mxu0 0
    %2873 = vmatpush2.bf16.msra.mxu0 0
    %2874 = vmatprep.subr.bf16.mxu0 0
    %2875 = vmatpush2.bf16.msra.mxu0 0
    %2876 = vmatprep.mubr.bf16.mxu0 0
    %2877 = vmatmul.mubr.bf16.gmra.mxu0 %v2836
    %v2878 = vpop.f32.mrf.mxu0
    %v2879 = vadd.f32 0.0, %v2878
    %v2880 = vpop.f32.mrf.mxu0
    %v2881 = vadd.f32 0.0, %v2880
    %v2882 = vpop.f32.mrf.mxu0
    %v2883 = vpop.f32.mrf.mxu0
    %2884 = vdwg.mxu0
    %v2885 = vpack.c.bf16 %v2879, %v2879
    %v2886 = vpack.c.bf16 %v2881, %v2881
    %v2887 = vld [vmem:[#allocation17] sm:$0xff]
    %v2888 = vld [vmem:[#allocation17 + $0x8] sm:$0xff]
    %v2889 = vld [vmem:[#allocation17 + $0x10] sm:$0xff]
    %v2890 = vld [vmem:[#allocation17 + $0x18] sm:$0xff]
    %v2891 = vld [vmem:[#allocation17 + $0x20] sm:$0xff]
    %v2892 = vld [vmem:[#allocation17 + $0x28] sm:$0xff]
    %v2893 = vld [vmem:[#allocation17 + $0x30] sm:$0xff]
    %v2894 = vld [vmem:[#allocation17 + $0x38] sm:$0xff]
    %v2895 = vld [vmem:[#allocation17 + $0x40] sm:$0xff]
    %v2896 = vld [vmem:[#allocation17 + $0x48] sm:$0xff]
    %v2897 = vld [vmem:[#allocation17 + $0x50] sm:$0xff]
    %v2898 = vld [vmem:[#allocation17 + $0x58] sm:$0xff]
    %v2899 = vld [vmem:[#allocation17 + $0x60] sm:$0xff]
    %v2900 = vld [vmem:[#allocation17 + $0x68] sm:$0xff]
    %v2901 = vld [vmem:[#allocation17 + $0x70] sm:$0xff]
    %v2902 = vld [vmem:[#allocation17 + $0x78] sm:$0xff]
    %v2903 = vld [vmem:[#allocation17 + $0x80] sm:$0xff]
    %v2904 = vld [vmem:[#allocation17 + $0x88] sm:$0xff]
    %v2905 = vld [vmem:[#allocation17 + $0x90] sm:$0xff]
    %v2906 = vld [vmem:[#allocation17 + $0x98] sm:$0xff]
    %v2907 = vld [vmem:[#allocation17 + $0xa0] sm:$0xff]
    %v2908 = vld [vmem:[#allocation17 + $0xa8] sm:$0xff]
    %v2909 = vld [vmem:[#allocation17 + $0xb0] sm:$0xff]
    %v2910 = vld [vmem:[#allocation17 + $0xb8] sm:$0xff]
    %v2911 = vld [vmem:[#allocation17 + $0xc0] sm:$0xff]
    %v2912 = vld [vmem:[#allocation17 + $0xc8] sm:$0xff]
    %v2913 = vld [vmem:[#allocation17 + $0xd0] sm:$0xff]
    %v2914 = vld [vmem:[#allocation17 + $0xd8] sm:$0xff]
    %v2915 = vld [vmem:[#allocation17 + $0xe0] sm:$0xff]
    %v2916 = vld [vmem:[#allocation17 + $0xe8] sm:$0xff]
    %v2917 = vld [vmem:[#allocation17 + $0xf0] sm:$0xff]
    %v2918 = vld [vmem:[#allocation17 + $0xf8] sm:$0xff]
    %v2951 = vunpack.c.l.b16 %v2887
    %v2952 = vunpack.c.h.b16 %v2887
    %v2953 = vunpack.c.l.b16 %v2888
    %v2954 = vunpack.c.h.b16 %v2888
    %v2955 = vunpack.c.l.b16 %v2889
    %v2956 = vunpack.c.h.b16 %v2889
    %v2957 = vunpack.c.l.b16 %v2890
    %v2958 = vunpack.c.h.b16 %v2890
    %v2959 = vunpack.c.l.b16 %v2891
    %v2960 = vunpack.c.h.b16 %v2891
    %v2961 = vunpack.c.l.b16 %v2892
    %v2962 = vunpack.c.h.b16 %v2892
    %v2963 = vunpack.c.l.b16 %v2893
    %v2964 = vunpack.c.h.b16 %v2893
    %v2965 = vunpack.c.l.b16 %v2894
    %v2966 = vunpack.c.h.b16 %v2894
    %v2967 = vunpack.c.l.b16 %v2895
    %v2968 = vunpack.c.h.b16 %v2895
    %v2969 = vunpack.c.l.b16 %v2896
    %v2970 = vunpack.c.h.b16 %v2896
    %v2971 = vunpack.c.l.b16 %v2897
    %v2972 = vunpack.c.h.b16 %v2897
    %v2973 = vunpack.c.l.b16 %v2898
    %v2974 = vunpack.c.h.b16 %v2898
    %v2975 = vunpack.c.l.b16 %v2899
    %v2976 = vunpack.c.h.b16 %v2899
    %v2977 = vunpack.c.l.b16 %v2900
    %v2978 = vunpack.c.h.b16 %v2900
    %v2979 = vunpack.c.l.b16 %v2901
    %v2980 = vunpack.c.h.b16 %v2901
    %v2981 = vunpack.c.l.b16 %v2902
    %v2982 = vunpack.c.h.b16 %v2902
    %v2983 = vunpack.c.l.b16 %v2903
    %v2984 = vunpack.c.h.b16 %v2903
    %v2985 = vunpack.c.l.b16 %v2904
    %v2986 = vunpack.c.h.b16 %v2904
    %v2987 = vunpack.c.l.b16 %v2905
    %v2988 = vunpack.c.h.b16 %v2905
    %v2989 = vunpack.c.l.b16 %v2906
    %v2990 = vunpack.c.h.b16 %v2906
    %v2991 = vunpack.c.l.b16 %v2907
    %v2992 = vunpack.c.h.b16 %v2907
    %v2993 = vunpack.c.l.b16 %v2908
    %v2994 = vunpack.c.h.b16 %v2908
    %v2995 = vunpack.c.l.b16 %v2909
    %v2996 = vunpack.c.h.b16 %v2909
    %v2997 = vunpack.c.l.b16 %v2910
    %v2998 = vunpack.c.h.b16 %v2910
    %v2999 = vunpack.c.l.b16 %v2911
    %v3000 = vunpack.c.h.b16 %v2911
    %v3001 = vunpack.c.l.b16 %v2912
    %v3002 = vunpack.c.h.b16 %v2912
    %v3003 = vunpack.c.l.b16 %v2913
    %v3004 = vunpack.c.h.b16 %v2913
    %v3005 = vunpack.c.l.b16 %v2914
    %v3006 = vunpack.c.h.b16 %v2914
    %v3007 = vunpack.c.l.b16 %v2915
    %v3008 = vunpack.c.h.b16 %v2915
    %v3009 = vunpack.c.l.b16 %v2916
    %v3010 = vunpack.c.h.b16 %v2916
    %v3011 = vunpack.c.l.b16 %v2917
    %v3012 = vunpack.c.h.b16 %v2917
    %v3013 = vunpack.c.l.b16 %v2918
    %v3014 = vunpack.c.h.b16 %v2918
    %v3015 = vpack.c.b16 %v2953, %v2951
    %v3016 = vpack.c.b16 %v2954, %v2952
    %v3017 = vpack.c.b16 %v2957, %v2955
    %v3018 = vpack.c.b16 %v2958, %v2956
    %v3019 = vpack.c.b16 %v2961, %v2959
    %v3020 = vpack.c.b16 %v2962, %v2960
    %v3021 = vpack.c.b16 %v2965, %v2963
    %v3022 = vpack.c.b16 %v2966, %v2964
    %v3023 = vpack.c.b16 %v2969, %v2967
    %v3024 = vpack.c.b16 %v2970, %v2968
    %v3025 = vpack.c.b16 %v2973, %v2971
    %v3026 = vpack.c.b16 %v2974, %v2972
    %v3027 = vpack.c.b16 %v2977, %v2975
    %v3028 = vpack.c.b16 %v2978, %v2976
    %v3029 = vpack.c.b16 %v2981, %v2979
    %v3030 = vpack.c.b16 %v2982, %v2980
    %v3031 = vpack.c.b16 %v2985, %v2983
    %v3032 = vpack.c.b16 %v2986, %v2984
    %v3033 = vpack.c.b16 %v2989, %v2987
    %v3034 = vpack.c.b16 %v2990, %v2988
    %v3035 = vpack.c.b16 %v2993, %v2991
    %v3036 = vpack.c.b16 %v2994, %v2992
    %v3037 = vpack.c.b16 %v2997, %v2995
    %v3038 = vpack.c.b16 %v2998, %v2996
    %v3039 = vpack.c.b16 %v3001, %v2999
    %v3040 = vpack.c.b16 %v3002, %v3000
    %v3041 = vpack.c.b16 %v3005, %v3003
    %v3042 = vpack.c.b16 %v3006, %v3004
    %v3043 = vpack.c.b16 %v3009, %v3007
    %v3044 = vpack.c.b16 %v3010, %v3008
    %v3045 = vpack.c.b16 %v3013, %v3011
    %v3046 = vpack.c.b16 %v3014, %v3012
    %3079 = vmatprep.subr.bf16.mxu0 %v3030
    %3080 = vmatpush1.bf16.msra.mxu0 %v3029
    %3081 = vmatprep.subr.bf16.mxu0 %v3028
    %3082 = vmatpush1.bf16.msra.mxu0 %v3027
    %3083 = vmatprep.subr.bf16.mxu0 %v3026
    %3084 = vmatpush1.bf16.msra.mxu0 %v3025
    %3085 = vmatprep.subr.bf16.mxu0 %v3024
    %3086 = vmatpush1.bf16.msra.mxu0 %v3023
    %3087 = vmatprep.subr.bf16.mxu0 %v3022
    %3088 = vmatpush1.bf16.msra.mxu0 %v3021
    %3089 = vmatprep.subr.bf16.mxu0 %v3020
    %3090 = vmatpush1.bf16.msra.mxu0 %v3019
    %3091 = vmatprep.subr.bf16.mxu0 %v3018
    %3092 = vmatpush1.bf16.msra.mxu0 %v3017
    %3093 = vmatprep.subr.bf16.mxu0 %v3016
    %3094 = vmatpush1.bf16.msra.mxu0 %v3015
    %3095 = vmatprep.subr.bf16.mxu0 %v3046
    %3096 = vmatpush2.bf16.msra.mxu0 %v3045
    %3097 = vmatprep.subr.bf16.mxu0 %v3044
    %3098 = vmatpush2.bf16.msra.mxu0 %v3043
    %3099 = vmatprep.subr.bf16.mxu0 %v3042
    %3100 = vmatpush2.bf16.msra.mxu0 %v3041
    %3101 = vmatprep.subr.bf16.mxu0 %v3040
    %3102 = vmatpush2.bf16.msra.mxu0 %v3039
    %3103 = vmatprep.subr.bf16.mxu0 %v3038
    %3104 = vmatpush2.bf16.msra.mxu0 %v3037
    %3105 = vmatprep.subr.bf16.mxu0 %v3036
    %3106 = vmatpush2.bf16.msra.mxu0 %v3035
    %3107 = vmatprep.subr.bf16.mxu0 %v3034
    %3108 = vmatpush2.bf16.msra.mxu0 %v3033
    %3109 = vmatprep.subr.bf16.mxu0 %v3032
    %3110 = vmatpush2.bf16.msra.mxu0 %v3031
    %3111 = vmatprep.mubr.bf16.mxu0 %v2886
    %3112 = vmatmul.mubr.bf16.gmra.mxu0 %v2885
    %v3113 = vpop.f32.mrf.mxu0
    %v3114 = vadd.f32 0.0, %v3113
    %v3115 = vpop.f32.mrf.mxu0
    %v3116 = vadd.f32 0.0, %v3115
    %v3117 = vpop.f32.mrf.mxu0
    %v3118 = vpop.f32.mrf.mxu0
    %3119 = vdwg.mxu0
    %v3121 = vlaneseq
    %v3122 = vshrl.u32 %v3121, 7
    %v3123 = vsub.s32 0, %v3122
    %v3124 = vrot.slane %v2833, %v3123
    %v3125 = vlaneseq
    %v3126 = vshrl.u32 %v3125, 7
    %v3127 = vsub.s32 1, %v3126
    %v3128 = vrot.slane %v2833, %v3127
    %v3131 = vadd.f32 %v3124, %v3114
    %v3132 = vadd.f32 %v3128, %v3116
    %s3133 = scalar_lea.vmem %s15, 1
    %v3134 = vld [vmem:[%s3133] sm:$0x1]
    %v3136 = vsel %vm1387, %v3134, 0
    %3138 = vmatprep.subr.bf16.mxu0 0
    %3139 = vmatpush1.bf16.msra.mxu0 0
    %3140 = vmatprep.subr.bf16.mxu0 0
    %3141 = vmatpush1.bf16.msra.mxu0 0
    %3142 = vmatprep.subr.bf16.mxu0 0
    %3143 = vmatpush1.bf16.msra.mxu0 0
    %3144 = vmatprep.subr.bf16.mxu0 0
    %3145 = vmatpush1.bf16.msra.mxu0 0
    %3146 = vmatprep.subr.bf16.mxu0 0
    %3147 = vmatpush1.bf16.msra.mxu0 0
    %3148 = vmatprep.subr.bf16.mxu0 0
    %3149 = vmatpush1.bf16.msra.mxu0 0
    %3150 = vmatprep.subr.bf16.mxu0 0
    %3151 = vmatpush1.bf16.msra.mxu0 0
    %3152 = vmatprep.subr.bf16.mxu0 %v2842
    %3153 = vmatpush1.bf16.msra.mxu0 %v2839
    %3154 = vmatprep.subr.bf16.mxu0 0
    %3155 = vmatpush2.bf16.msra.mxu0 0
    %3156 = vmatprep.subr.bf16.mxu0 0
    %3157 = vmatpush2.bf16.msra.mxu0 0
    %3158 = vmatprep.subr.bf16.mxu0 0
    %3159 = vmatpush2.bf16.msra.mxu0 0
    %3160 = vmatprep.subr.bf16.mxu0 0
    %3161 = vmatpush2.bf16.msra.mxu0 0
    %3162 = vmatprep.subr.bf16.mxu0 0
    %3163 = vmatpush2.bf16.msra.mxu0 0
    %3164 = vmatprep.subr.bf16.mxu0 0
    %3165 = vmatpush2.bf16.msra.mxu0 0
    %3166 = vmatprep.subr.bf16.mxu0 0
    %3167 = vmatpush2.bf16.msra.mxu0 0
    %3168 = vmatprep.subr.bf16.mxu0 0
    %3169 = vmatpush2.bf16.msra.mxu0 0
    %3170 = vmatprep.mubr.bf16.mxu0 0
    %3171 = vmatmul.mubr.bf16.gmra.mxu0 %v3136
    %v3172 = vpop.f32.mrf.mxu0
    %v3173 = vadd.f32 0.0, %v3172
    %v3174 = vpop.f32.mrf.mxu0
    %v3175 = vadd.f32 0.0, %v3174
    %v3176 = vpop.f32.mrf.mxu0
    %v3177 = vpop.f32.mrf.mxu0
    %3178 = vdwg.mxu0
    %v3179 = vpack.c.bf16 %v3173, %v3173
    %v3180 = vpack.c.bf16 %v3175, %v3175
    %s3181 = scalar_lea.vmem [#allocation17], 256
    %v3182 = vld [vmem:[%s3181] sm:$0xff]
    %v3183 = vld [vmem:[%s3181 + $0x8] sm:$0xff]
    %v3184 = vld [vmem:[%s3181 + $0x10] sm:$0xff]
    %v3185 = vld [vmem:[%s3181 + $0x18] sm:$0xff]
    %v3186 = vld [vmem:[%s3181 + $0x20] sm:$0xff]
    %v3187 = vld [vmem:[%s3181 + $0x28] sm:$0xff]
    %v3188 = vld [vmem:[%s3181 + $0x30] sm:$0xff]
    %v3189 = vld [vmem:[%s3181 + $0x38] sm:$0xff]
    %v3190 = vld [vmem:[%s3181 + $0x40] sm:$0xff]
    %v3191 = vld [vmem:[%s3181 + $0x48] sm:$0xff]
    %v3192 = vld [vmem:[%s3181 + $0x50] sm:$0xff]
    %v3193 = vld [vmem:[%s3181 + $0x58] sm:$0xff]
    %v3194 = vld [vmem:[%s3181 + $0x60] sm:$0xff]
    %v3195 = vld [vmem:[%s3181 + $0x68] sm:$0xff]
    %v3196 = vld [vmem:[%s3181 + $0x70] sm:$0xff]
    %v3197 = vld [vmem:[%s3181 + $0x78] sm:$0xff]
    %v3198 = vld [vmem:[%s3181 + $0x80] sm:$0xff]
    %v3199 = vld [vmem:[%s3181 + $0x88] sm:$0xff]
    %v3200 = vld [vmem:[%s3181 + $0x90] sm:$0xff]
    %v3201 = vld [vmem:[%s3181 + $0x98] sm:$0xff]
    %v3202 = vld [vmem:[%s3181 + $0xa0] sm:$0xff]
    %v3203 = vld [vmem:[%s3181 + $0xa8] sm:$0xff]
    %v3204 = vld [vmem:[%s3181 + $0xb0] sm:$0xff]
    %v3205 = vld [vmem:[%s3181 + $0xb8] sm:$0xff]
    %v3206 = vld [vmem:[%s3181 + $0xc0] sm:$0xff]
    %v3207 = vld [vmem:[%s3181 + $0xc8] sm:$0xff]
    %v3208 = vld [vmem:[%s3181 + $0xd0] sm:$0xff]
    %v3209 = vld [vmem:[%s3181 + $0xd8] sm:$0xff]
    %v3210 = vld [vmem:[%s3181 + $0xe0] sm:$0xff]
    %v3211 = vld [vmem:[%s3181 + $0xe8] sm:$0xff]
    %v3212 = vld [vmem:[%s3181 + $0xf0] sm:$0xff]
    %v3213 = vld [vmem:[%s3181 + $0xf8] sm:$0xff]
    %v3246 = vunpack.c.l.b16 %v3182
    %v3247 = vunpack.c.h.b16 %v3182
    %v3248 = vunpack.c.l.b16 %v3183
    %v3249 = vunpack.c.h.b16 %v3183
    %v3250 = vunpack.c.l.b16 %v3184
    %v3251 = vunpack.c.h.b16 %v3184
    %v3252 = vunpack.c.l.b16 %v3185
    %v3253 = vunpack.c.h.b16 %v3185
    %v3254 = vunpack.c.l.b16 %v3186
    %v3255 = vunpack.c.h.b16 %v3186
    %v3256 = vunpack.c.l.b16 %v3187
    %v3257 = vunpack.c.h.b16 %v3187
    %v3258 = vunpack.c.l.b16 %v3188
    %v3259 = vunpack.c.h.b16 %v3188
    %v3260 = vunpack.c.l.b16 %v3189
    %v3261 = vunpack.c.h.b16 %v3189
    %v3262 = vunpack.c.l.b16 %v3190
    %v3263 = vunpack.c.h.b16 %v3190
    %v3264 = vunpack.c.l.b16 %v3191
    %v3265 = vunpack.c.h.b16 %v3191
    %v3266 = vunpack.c.l.b16 %v3192
    %v3267 = vunpack.c.h.b16 %v3192
    %v3268 = vunpack.c.l.b16 %v3193
    %v3269 = vunpack.c.h.b16 %v3193
    %v3270 = vunpack.c.l.b16 %v3194
    %v3271 = vunpack.c.h.b16 %v3194
    %v3272 = vunpack.c.l.b16 %v3195
    %v3273 = vunpack.c.h.b16 %v3195
    %v3274 = vunpack.c.l.b16 %v3196
    %v3275 = vunpack.c.h.b16 %v3196
    %v3276 = vunpack.c.l.b16 %v3197
    %v3277 = vunpack.c.h.b16 %v3197
    %v3278 = vunpack.c.l.b16 %v3198
    %v3279 = vunpack.c.h.b16 %v3198
    %v3280 = vunpack.c.l.b16 %v3199
    %v3281 = vunpack.c.h.b16 %v3199
    %v3282 = vunpack.c.l.b16 %v3200
    %v3283 = vunpack.c.h.b16 %v3200
    %v3284 = vunpack.c.l.b16 %v3201
    %v3285 = vunpack.c.h.b16 %v3201
    %v3286 = vunpack.c.l.b16 %v3202
    %v3287 = vunpack.c.h.b16 %v3202
    %v3288 = vunpack.c.l.b16 %v3203
    %v3289 = vunpack.c.h.b16 %v3203
    %v3290 = vunpack.c.l.b16 %v3204
    %v3291 = vunpack.c.h.b16 %v3204
    %v3292 = vunpack.c.l.b16 %v3205
    %v3293 = vunpack.c.h.b16 %v3205
    %v3294 = vunpack.c.l.b16 %v3206
    %v3295 = vunpack.c.h.b16 %v3206
    %v3296 = vunpack.c.l.b16 %v3207
    %v3297 = vunpack.c.h.b16 %v3207
    %v3298 = vunpack.c.l.b16 %v3208
    %v3299 = vunpack.c.h.b16 %v3208
    %v3300 = vunpack.c.l.b16 %v3209
    %v3301 = vunpack.c.h.b16 %v3209
    %v3302 = vunpack.c.l.b16 %v3210
    %v3303 = vunpack.c.h.b16 %v3210
    %v3304 = vunpack.c.l.b16 %v3211
    %v3305 = vunpack.c.h.b16 %v3211
    %v3306 = vunpack.c.l.b16 %v3212
    %v3307 = vunpack.c.h.b16 %v3212
    %v3308 = vunpack.c.l.b16 %v3213
    %v3309 = vunpack.c.h.b16 %v3213
    %v3310 = vpack.c.b16 %v3248, %v3246
    %v3311 = vpack.c.b16 %v3249, %v3247
    %v3312 = vpack.c.b16 %v3252, %v3250
    %v3313 = vpack.c.b16 %v3253, %v3251
    %v3314 = vpack.c.b16 %v3256, %v3254
    %v3315 = vpack.c.b16 %v3257, %v3255
    %v3316 = vpack.c.b16 %v3260, %v3258
    %v3317 = vpack.c.b16 %v3261, %v3259
    %v3318 = vpack.c.b16 %v3264, %v3262
    %v3319 = vpack.c.b16 %v3265, %v3263
    %v3320 = vpack.c.b16 %v3268, %v3266
    %v3321 = vpack.c.b16 %v3269, %v3267
    %v3322 = vpack.c.b16 %v3272, %v3270
    %v3323 = vpack.c.b16 %v3273, %v3271
    %v3324 = vpack.c.b16 %v3276, %v3274
    %v3325 = vpack.c.b16 %v3277, %v3275
    %v3326 = vpack.c.b16 %v3280, %v3278
    %v3327 = vpack.c.b16 %v3281, %v3279
    %v3328 = vpack.c.b16 %v3284, %v3282
    %v3329 = vpack.c.b16 %v3285, %v3283
    %v3330 = vpack.c.b16 %v3288, %v3286
    %v3331 = vpack.c.b16 %v3289, %v3287
    %v3332 = vpack.c.b16 %v3292, %v3290
    %v3333 = vpack.c.b16 %v3293, %v3291
    %v3334 = vpack.c.b16 %v3296, %v3294
    %v3335 = vpack.c.b16 %v3297, %v3295
    %v3336 = vpack.c.b16 %v3300, %v3298
    %v3337 = vpack.c.b16 %v3301, %v3299
    %v3338 = vpack.c.b16 %v3304, %v3302
    %v3339 = vpack.c.b16 %v3305, %v3303
    %v3340 = vpack.c.b16 %v3308, %v3306
    %v3341 = vpack.c.b16 %v3309, %v3307
    %3374 = vmatprep.subr.bf16.mxu0 %v3325
    %3375 = vmatpush1.bf16.msra.mxu0 %v3324
    %3376 = vmatprep.subr.bf16.mxu0 %v3323
    %3377 = vmatpush1.bf16.msra.mxu0 %v3322
    %3378 = vmatprep.subr.bf16.mxu0 %v3321
    %3379 = vmatpush1.bf16.msra.mxu0 %v3320
    %3380 = vmatprep.subr.bf16.mxu0 %v3319
    %3381 = vmatpush1.bf16.msra.mxu0 %v3318
    %3382 = vmatprep.subr.bf16.mxu0 %v3317
    %3383 = vmatpush1.bf16.msra.mxu0 %v3316
    %3384 = vmatprep.subr.bf16.mxu0 %v3315
    %3385 = vmatpush1.bf16.msra.mxu0 %v3314
    %3386 = vmatprep.subr.bf16.mxu0 %v3313
    %3387 = vmatpush1.bf16.msra.mxu0 %v3312
    %3388 = vmatprep.subr.bf16.mxu0 %v3311
    %3389 = vmatpush1.bf16.msra.mxu0 %v3310
    %3390 = vmatprep.subr.bf16.mxu0 %v3341
    %3391 = vmatpush2.bf16.msra.mxu0 %v3340
    %3392 = vmatprep.subr.bf16.mxu0 %v3339
    %3393 = vmatpush2.bf16.msra.mxu0 %v3338
    %3394 = vmatprep.subr.bf16.mxu0 %v3337
    %3395 = vmatpush2.bf16.msra.mxu0 %v3336
    %3396 = vmatprep.subr.bf16.mxu0 %v3335
    %3397 = vmatpush2.bf16.msra.mxu0 %v3334
    %3398 = vmatprep.subr.bf16.mxu0 %v3333
    %3399 = vmatpush2.bf16.msra.mxu0 %v3332
    %3400 = vmatprep.subr.bf16.mxu0 %v3331
    %3401 = vmatpush2.bf16.msra.mxu0 %v3330
    %3402 = vmatprep.subr.bf16.mxu0 %v3329
    %3403 = vmatpush2.bf16.msra.mxu0 %v3328
    %3404 = vmatprep.subr.bf16.mxu0 %v3327
    %3405 = vmatpush2.bf16.msra.mxu0 %v3326
    %3406 = vmatprep.mubr.bf16.mxu0 %v3180
    %3407 = vmatmul.mubr.bf16.gmra.mxu0 %v3179
    %v3408 = vpop.f32.mrf.mxu0
    %v3409 = vadd.f32 0.0, %v3408
    %v3410 = vpop.f32.mrf.mxu0
    %v3411 = vadd.f32 0.0, %v3410
    %v3412 = vpop.f32.mrf.mxu0
    %v3413 = vpop.f32.mrf.mxu0
    %3414 = vdwg.mxu0
    %v3415 = vadd.f32 %v3131, %v3409
    %v3416 = vadd.f32 %v3132, %v3411
    %v3417 = vmax.f32 %v3415, 0.0
    %v3418 = vmax.f32 %v3416, 0.0
    %v3419 = vpack.c.bf16 %v3417, %v3417
    %v3420 = vpack.c.bf16 %v3418, %v3418
    %v3421 = vld [vmem:[%s18] sm:$0xf]
    %v3422 = vld [vmem:[%s18 + $0x4] sm:$0xf]
    %v3423 = vld [vmem:[%s18 + $0x8] sm:$0xf]
    %v3424 = vld [vmem:[%s18 + $0xc] sm:$0xf]
    %v3425 = vld [vmem:[%s18 + $0x10] sm:$0xf]
    %v3426 = vld [vmem:[%s18 + $0x14] sm:$0xf]
    %v3427 = vld [vmem:[%s18 + $0x18] sm:$0xf]
    %v3428 = vld [vmem:[%s18 + $0x1c] sm:$0xf]
    %v3429 = vld [vmem:[%s18 + $0x20] sm:$0xf]
    %v3430 = vld [vmem:[%s18 + $0x24] sm:$0xf]
    %v3431 = vld [vmem:[%s18 + $0x28] sm:$0xf]
    %v3432 = vld [vmem:[%s18 + $0x2c] sm:$0xf]
    %v3433 = vld [vmem:[%s18 + $0x30] sm:$0xf]
    %v3434 = vld [vmem:[%s18 + $0x34] sm:$0xf]
    %v3435 = vld [vmem:[%s18 + $0x38] sm:$0xf]
    %v3436 = vld [vmem:[%s18 + $0x3c] sm:$0xf]
    %v3437 = vld [vmem:[%s18 + $0x40] sm:$0xf]
    %v3438 = vld [vmem:[%s18 + $0x44] sm:$0xf]
    %v3439 = vld [vmem:[%s18 + $0x48] sm:$0xf]
    %v3440 = vld [vmem:[%s18 + $0x4c] sm:$0xf]
    %v3441 = vld [vmem:[%s18 + $0x50] sm:$0xf]
    %v3442 = vld [vmem:[%s18 + $0x54] sm:$0xf]
    %v3443 = vld [vmem:[%s18 + $0x58] sm:$0xf]
    %v3444 = vld [vmem:[%s18 + $0x5c] sm:$0xf]
    %v3445 = vld [vmem:[%s18 + $0x60] sm:$0xf]
    %v3446 = vld [vmem:[%s18 + $0x64] sm:$0xf]
    %v3447 = vld [vmem:[%s18 + $0x68] sm:$0xf]
    %v3448 = vld [vmem:[%s18 + $0x6c] sm:$0xf]
    %v3449 = vld [vmem:[%s18 + $0x70] sm:$0xf]
    %v3450 = vld [vmem:[%s18 + $0x74] sm:$0xf]
    %v3451 = vld [vmem:[%s18 + $0x78] sm:$0xf]
    %v3452 = vld [vmem:[%s18 + $0x7c] sm:$0xf]
    %v3453 = vld [vmem:[%s19] sm:$0x1]
    %v3455 = vlaneseq
    %v3456 = vshrl.u32 %v3455, 7
    %v3457 = vsub.s32 0, %v3456
    %v3458 = vrot.slane %v3453, %v3457
    %v3492 = vunpack.c.l.b16 %v3421
    %v3493 = vunpack.c.l.b16 %v3422
    %v3494 = vunpack.c.l.b16 %v3423
    %v3495 = vunpack.c.l.b16 %v3424
    %v3496 = vunpack.c.l.b16 %v3425
    %v3497 = vunpack.c.l.b16 %v3426
    %v3498 = vunpack.c.l.b16 %v3427
    %v3499 = vunpack.c.l.b16 %v3428
    %v3500 = vunpack.c.l.b16 %v3429
    %v3501 = vunpack.c.l.b16 %v3430
    %v3502 = vunpack.c.l.b16 %v3431
    %v3503 = vunpack.c.l.b16 %v3432
    %v3504 = vunpack.c.l.b16 %v3433
    %v3505 = vunpack.c.l.b16 %v3434
    %v3506 = vunpack.c.l.b16 %v3435
    %v3507 = vunpack.c.l.b16 %v3436
    %v3508 = vunpack.c.l.b16 %v3437
    %v3509 = vunpack.c.l.b16 %v3438
    %v3510 = vunpack.c.l.b16 %v3439
    %v3511 = vunpack.c.l.b16 %v3440
    %v3512 = vunpack.c.l.b16 %v3441
    %v3513 = vunpack.c.l.b16 %v3442
    %v3514 = vunpack.c.l.b16 %v3443
    %v3515 = vunpack.c.l.b16 %v3444
    %v3516 = vunpack.c.l.b16 %v3445
    %v3517 = vunpack.c.l.b16 %v3446
    %v3518 = vunpack.c.l.b16 %v3447
    %v3519 = vunpack.c.l.b16 %v3448
    %v3520 = vunpack.c.l.b16 %v3449
    %v3521 = vunpack.c.l.b16 %v3450
    %v3522 = vunpack.c.l.b16 %v3451
    %v3523 = vunpack.c.l.b16 %v3452
    %v3524 = vpack.c.b16 %v3493, %v3492
    %v3525 = vpack.c.b16 %v3495, %v3494
    %v3526 = vpack.c.b16 %v3497, %v3496
    %v3527 = vpack.c.b16 %v3499, %v3498
    %v3528 = vpack.c.b16 %v3501, %v3500
    %v3529 = vpack.c.b16 %v3503, %v3502
    %v3530 = vpack.c.b16 %v3505, %v3504
    %v3531 = vpack.c.b16 %v3507, %v3506
    %v3532 = vpack.c.b16 %v3509, %v3508
    %v3533 = vpack.c.b16 %v3511, %v3510
    %v3534 = vpack.c.b16 %v3513, %v3512
    %v3535 = vpack.c.b16 %v3515, %v3514
    %v3536 = vpack.c.b16 %v3517, %v3516
    %v3537 = vpack.c.b16 %v3519, %v3518
    %v3538 = vpack.c.b16 %v3521, %v3520
    %v3539 = vpack.c.b16 %v3523, %v3522
    %3556 = vmatprep.subr.bf16.mxu0 0
    %3557 = vmatpush1.bf16.msra.mxu0 %v3531
    %3558 = vmatprep.subr.bf16.mxu0 0
    %3559 = vmatpush1.bf16.msra.mxu0 %v3530
    %3560 = vmatprep.subr.bf16.mxu0 0
    %3561 = vmatpush1.bf16.msra.mxu0 %v3529
    %3562 = vmatprep.subr.bf16.mxu0 0
    %3563 = vmatpush1.bf16.msra.mxu0 %v3528
    %3564 = vmatprep.subr.bf16.mxu0 0
    %3565 = vmatpush1.bf16.msra.mxu0 %v3527
    %3566 = vmatprep.subr.bf16.mxu0 0
    %3567 = vmatpush1.bf16.msra.mxu0 %v3526
    %3568 = vmatprep.subr.bf16.mxu0 0
    %3569 = vmatpush1.bf16.msra.mxu0 %v3525
    %3570 = vmatprep.subr.bf16.mxu0 0
    %3571 = vmatpush1.bf16.msra.mxu0 %v3524
    %3572 = vmatprep.subr.bf16.mxu0 0
    %3573 = vmatpush2.bf16.msra.mxu0 %v3539
    %3574 = vmatprep.subr.bf16.mxu0 0
    %3575 = vmatpush2.bf16.msra.mxu0 %v3538
    %3576 = vmatprep.subr.bf16.mxu0 0
    %3577 = vmatpush2.bf16.msra.mxu0 %v3537
    %3578 = vmatprep.subr.bf16.mxu0 0
    %3579 = vmatpush2.bf16.msra.mxu0 %v3536
    %3580 = vmatprep.subr.bf16.mxu0 0
    %3581 = vmatpush2.bf16.msra.mxu0 %v3535
    %3582 = vmatprep.subr.bf16.mxu0 0
    %3583 = vmatpush2.bf16.msra.mxu0 %v3534
    %3584 = vmatprep.subr.bf16.mxu0 0
    %3585 = vmatpush2.bf16.msra.mxu0 %v3533
    %3586 = vmatprep.subr.bf16.mxu0 0
    %3587 = vmatpush2.bf16.msra.mxu0 %v3532
    %3588 = vmatprep.mubr.bf16.mxu0 %v3420
    %3589 = vmatmul.mubr.bf16.gmra.mxu0 %v3419
    %v3590 = vpop.f32.mrf.mxu0
    %v3591 = vadd.f32 %v3458, %v3590
    %v3592 = vpop.f32.mrf.mxu0
    %v3593 = vpop.f32.mrf.mxu0
    %v3594 = vpop.f32.mrf.mxu0
    %3595 = vdwg.mxu0
    %v3596 = vmax.f32 %v3591, 0.0
    %v3597 = vpack.c.bf16 %v3596, %v3596
    %v3598 = vld [vmem:[%s20] sm:$0xf]
    %v3599 = vld [vmem:[%s20 + $0x4] sm:$0xf]
    %v3600 = vld [vmem:[%s20 + $0x8] sm:$0xf]
    %v3601 = vld [vmem:[%s20 + $0xc] sm:$0xf]
    %v3602 = vld [vmem:[%s20 + $0x10] sm:$0xf]
    %v3603 = vld [vmem:[%s20 + $0x14] sm:$0xf]
    %v3604 = vld [vmem:[%s20 + $0x18] sm:$0xf]
    %v3605 = vld [vmem:[%s20 + $0x1c] sm:$0xf]
    %v3606 = vld [vmem:[%s20 + $0x20] sm:$0xf]
    %v3607 = vld [vmem:[%s20 + $0x24] sm:$0xf]
    %v3608 = vld [vmem:[%s20 + $0x28] sm:$0xf]
    %v3609 = vld [vmem:[%s20 + $0x2c] sm:$0xf]
    %v3610 = vld [vmem:[%s20 + $0x30] sm:$0xf]
    %v3611 = vld [vmem:[%s20 + $0x34] sm:$0xf]
    %v3612 = vld [vmem:[%s20 + $0x38] sm:$0xf]
    %v3613 = vld [vmem:[%s20 + $0x3c] sm:$0xf]
    %v3614 = vld [vmem:[%s21] sm:$0x1]
    %v3616 = vlaneseq
    %v3617 = vshrl.u32 %v3616, 7
    %v3618 = vsub.s32 0, %v3617
    %v3619 = vrot.slane %v3614, %v3618
    %v3637 = vunpack.c.l.b16 %v3598
    %v3638 = vunpack.c.l.b16 %v3599
    %v3639 = vunpack.c.l.b16 %v3600
    %v3640 = vunpack.c.l.b16 %v3601
    %v3641 = vunpack.c.l.b16 %v3602
    %v3642 = vunpack.c.l.b16 %v3603
    %v3643 = vunpack.c.l.b16 %v3604
    %v3644 = vunpack.c.l.b16 %v3605
    %v3645 = vunpack.c.l.b16 %v3606
    %v3646 = vunpack.c.l.b16 %v3607
    %v3647 = vunpack.c.l.b16 %v3608
    %v3648 = vunpack.c.l.b16 %v3609
    %v3649 = vunpack.c.l.b16 %v3610
    %v3650 = vunpack.c.l.b16 %v3611
    %v3651 = vunpack.c.l.b16 %v3612
    %v3652 = vunpack.c.l.b16 %v3613
    %v3653 = vpack.c.b16 %v3638, %v3637
    %v3654 = vpack.c.b16 %v3640, %v3639
    %v3655 = vpack.c.b16 %v3642, %v3641
    %v3656 = vpack.c.b16 %v3644, %v3643
    %v3657 = vpack.c.b16 %v3646, %v3645
    %v3658 = vpack.c.b16 %v3648, %v3647
    %v3659 = vpack.c.b16 %v3650, %v3649
    %v3660 = vpack.c.b16 %v3652, %v3651
    %3669 = vmatprep.subr.bf16.mxu0 0
    %3670 = vmatpush1.bf16.msra.mxu0 %v3660
    %3671 = vmatprep.subr.bf16.mxu0 0
    %3672 = vmatpush1.bf16.msra.mxu0 %v3659
    %3673 = vmatprep.subr.bf16.mxu0 0
    %3674 = vmatpush1.bf16.msra.mxu0 %v3658
    %3675 = vmatprep.subr.bf16.mxu0 0
    %3676 = vmatpush1.bf16.msra.mxu0 %v3657
    %3677 = vmatprep.subr.bf16.mxu0 0
    %3678 = vmatpush1.bf16.msra.mxu0 %v3656
    %3679 = vmatprep.subr.bf16.mxu0 0
    %3680 = vmatpush1.bf16.msra.mxu0 %v3655
    %3681 = vmatprep.subr.bf16.mxu0 0
    %3682 = vmatpush1.bf16.msra.mxu0 %v3654
    %3683 = vmatprep.subr.bf16.mxu0 0
    %3684 = vmatpush1.bf16.msra.mxu0 %v3653
    %3685 = vmatprep.subr.bf16.mxu0 0
    %3686 = vmatpush2.bf16.msra.mxu0 0
    %3687 = vmatprep.subr.bf16.mxu0 0
    %3688 = vmatpush2.bf16.msra.mxu0 0
    %3689 = vmatprep.subr.bf16.mxu0 0
    %3690 = vmatpush2.bf16.msra.mxu0 0
    %3691 = vmatprep.subr.bf16.mxu0 0
    %3692 = vmatpush2.bf16.msra.mxu0 0
    %3693 = vmatprep.subr.bf16.mxu0 0
    %3694 = vmatpush2.bf16.msra.mxu0 0
    %3695 = vmatprep.subr.bf16.mxu0 0
    %3696 = vmatpush2.bf16.msra.mxu0 0
    %3697 = vmatprep.subr.bf16.mxu0 0
    %3698 = vmatpush2.bf16.msra.mxu0 0
    %3699 = vmatprep.subr.bf16.mxu0 0
    %3700 = vmatpush2.bf16.msra.mxu0 0
    %3701 = vmatprep.mubr.bf16.mxu0 0
    %3702 = vmatmul.mubr.bf16.gmra.mxu0 %v3597
    %v3703 = vpop.f32.mrf.mxu0
    %v3704 = vadd.f32 %v3619, %v3703
    %v3705 = vpop.f32.mrf.mxu0
    %v3706 = vpop.f32.mrf.mxu0
    %v3707 = vpop.f32.mrf.mxu0
    %3708 = vdwg.mxu0
    %vm3709 = vcmask 74752
    %3710 = vst.msk [vmem:[#allocation19] sm:$0x3] %vm3709, %v3704
    // Predicated region
    $region130: #{forward.1} parent=1 // pred_check
      _
    $region131: #{forward.1} parent=1 // pred_check_branch
      %3712 = sbr.rel (0) target = $region133
    $region132: #{forward.1} parent=1 // pred_region
      %s3714 = ssub.s32 32, 32
      %3715 = vsyncadd [#allocation4], %s3714
      %s3717 = sshll.u32 [#allocation19], 4
      %s3718 = int_to_ptr.vmem [resolvable:$true] %s3717
      %3720 = dma.vmem_to_hbm [thread:$0]  %s3718, 32, %s22, [#allocation4]
    $region133: #{forward.1} parent=1 // pred_fallthru
      _
    // Predicated region
    $region134: #{forward.1} parent=1 // pred_check
      _
    $region135: #{forward.1} parent=1 // pred_check_branch
      %3722 = sbr.rel (0) target = $region137
    $region136: #{forward.1} parent=1 // pred_region
      %3723 = dma.done [#allocation4], 32
    $region137: #{forward.1} parent=1 // pred_fallthru
      _
    %3724 = vsyncpa [#allocation3], 1
    %3725 = vsyncpa [#allocation6], 1
    %3726 = vsyncpa [#allocation9], 1
    %3727 = vsyncpa [#allocation12], 1
    %3728 = vsyncpa [#allocation15], 1
    %3729 = vsyncpa [#allocation18], 1
    %3730 = vsyncpa [#allocation4], 1

</llo_original>
